<compile_context>
chip_gen: v7x
topology: tpu7x:2x2x1
jax: 0.10.0
libtpu: 0.0.40
codegen_flags: <defaults>
</compile_context>

<pallas_src>
import functools
import math

import jax
import jax.numpy as jnp
from jax import lax
from jax.experimental import pallas as pl
from jax.experimental.pallas import tpu as pltpu


def _sigmoid(x):
    # One EUP op (tanh) instead of exp + reciprocal; exact same function.
    return 0.5 * jnp.tanh(0.5 * x) + 0.5


def _dvector_kernel(*refs, num_layers: int):
    """Fused LSTM (num_layers) + last-step Linear + L2 norm for one batch tile.

    Ref order (inputs..., output, scratch...):
      x_ref                         (T, Bt, D)     time-major input tile
      [wih_T, whh_T, bias] * L      (Din,4H) bf16, (H,4H) bf16, (1,4H) f32
      w_emb_T                       (H, E) bf16
      b_emb                         (1, E) f32
      out_ref                       (Bt, E) f32
      hseq_ref  (VMEM scratch)      (T*Bt, H) f32   current layer's hidden sequence
      xproj_ref (VMEM scratch)      (T*Bt, 4H) f32  hoisted input projection
    """
    x_ref = refs[0]
    layer_refs = refs[1:1 + 3 * num_layers]
    w_emb_ref, b_emb_ref, out_ref, hseq_ref, xproj_ref = refs[1 + 3 * num_layers:]

    T, Bt, _ = x_ref.shape
    H = hseq_ref.shape[-1]
    # Full unroll only for small static T; partial unroll for production seg_len.
    unroll = True if T <= 16 else 8

    h_last = None
    for layer in range(num_layers):
        wih_ref = layer_refs[3 * layer + 0]   # (Din, 4H) bf16, pre-transposed
        whh_ref = layer_refs[3 * layer + 1]   # (H, 4H)   bf16, pre-transposed
        b_ref = layer_refs[3 * layer + 2]     # (1, 4H)   f32, b_ih + b_hh
        d_in = wih_ref.shape[0]
        is_last = layer == num_layers - 1

        # ---- Hoisted input projection: one big MXU matmul for all T steps ----
        if layer == 0:
            # Bt is a multiple of 8 sublanes -> this merge is a pure view.
            xin = x_ref[...].reshape(T * Bt, d_in).astype(jnp.bfloat16)
        else:
            xin = hseq_ref[...].astype(jnp.bfloat16)
        xproj_ref[...] = (
            jnp.dot(xin, wih_ref[...], preferred_element_type=jnp.float32)
            + b_ref[...]
        )

        # ---- Serial recurrence: only h @ W_hh + gate math per step ----
        def step(t, carry, whh_ref=whh_ref, is_last=is_last):
            h, c = carry
            row = pl.multiple_of(t * Bt, Bt)
            gates = xproj_ref[pl.ds(row, Bt), :] + jnp.dot(
                h.astype(jnp.bfloat16), whh_ref[...],
                preferred_element_type=jnp.float32)       # (Bt, 4H) f32
            # PyTorch gate order (i, f, g, o); H multiple of 128 -> lane aligned.
            i = _sigmoid(gates[:, 0 * H:1 * H])
            f = _sigmoid(gates[:, 1 * H:2 * H])
            g = jnp.tanh(gates[:, 2 * H:3 * H])
            o = _sigmoid(gates[:, 3 * H:4 * H])
            c_new = f * c + i * g
            h_new = o * jnp.tanh(c_new)
            if not is_last:
                # Next layer needs the full hidden sequence.
                hseq_ref[pl.ds(row, Bt), :] = h_new
            return (h_new, c_new)

        h0 = jnp.zeros((Bt, H), jnp.float32)
        c0 = jnp.zeros((Bt, H), jnp.float32)
        h_last, _ = lax.fori_loop(0, T, step, (h0, c0), unroll=unroll)

    # ---- Embedding of the last time step + L2 normalization ----
    emb = (
        jnp.dot(h_last.astype(jnp.bfloat16), w_emb_ref[...],
                preferred_element_type=jnp.float32)
        + b_emb_ref[...]
    )                                                      # (Bt, E)
    sumsq = jnp.sum(emb * emb, axis=-1, keepdims=True)
    # rsqrt on EUP; clamp guards the all-zero vector (PyTorch would emit NaN).
    out_ref[...] = (emb * lax.rsqrt(jnp.maximum(sumsq, 1e-24))).astype(out_ref.dtype)


def prepare_params(params):
    """One-time prep: pre-transpose weights (bf16 for MXU) and pre-sum biases."""
    prepped = {"layers": []}
    for layer in params["lstm"]:
        four_h = layer["w_ih"].shape[0]
        prepped["layers"].append(
            {
                "wih_t": jnp.transpose(layer["w_ih"]).astype(jnp.bfloat16),   # (Din,4H)
                "whh_t": jnp.transpose(layer["w_hh"]).astype(jnp.bfloat16),   # (H,4H)
                "bias": (layer["b_ih"] + layer["b_hh"]).reshape(1, four_h)
                        .astype(jnp.float32),
            }
        )
    emb_dim = params["w_emb"].shape[0]
    prepped["w_emb_t"] = jnp.transpose(params["w_emb"]).astype(jnp.bfloat16)  # (H, E)
    prepped["b_emb"] = params["b_emb"].reshape(1, emb_dim).astype(jnp.float32)
    return prepped


@functools.partial(jax.jit, static_argnames=("batch_tile",))
def lstm_dvector_forward(inputs, prepped, *, batch_tile=8):
    """inputs: (batch, seg_len, mel_dim) -> (batch, emb_dim), unit L2 norm."""
    assert batch_tile % 8 == 0, "batch tile must be a multiple of 8 sublanes"
    x = jnp.transpose(inputs.astype(jnp.float32), (1, 0, 2))  # time-major (T, B, D)
    T, B, D = x.shape
    layers = prepped["layers"]
    num_layers = len(layers)
    H = layers[0]["whh_t"].shape[0]
    E = prepped["w_emb_t"].shape[1]

    # Pad batch to a multiple of the (sublane-aligned) batch tile.
    B_pad = pl.cdiv(max(B, batch_tile), batch_tile) * batch_tile
    if B_pad != B:
        x = jnp.pad(x, ((0, 0), (0, B_pad - B), (0, 0)))
    num_tiles = B_pad // batch_tile

    flat_params = []
    in_specs = [pl.BlockSpec((T, batch_tile, D), lambda b: (0, b, 0))]
    for lyr in layers:
        for name in ("wih_t", "whh_t", "bias"):
            w = lyr[name]
            flat_params.append(w)
            in_specs.append(pl.BlockSpec(w.shape, lambda b: (0, 0)))  # resident
    for w in (prepped["w_emb_t"], prepped["b_emb"]):
        flat_params.append(w)
        in_specs.append(pl.BlockSpec(w.shape, lambda b: (0, 0)))      # resident

    # VMEM budget: double-buffered x/out tiles + resident weights + scratch + slack.
    bytes_weights = sum(int(w.size) * w.dtype.itemsize for w in flat_params)
    bytes_scratch = T * batch_tile * H * 4 + T * batch_tile * 4 * H * 4
    bytes_io = 2 * (T * batch_tile * D * 4 + batch_tile * E * 4)
    vmem_limit = min(64 << 20,
                     max(32 << 20, bytes_weights + bytes_scratch + bytes_io + (4 << 20)))

    kernel = functools.partial(_dvector_kernel, num_layers=num_layers)
    out = pl.pallas_call(
        kernel,
        out_shape=jax.ShapeDtypeStruct((B_pad, E), jnp.float32),
        grid=(num_tiles,),
        in_specs=in_specs,
        out_specs=pl.BlockSpec((batch_tile, E), lambda b: (b, 0)),
        scratch_shapes=[
            pltpu.VMEM((T * batch_tile, H), jnp.float32),      # hidden sequence
            pltpu.VMEM((T * batch_tile, 4 * H), jnp.float32),  # hoisted projection
        ],
        compiler_params=pltpu.CompilerParams(
            dimension_semantics=("parallel",),   # megacore over batch tiles (v7x)
            vmem_limit_bytes=vmem_limit,
        ),
    )(x, *flat_params)
    return out[:B]


def init_params(key, num_layers, dim_input, dim_cell, dim_emb):
    """PyTorch-style init: uniform(-1/sqrt(dim_cell), 1/sqrt(dim_cell))."""
    k = 1.0 / math.sqrt(dim_cell)
    keys = iter(jax.random.split(key, num_layers * 4 + 4))
    params = {"lstm": []}
    for layer in range(num_layers):
        d_in = dim_input if layer == 0 else dim_cell
        params["lstm"].append(
            {
                "w_ih": jax.random.uniform(next(keys), (4 * dim_cell, d_in),
                                           jnp.float32, -k, k),
                "w_hh": jax.random.uniform(next(keys), (4 * dim_cell, dim_cell),
                                           jnp.float32, -k, k),
                "b_ih": jax.random.uniform(next(keys), (4 * dim_cell,),
                                           jnp.float32, -k, k),
                "b_hh": jax.random.uniform(next(keys), (4 * dim_cell,),
                                           jnp.float32, -k, k),
            }
        )
    params["w_emb"] = jax.random.uniform(next(keys), (dim_emb, dim_cell),
                                         jnp.float32, -k, k)
    params["b_emb"] = jax.random.uniform(next(keys), (dim_emb,), jnp.float32, -k, k)
    return params


def _reference_forward(inputs, params):
    """Pure-JAX f32 reference of LSTMDvector.forward for correctness checking."""
    x = inputs.astype(jnp.float32)
    B = x.shape[0]
    h_seq = x
    for layer in params["lstm"]:
        w_ih, w_hh = layer["w_ih"], layer["w_hh"]
        b = layer["b_ih"] + layer["b_hh"]
        H = w_hh.shape[1]

        def step(carry, x_t):
            h, c = carry
            gates = x_t @ w_ih.T + h @ w_hh.T + b
            i, f, g, o = jnp.split(gates, 4, axis=-1)
            c = jax.nn.sigmoid(f) * c + jax.nn.sigmoid(i) * jnp.tanh(g)
            h = jax.nn.sigmoid(o) * jnp.tanh(c)
            return (h, c), h

        init = (jnp.zeros((B, H), jnp.float32), jnp.zeros((B, H), jnp.float32))
        _, hs = lax.scan(step, init, jnp.transpose(h_seq, (1, 0, 2)))
        h_seq = jnp.transpose(hs, (1, 0, 2))
    emb = h_seq[:, -1, :] @ params["w_emb"].T + params["b_emb"]
    return emb / jnp.linalg.norm(emb, axis=-1, keepdims=True)


if __name__ == "__main__":
    # Small shapes consistent with forward(inputs: (batch, seg_len, mel_dim)).
    # dim_cell/dim_emb = 128 keeps gate slices and the output lane aligned.
    batch, seg_len, dim_input = 2, 8, 16
    num_layers, dim_cell, dim_emb = 2, 128, 128

    root = jax.random.PRNGKey(0)
    k_param, k_in = jax.random.split(root)
    params = init_params(k_param, num_layers, dim_input, dim_cell, dim_emb)
    prepped = prepare_params(params)
    inputs = jax.random.normal(k_in, (batch, seg_len, dim_input), jnp.float32)

    embeds = jax.block_until_ready(lstm_dvector_forward(inputs, prepped))
    ref = jax.block_until_ready(_reference_forward(inputs, params))

    assert embeds.shape == (batch, dim_emb)
    assert bool(jnp.all(jnp.isfinite(embeds)))
    # bf16 matmul operands (f32 accumulation) -> slightly looser tolerance than f32.
    err = float(jnp.max(jnp.abs(embeds - ref)))
    assert err < 1.5e-2, err
    print("KERNEL_OK")
</pallas_src>

<mosaic_0001>
module attributes {stable_mosaic.version = 11 : i64} {
  func.func @_dvector_kernel(%arg0: i32, %arg1: memref<8x8x16xf32, #tpu.memory_space<vmem>>, %arg2: memref<16x512xbf16, #tpu.memory_space<vmem>>, %arg3: memref<128x512xbf16, #tpu.memory_space<vmem>>, %arg4: memref<1x512xf32, #tpu.memory_space<vmem>>, %arg5: memref<128x512xbf16, #tpu.memory_space<vmem>>, %arg6: memref<128x512xbf16, #tpu.memory_space<vmem>>, %arg7: memref<1x512xf32, #tpu.memory_space<vmem>>, %arg8: memref<128x128xbf16, #tpu.memory_space<vmem>>, %arg9: memref<1x128xf32, #tpu.memory_space<vmem>>, %arg10: memref<8x128xf32, #tpu.memory_space<vmem>>, %arg11: memref<64x128xf32, #tpu.memory_space<vmem>>, %arg12: memref<64x512xf32, #tpu.memory_space<vmem>>) attributes {dimension_semantics = [#tpu.dimension_semantics<parallel>], iteration_bounds = array<i64: 1>, scalar_prefetch = 0 : i64, scratch_operands = 2 : i64, tpu.core_type = #tpu.core_type<tc>, window_params = [{transform_indices = @transform_0, window_bounds = array<i64: 8, 8, 16>}, {pipeline_mode = #tpu.pipeline_mode<synchronous>, transform_indices = @transform_1, window_bounds = array<i64: 16, 512>}, {pipeline_mode = #tpu.pipeline_mode<synchronous>, transform_indices = @transform_2, window_bounds = array<i64: 128, 512>}, {pipeline_mode = #tpu.pipeline_mode<synchronous>, transform_indices = @transform_3, window_bounds = array<i64: 1, 512>}, {pipeline_mode = #tpu.pipeline_mode<synchronous>, transform_indices = @transform_4, window_bounds = array<i64: 128, 512>}, {pipeline_mode = #tpu.pipeline_mode<synchronous>, transform_indices = @transform_5, window_bounds = array<i64: 128, 512>}, {pipeline_mode = #tpu.pipeline_mode<synchronous>, transform_indices = @transform_6, window_bounds = array<i64: 1, 512>}, {pipeline_mode = #tpu.pipeline_mode<synchronous>, transform_indices = @transform_7, window_bounds = array<i64: 128, 128>}, {pipeline_mode = #tpu.pipeline_mode<synchronous>, transform_indices = @transform_8, window_bounds = array<i64: 1, 128>}, {transform_indices = @transform_9, window_bounds = array<i64: 8, 128>}]} {
    %c0 = arith.constant 0 : index
    %c0_0 = arith.constant 0 : index
    %c0_1 = arith.constant 0 : index
    %0 = vector.load %arg1[%c0, %c0_0, %c0_1] : memref<8x8x16xf32, #tpu.memory_space<vmem>>, vector<8x8x16xf32>
    %1 = vector.shape_cast %0 : vector<8x8x16xf32> to vector<64x16xf32>
    %2 = arith.truncf %1 : vector<64x16xf32> to vector<64x16xbf16>
    %c0_2 = arith.constant 0 : index
    %c0_3 = arith.constant 0 : index
    %3 = vector.load %arg2[%c0_2, %c0_3] : memref<16x512xbf16, #tpu.memory_space<vmem>>, vector<16x512xbf16>
    %cst = arith.constant dense<0.000000e+00> : vector<64x512xf32>
    %4 = tpu.matmul %2, %3, %cst {dimension_numbers = #tpu.dot_dimension_numbers<[1], [0], [0], [1], [0, 0, 1, 1], [], []>} : vector<64x16xbf16>, vector<16x512xbf16>, vector<64x512xf32> -> vector<64x512xf32>
    %c0_4 = arith.constant 0 : index
    %c0_5 = arith.constant 0 : index
    %5 = vector.load %arg4[%c0_4, %c0_5] : memref<1x512xf32, #tpu.memory_space<vmem>>, vector<1x512xf32>
    %6 = vector.broadcast %5 : vector<1x512xf32> to vector<64x512xf32>
    %7 = arith.addf %4, %6 : vector<64x512xf32>
    %c0_6 = arith.constant 0 : index
    %c0_7 = arith.constant 0 : index
    %8 = vector.load %arg12[%c0_6, %c0_7] : memref<64x512xf32, #tpu.memory_space<vmem>>, vector<64x512xf32>
    tpu.vector_store %arg12[%c0_6, %c0_7], %7 {strides = array<i32>} : memref<64x512xf32, #tpu.memory_space<vmem>>, vector<64x512xf32>,
    %cst_8 = arith.constant 0.000000e+00 : f32
    %9 = vector.broadcast %cst_8 : f32 to vector<8x128xf32>
    %cst_9 = arith.constant 0.000000e+00 : f32
    %10 = vector.broadcast %cst_9 : f32 to vector<8x128xf32>
    %c0_i32 = arith.constant 0 : i32
    %c8_i32 = arith.constant 8 : i32
    %11 = arith.muli %c0_i32, %c8_i32 : i32
    %12 = tpu.assume_multiple %11, 8 : i32
    %13 = arith.index_cast %12 : i32 to index
    %c0_10 = arith.constant 0 : index
    %14 = vector.load %arg12[%13, %c0_10] : memref<64x512xf32, #tpu.memory_space<vmem>>, vector<8x512xf32>
    %15 = arith.truncf %9 : vector<8x128xf32> to vector<8x128xbf16>
    %c0_11 = arith.constant 0 : index
    %c0_12 = arith.constant 0 : index
    %16 = vector.load %arg3[%c0_11, %c0_12] : memref<128x512xbf16, #tpu.memory_space<vmem>>, vector<128x512xbf16>
    %cst_13 = arith.constant dense<0.000000e+00> : vector<8x512xf32>
    %17 = tpu.matmul %15, %16, %cst_13 {dimension_numbers = #tpu.dot_dimension_numbers<[1], [0], [0], [1], [0, 0, 1, 1], [], []>} : vector<8x128xbf16>, vector<128x512xbf16>, vector<8x512xf32> -> vector<8x512xf32>
    %18 = arith.addf %14, %17 : vector<8x512xf32>
    %19 = vector.extract_strided_slice %18 {offsets = [0, 0], sizes = [8, 128], strides = [1, 1]} : vector<8x512xf32> to vector<8x128xf32>
    %cst_14 = arith.constant 5.000000e-01 : f32
    %20 = vector.broadcast %cst_14 : f32 to vector<8x128xf32>
    %21 = arith.mulf %20, %19 : vector<8x128xf32>
    %22 = math.tanh %21 : vector<8x128xf32>
    %cst_15 = arith.constant 5.000000e-01 : f32
    %23 = vector.broadcast %cst_15 : f32 to vector<8x128xf32>
    %24 = arith.mulf %23, %22 : vector<8x128xf32>
    %cst_16 = arith.constant 5.000000e-01 : f32
    %25 = vector.broadcast %cst_16 : f32 to vector<8x128xf32>
    %26 = arith.addf %24, %25 : vector<8x128xf32>
    %27 = vector.extract_strided_slice %18 {offsets = [0, 128], sizes = [8, 128], strides = [1, 1]} : vector<8x512xf32> to vector<8x128xf32>
    %cst_17 = arith.constant 5.000000e-01 : f32
    %28 = vector.broadcast %cst_17 : f32 to vector<8x128xf32>
    %29 = arith.mulf %28, %27 : vector<8x128xf32>
    %30 = math.tanh %29 : vector<8x128xf32>
    %cst_18 = arith.constant 5.000000e-01 : f32
    %31 = vector.broadcast %cst_18 : f32 to vector<8x128xf32>
    %32 = arith.mulf %31, %30 : vector<8x128xf32>
    %cst_19 = arith.constant 5.000000e-01 : f32
    %33 = vector.broadcast %cst_19 : f32 to vector<8x128xf32>
    %34 = arith.addf %32, %33 : vector<8x128xf32>
    %35 = vector.extract_strided_slice %18 {offsets = [0, 256], sizes = [8, 128], strides = [1, 1]} : vector<8x512xf32> to vector<8x128xf32>
    %36 = math.tanh %35 : vector<8x128xf32>
    %37 = vector.extract_strided_slice %18 {offsets = [0, 384], sizes = [8, 128], strides = [1, 1]} : vector<8x512xf32> to vector<8x128xf32>
    %cst_20 = arith.constant 5.000000e-01 : f32
    %38 = vector.broadcast %cst_20 : f32 to vector<8x128xf32>
    %39 = arith.mulf %38, %37 : vector<8x128xf32>
    %40 = math.tanh %39 : vector<8x128xf32>
    %cst_21 = arith.constant 5.000000e-01 : f32
    %41 = vector.broadcast %cst_21 : f32 to vector<8x128xf32>
    %42 = arith.mulf %41, %40 : vector<8x128xf32>
    %cst_22 = arith.constant 5.000000e-01 : f32
    %43 = vector.broadcast %cst_22 : f32 to vector<8x128xf32>
    %44 = arith.addf %42, %43 : vector<8x128xf32>
    %45 = arith.mulf %34, %10 : vector<8x128xf32>
    %46 = arith.mulf %26, %36 : vector<8x128xf32>
    %47 = arith.addf %45, %46 : vector<8x128xf32>
    %48 = math.tanh %47 : vector<8x128xf32>
    %49 = arith.mulf %44, %48 : vector<8x128xf32>
    %50 = arith.index_cast %12 : i32 to index
    %c0_23 = arith.constant 0 : index
    %51 = vector.load %arg11[%50, %c0_23] : memref<64x128xf32, #tpu.memory_space<vmem>>, vector<8x128xf32>
    tpu.vector_store %arg11[%50, %c0_23], %49 {strides = array<i32>} : memref<64x128xf32, #tpu.memory_space<vmem>>, vector<8x128xf32>,
    %c1_i32 = arith.constant 1 : i32
    %c8_i32_24 = arith.constant 8 : i32
    %52 = arith.muli %c1_i32, %c8_i32_24 : i32
    %53 = tpu.assume_multiple %52, 8 : i32
    %54 = arith.index_cast %53 : i32 to index
    %c0_25 = arith.constant 0 : index
    %55 = vector.load %arg12[%54, %c0_25] : memref<64x512xf32, #tpu.memory_space<vmem>>, vector<8x512xf32>
    %56 = arith.truncf %49 : vector<8x128xf32> to vector<8x128xbf16>
    %c0_26 = arith.constant 0 : index
    %c0_27 = arith.constant 0 : index
    %57 = vector.load %arg3[%c0_26, %c0_27] : memref<128x512xbf16, #tpu.memory_space<vmem>>, vector<128x512xbf16>
    %cst_28 = arith.constant dense<0.000000e+00> : vector<8x512xf32>
    %58 = tpu.matmul %56, %57, %cst_28 {dimension_numbers = #tpu.dot_dimension_numbers<[1], [0], [0], [1], [0, 0, 1, 1], [], []>} : vector<8x128xbf16>, vector<128x512xbf16>, vector<8x512xf32> -> vector<8x512xf32>
    %59 = arith.addf %55, %58 : vector<8x512xf32>
    %60 = vector.extract_strided_slice %59 {offsets = [0, 0], sizes = [8, 128], strides = [1, 1]} : vector<8x512xf32> to vector<8x128xf32>
    %cst_29 = arith.constant 5.000000e-01 : f32
    %61 = vector.broadcast %cst_29 : f32 to vector<8x128xf32>
    %62 = arith.mulf %61, %60 : vector<8x128xf32>
    %63 = math.tanh %62 : vector<8x128xf32>
    %cst_30 = arith.constant 5.000000e-01 : f32
    %64 = vector.broadcast %cst_30 : f32 to vector<8x128xf32>
    %65 = arith.mulf %64, %63 : vector<8x128xf32>
    %cst_31 = arith.constant 5.000000e-01 : f32
    %66 = vector.broadcast %cst_31 : f32 to vector<8x128xf32>
    %67 = arith.addf %65, %66 : vector<8x128xf32>
    %68 = vector.extract_strided_slice %59 {offsets = [0, 128], sizes = [8, 128], strides = [1, 1]} : vector<8x512xf32> to vector<8x128xf32>
    %cst_32 = arith.constant 5.000000e-01 : f32
    %69 = vector.broadcast %cst_32 : f32 to vector<8x128xf32>
    %70 = arith.mulf %69, %68 : vector<8x128xf32>
    %71 = math.tanh %70 : vector<8x128xf32>
    %cst_33 = arith.constant 5.000000e-01 : f32
    %72 = vector.broadcast %cst_33 : f32 to vector<8x128xf32>
    %73 = arith.mulf %72, %71 : vector<8x128xf32>
    %cst_34 = arith.constant 5.000000e-01 : f32
    %74 = vector.broadcast %cst_34 : f32 to vector<8x128xf32>
    %75 = arith.addf %73, %74 : vector<8x128xf32>
    %76 = vector.extract_strided_slice %59 {offsets = [0, 256], sizes = [8, 128], strides = [1, 1]} : vector<8x512xf32> to vector<8x128xf32>
    %77 = math.tanh %76 : vector<8x128xf32>
    %78 = vector.extract_strided_slice %59 {offsets = [0, 384], sizes = [8, 128], strides = [1, 1]} : vector<8x512xf32> to vector<8x128xf32>
    %cst_35 = arith.constant 5.000000e-01 : f32
    %79 = vector.broadcast %cst_35 : f32 to vector<8x128xf32>
    %80 = arith.mulf %79, %78 : vector<8x128xf32>
    %81 = math.tanh %80 : vector<8x128xf32>
    %cst_36 = arith.constant 5.000000e-01 : f32
    %82 = vector.broadcast %cst_36 : f32 to vector<8x128xf32>
    %83 = arith.mulf %82, %81 : vector<8x128xf32>
    %cst_37 = arith.constant 5.000000e-01 : f32
    %84 = vector.broadcast %cst_37 : f32 to vector<8x128xf32>
    %85 = arith.addf %83, %84 : vector<8x128xf32>
    %86 = arith.mulf %75, %47 : vector<8x128xf32>
    %87 = arith.mulf %67, %77 : vector<8x128xf32>
    %88 = arith.addf %86, %87 : vector<8x128xf32>
    %89 = math.tanh %88 : vector<8x128xf32>
    %90 = arith.mulf %85, %89 : vector<8x128xf32>
    %91 = arith.index_cast %53 : i32 to index
    %c0_38 = arith.constant 0 : index
    %92 = vector.load %arg11[%91, %c0_38] : memref<64x128xf32, #tpu.memory_space<vmem>>, vector<8x128xf32>
    tpu.vector_store %arg11[%91, %c0_38], %90 {strides = array<i32>} : memref<64x128xf32, #tpu.memory_space<vmem>>, vector<8x128xf32>,
    %c2_i32 = arith.constant 2 : i32
    %c8_i32_39 = arith.constant 8 : i32
    %93 = arith.muli %c2_i32, %c8_i32_39 : i32
    %94 = tpu.assume_multiple %93, 8 : i32
    %95 = arith.index_cast %94 : i32 to index
    %c0_40 = arith.constant 0 : index
    %96 = vector.load %arg12[%95, %c0_40] : memref<64x512xf32, #tpu.memory_space<vmem>>, vector<8x512xf32>
    %97 = arith.truncf %90 : vector<8x128xf32> to vector<8x128xbf16>
    %c0_41 = arith.constant 0 : index
    %c0_42 = arith.constant 0 : index
    %98 = vector.load %arg3[%c0_41, %c0_42] : memref<128x512xbf16, #tpu.memory_space<vmem>>, vector<128x512xbf16>
    %cst_43 = arith.constant dense<0.000000e+00> : vector<8x512xf32>
    %99 = tpu.matmul %97, %98, %cst_43 {dimension_numbers = #tpu.dot_dimension_numbers<[1], [0], [0], [1], [0, 0, 1, 1], [], []>} : vector<8x128xbf16>, vector<128x512xbf16>, vector<8x512xf32> -> vector<8x512xf32>
    %100 = arith.addf %96, %99 : vector<8x512xf32>
    %101 = vector.extract_strided_slice %100 {offsets = [0, 0], sizes = [8, 128], strides = [1, 1]} : vector<8x512xf32> to vector<8x128xf32>
    %cst_44 = arith.constant 5.000000e-01 : f32
    %102 = vector.broadcast %cst_44 : f32 to vector<8x128xf32>
    %103 = arith.mulf %102, %101 : vector<8x128xf32>
    %104 = math.tanh %103 : vector<8x128xf32>
    %cst_45 = arith.constant 5.000000e-01 : f32
    %105 = vector.broadcast %cst_45 : f32 to vector<8x128xf32>
    %106 = arith.mulf %105, %104 : vector<8x128xf32>
    %cst_46 = arith.constant 5.000000e-01 : f32
    %107 = vector.broadcast %cst_46 : f32 to vector<8x128xf32>
    %108 = arith.addf %106, %107 : vector<8x128xf32>
    %109 = vector.extract_strided_slice %100 {offsets = [0, 128], sizes = [8, 128], strides = [1, 1]} : vector<8x512xf32> to vector<8x128xf32>
    %cst_47 = arith.constant 5.000000e-01 : f32
    %110 = vector.broadcast %cst_47 : f32 to vector<8x128xf32>
    %111 = arith.mulf %110, %109 : vector<8x128xf32>
    %112 = math.tanh %111 : vector<8x128xf32>
    %cst_48 = arith.constant 5.000000e-01 : f32
    %113 = vector.broadcast %cst_48 : f32 to vector<8x128xf32>
    %114 = arith.mulf %113, %112 : vector<8x128xf32>
    %cst_49 = arith.constant 5.000000e-01 : f32
    %115 = vector.broadcast %cst_49 : f32 to vector<8x128xf32>
    %116 = arith.addf %114, %115 : vector<8x128xf32>
    %117 = vector.extract_strided_slice %100 {offsets = [0, 256], sizes = [8, 128], strides = [1, 1]} : vector<8x512xf32> to vector<8x128xf32>
    %118 = math.tanh %117 : vector<8x128xf32>
    %119 = vector.extract_strided_slice %100 {offsets = [0, 384], sizes = [8, 128], strides = [1, 1]} : vector<8x512xf32> to vector<8x128xf32>
    %cst_50 = arith.constant 5.000000e-01 : f32
    %120 = vector.broadcast %cst_50 : f32 to vector<8x128xf32>
    %121 = arith.mulf %120, %119 : vector<8x128xf32>
    %122 = math.tanh %121 : vector<8x128xf32>
    %cst_51 = arith.constant 5.000000e-01 : f32
    %123 = vector.broadcast %cst_51 : f32 to vector<8x128xf32>
    %124 = arith.mulf %123, %122 : vector<8x128xf32>
    %cst_52 = arith.constant 5.000000e-01 : f32
    %125 = vector.broadcast %cst_52 : f32 to vector<8x128xf32>
    %126 = arith.addf %124, %125 : vector<8x128xf32>
    %127 = arith.mulf %116, %88 : vector<8x128xf32>
    %128 = arith.mulf %108, %118 : vector<8x128xf32>
    %129 = arith.addf %127, %128 : vector<8x128xf32>
    %130 = math.tanh %129 : vector<8x128xf32>
    %131 = arith.mulf %126, %130 : vector<8x128xf32>
    %132 = arith.index_cast %94 : i32 to index
    %c0_53 = arith.constant 0 : index
    %133 = vector.load %arg11[%132, %c0_53] : memref<64x128xf32, #tpu.memory_space<vmem>>, vector<8x128xf32>
    tpu.vector_store %arg11[%132, %c0_53], %131 {strides = array<i32>} : memref<64x128xf32, #tpu.memory_space<vmem>>, vector<8x128xf32>,
    %c3_i32 = arith.constant 3 : i32
    %c8_i32_54 = arith.constant 8 : i32
    %134 = arith.muli %c3_i32, %c8_i32_54 : i32
    %135 = tpu.assume_multiple %134, 8 : i32
    %136 = arith.index_cast %135 : i32 to index
    %c0_55 = arith.constant 0 : index
    %137 = vector.load %arg12[%136, %c0_55] : memref<64x512xf32, #tpu.memory_space<vmem>>, vector<8x512xf32>
    %138 = arith.truncf %131 : vector<8x128xf32> to vector<8x128xbf16>
    %c0_56 = arith.constant 0 : index
    %c0_57 = arith.constant 0 : index
    %139 = vector.load %arg3[%c0_56, %c0_57] : memref<128x512xbf16, #tpu.memory_space<vmem>>, vector<128x512xbf16>
    %cst_58 = arith.constant dense<0.000000e+00> : vector<8x512xf32>
    %140 = tpu.matmul %138, %139, %cst_58 {dimension_numbers = #tpu.dot_dimension_numbers<[1], [0], [0], [1], [0, 0, 1, 1], [], []>} : vector<8x128xbf16>, vector<128x512xbf16>, vector<8x512xf32> -> vector<8x512xf32>
    %141 = arith.addf %137, %140 : vector<8x512xf32>
    %142 = vector.extract_strided_slice %141 {offsets = [0, 0], sizes = [8, 128], strides = [1, 1]} : vector<8x512xf32> to vector<8x128xf32>
    %cst_59 = arith.constant 5.000000e-01 : f32
    %143 = vector.broadcast %cst_59 : f32 to vector<8x128xf32>
    %144 = arith.mulf %143, %142 : vector<8x128xf32>
    %145 = math.tanh %144 : vector<8x128xf32>
    %cst_60 = arith.constant 5.000000e-01 : f32
    %146 = vector.broadcast %cst_60 : f32 to vector<8x128xf32>
    %147 = arith.mulf %146, %145 : vector<8x128xf32>
    %cst_61 = arith.constant 5.000000e-01 : f32
    %148 = vector.broadcast %cst_61 : f32 to vector<8x128xf32>
    %149 = arith.addf %147, %148 : vector<8x128xf32>
    %150 = vector.extract_strided_slice %141 {offsets = [0, 128], sizes = [8, 128], strides = [1, 1]} : vector<8x512xf32> to vector<8x128xf32>
    %cst_62 = arith.constant 5.000000e-01 : f32
    %151 = vector.broadcast %cst_62 : f32 to vector<8x128xf32>
    %152 = arith.mulf %151, %150 : vector<8x128xf32>
    %153 = math.tanh %152 : vector<8x128xf32>
    %cst_63 = arith.constant 5.000000e-01 : f32
    %154 = vector.broadcast %cst_63 : f32 to vector<8x128xf32>
    %155 = arith.mulf %154, %153 : vector<8x128xf32>
    %cst_64 = arith.constant 5.000000e-01 : f32
    %156 = vector.broadcast %cst_64 : f32 to vector<8x128xf32>
    %157 = arith.addf %155, %156 : vector<8x128xf32>
    %158 = vector.extract_strided_slice %141 {offsets = [0, 256], sizes = [8, 128], strides = [1, 1]} : vector<8x512xf32> to vector<8x128xf32>
    %159 = math.tanh %158 : vector<8x128xf32>
    %160 = vector.extract_strided_slice %141 {offsets = [0, 384], sizes = [8, 128], strides = [1, 1]} : vector<8x512xf32> to vector<8x128xf32>
    %cst_65 = arith.constant 5.000000e-01 : f32
    %161 = vector.broadcast %cst_65 : f32 to vector<8x128xf32>
    %162 = arith.mulf %161, %160 : vector<8x128xf32>
    %163 = math.tanh %162 : vector<8x128xf32>
    %cst_66 = arith.constant 5.000000e-01 : f32
    %164 = vector.broadcast %cst_66 : f32 to vector<8x128xf32>
    %165 = arith.mulf %164, %163 : vector<8x128xf32>
    %cst_67 = arith.constant 5.000000e-01 : f32
    %166 = vector.broadcast %cst_67 : f32 to vector<8x128xf32>
    %167 = arith.addf %165, %166 : vector<8x128xf32>
    %168 = arith.mulf %157, %129 : vector<8x128xf32>
    %169 = arith.mulf %149, %159 : vector<8x128xf32>
    %170 = arith.addf %168, %169 : vector<8x128xf32>
    %171 = math.tanh %170 : vector<8x128xf32>
    %172 = arith.mulf %167, %171 : vector<8x128xf32>
    %173 = arith.index_cast %135 : i32 to index
    %c0_68 = arith.constant 0 : index
    %174 = vector.load %arg11[%173, %c0_68] : memref<64x128xf32, #tpu.memory_space<vmem>>, vector<8x128xf32>
    tpu.vector_store %arg11[%173, %c0_68], %172 {strides = array<i32>} : memref<64x128xf32, #tpu.memory_space<vmem>>, vector<8x128xf32>,
    %c4_i32 = arith.constant 4 : i32
    %c8_i32_69 = arith.constant 8 : i32
    %175 = arith.muli %c4_i32, %c8_i32_69 : i32
    %176 = tpu.assume_multiple %175, 8 : i32
    %177 = arith.index_cast %176 : i32 to index
    %c0_70 = arith.constant 0 : index
    %178 = vector.load %arg12[%177, %c0_70] : memref<64x512xf32, #tpu.memory_space<vmem>>, vector<8x512xf32>
    %179 = arith.truncf %172 : vector<8x128xf32> to vector<8x128xbf16>
    %c0_71 = arith.constant 0 : index
    %c0_72 = arith.constant 0 : index
    %180 = vector.load %arg3[%c0_71, %c0_72] : memref<128x512xbf16, #tpu.memory_space<vmem>>, vector<128x512xbf16>
    %cst_73 = arith.constant dense<0.000000e+00> : vector<8x512xf32>
    %181 = tpu.matmul %179, %180, %cst_73 {dimension_numbers = #tpu.dot_dimension_numbers<[1], [0], [0], [1], [0, 0, 1, 1], [], []>} : vector<8x128xbf16>, vector<128x512xbf16>, vector<8x512xf32> -> vector<8x512xf32>
    %182 = arith.addf %178, %181 : vector<8x512xf32>
    %183 = vector.extract_strided_slice %182 {offsets = [0, 0], sizes = [8, 128], strides = [1, 1]} : vector<8x512xf32> to vector<8x128xf32>
    %cst_74 = arith.constant 5.000000e-01 : f32
    %184 = vector.broadcast %cst_74 : f32 to vector<8x128xf32>
    %185 = arith.mulf %184, %183 : vector<8x128xf32>
    %186 = math.tanh %185 : vector<8x128xf32>
    %cst_75 = arith.constant 5.000000e-01 : f32
    %187 = vector.broadcast %cst_75 : f32 to vector<8x128xf32>
    %188 = arith.mulf %187, %186 : vector<8x128xf32>
    %cst_76 = arith.constant 5.000000e-01 : f32
    %189 = vector.broadcast %cst_76 : f32 to vector<8x128xf32>
    %190 = arith.addf %188, %189 : vector<8x128xf32>
    %191 = vector.extract_strided_slice %182 {offsets = [0, 128], sizes = [8, 128], strides = [1, 1]} : vector<8x512xf32> to vector<8x128xf32>
    %cst_77 = arith.constant 5.000000e-01 : f32
    %192 = vector.broadcast %cst_77 : f32 to vector<8x128xf32>
    %193 = arith.mulf %192, %191 : vector<8x128xf32>
    %194 = math.tanh %193 : vector<8x128xf32>
    %cst_78 = arith.constant 5.000000e-01 : f32
    %195 = vector.broadcast %cst_78 : f32 to vector<8x128xf32>
    %196 = arith.mulf %195, %194 : vector<8x128xf32>
    %cst_79 = arith.constant 5.000000e-01 : f32
    %197 = vector.broadcast %cst_79 : f32 to vector<8x128xf32>
    %198 = arith.addf %196, %197 : vector<8x128xf32>
    %199 = vector.extract_strided_slice %182 {offsets = [0, 256], sizes = [8, 128], strides = [1, 1]} : vector<8x512xf32> to vector<8x128xf32>
    %200 = math.tanh %199 : vector<8x128xf32>
    %201 = vector.extract_strided_slice %182 {offsets = [0, 384], sizes = [8, 128], strides = [1, 1]} : vector<8x512xf32> to vector<8x128xf32>
    %cst_80 = arith.constant 5.000000e-01 : f32
    %202 = vector.broadcast %cst_80 : f32 to vector<8x128xf32>
    %203 = arith.mulf %202, %201 : vector<8x128xf32>
    %204 = math.tanh %203 : vector<8x128xf32>
    %cst_81 = arith.constant 5.000000e-01 : f32
    %205 = vector.broadcast %cst_81 : f32 to vector<8x128xf32>
    %206 = arith.mulf %205, %204 : vector<8x128xf32>
    %cst_82 = arith.constant 5.000000e-01 : f32
    %207 = vector.broadcast %cst_82 : f32 to vector<8x128xf32>
    %208 = arith.addf %206, %207 : vector<8x128xf32>
    %209 = arith.mulf %198, %170 : vector<8x128xf32>
    %210 = arith.mulf %190, %200 : vector<8x128xf32>
    %211 = arith.addf %209, %210 : vector<8x128xf32>
    %212 = math.tanh %211 : vector<8x128xf32>
    %213 = arith.mulf %208, %212 : vector<8x128xf32>
    %214 = arith.index_cast %176 : i32 to index
    %c0_83 = arith.constant 0 : index
    %215 = vector.load %arg11[%214, %c0_83] : memref<64x128xf32, #tpu.memory_space<vmem>>, vector<8x128xf32>
    tpu.vector_store %arg11[%214, %c0_83], %213 {strides = array<i32>} : memref<64x128xf32, #tpu.memory_space<vmem>>, vector<8x128xf32>,
    %c5_i32 = arith.constant 5 : i32
    %c8_i32_84 = arith.constant 8 : i32
    %216 = arith.muli %c5_i32, %c8_i32_84 : i32
    %217 = tpu.assume_multiple %216, 8 : i32
    %218 = arith.index_cast %217 : i32 to index
    %c0_85 = arith.constant 0 : index
    %219 = vector.load %arg12[%218, %c0_85] : memref<64x512xf32, #tpu.memory_space<vmem>>, vector<8x512xf32>
    %220 = arith.truncf %213 : vector<8x128xf32> to vector<8x128xbf16>
    %c0_86 = arith.constant 0 : index
    %c0_87 = arith.constant 0 : index
    %221 = vector.load %arg3[%c0_86, %c0_87] : memref<128x512xbf16, #tpu.memory_space<vmem>>, vector<128x512xbf16>
    %cst_88 = arith.constant dense<0.000000e+00> : vector<8x512xf32>
    %222 = tpu.matmul %220, %221, %cst_88 {dimension_numbers = #tpu.dot_dimension_numbers<[1], [0], [0], [1], [0, 0, 1, 1], [], []>} : vector<8x128xbf16>, vector<128x512xbf16>, vector<8x512xf32> -> vector<8x512xf32>
    %223 = arith.addf %219, %222 : vector<8x512xf32>
    %224 = vector.extract_strided_slice %223 {offsets = [0, 0], sizes = [8, 128], strides = [1, 1]} : vector<8x512xf32> to vector<8x128xf32>
    %cst_89 = arith.constant 5.000000e-01 : f32
    %225 = vector.broadcast %cst_89 : f32 to vector<8x128xf32>
    %226 = arith.mulf %225, %224 : vector<8x128xf32>
    %227 = math.tanh %226 : vector<8x128xf32>
    %cst_90 = arith.constant 5.000000e-01 : f32
    %228 = vector.broadcast %cst_90 : f32 to vector<8x128xf32>
    %229 = arith.mulf %228, %227 : vector<8x128xf32>
    %cst_91 = arith.constant 5.000000e-01 : f32
    %230 = vector.broadcast %cst_91 : f32 to vector<8x128xf32>
    %231 = arith.addf %229, %230 : vector<8x128xf32>
    %232 = vector.extract_strided_slice %223 {offsets = [0, 128], sizes = [8, 128], strides = [1, 1]} : vector<8x512xf32> to vector<8x128xf32>
    %cst_92 = arith.constant 5.000000e-01 : f32
    %233 = vector.broadcast %cst_92 : f32 to vector<8x128xf32>
    %234 = arith.mulf %233, %232 : vector<8x128xf32>
    %235 = math.tanh %234 : vector<8x128xf32>
    %cst_93 = arith.constant 5.000000e-01 : f32
    %236 = vector.broadcast %cst_93 : f32 to vector<8x128xf32>
    %237 = arith.mulf %236, %235 : vector<8x128xf32>
    %cst_94 = arith.constant 5.000000e-01 : f32
    %238 = vector.broadcast %cst_94 : f32 to vector<8x128xf32>
    %239 = arith.addf %237, %238 : vector<8x128xf32>
    %240 = vector.extract_strided_slice %223 {offsets = [0, 256], sizes = [8, 128], strides = [1, 1]} : vector<8x512xf32> to vector<8x128xf32>
    %241 = math.tanh %240 : vector<8x128xf32>
    %242 = vector.extract_strided_slice %223 {offsets = [0, 384], sizes = [8, 128], strides = [1, 1]} : vector<8x512xf32> to vector<8x128xf32>
    %cst_95 = arith.constant 5.000000e-01 : f32
    %243 = vector.broadcast %cst_95 : f32 to vector<8x128xf32>
    %244 = arith.mulf %243, %242 : vector<8x128xf32>
    %245 = math.tanh %244 : vector<8x128xf32>
    %cst_96 = arith.constant 5.000000e-01 : f32
    %246 = vector.broadcast %cst_96 : f32 to vector<8x128xf32>
    %247 = arith.mulf %246, %245 : vector<8x128xf32>
    %cst_97 = arith.constant 5.000000e-01 : f32
    %248 = vector.broadcast %cst_97 : f32 to vector<8x128xf32>
    %249 = arith.addf %247, %248 : vector<8x128xf32>
    %250 = arith.mulf %239, %211 : vector<8x128xf32>
    %251 = arith.mulf %231, %241 : vector<8x128xf32>
    %252 = arith.addf %250, %251 : vector<8x128xf32>
    %253 = math.tanh %252 : vector<8x128xf32>
    %254 = arith.mulf %249, %253 : vector<8x128xf32>
    %255 = arith.index_cast %217 : i32 to index
    %c0_98 = arith.constant 0 : index
    %256 = vector.load %arg11[%255, %c0_98] : memref<64x128xf32, #tpu.memory_space<vmem>>, vector<8x128xf32>
    tpu.vector_store %arg11[%255, %c0_98], %254 {strides = array<i32>} : memref<64x128xf32, #tpu.memory_space<vmem>>, vector<8x128xf32>,
    %c6_i32 = arith.constant 6 : i32
    %c8_i32_99 = arith.constant 8 : i32
    %257 = arith.muli %c6_i32, %c8_i32_99 : i32
    %258 = tpu.assume_multiple %257, 8 : i32
    %259 = arith.index_cast %258 : i32 to index
    %c0_100 = arith.constant 0 : index
    %260 = vector.load %arg12[%259, %c0_100] : memref<64x512xf32, #tpu.memory_space<vmem>>, vector<8x512xf32>
    %261 = arith.truncf %254 : vector<8x128xf32> to vector<8x128xbf16>
    %c0_101 = arith.constant 0 : index
    %c0_102 = arith.constant 0 : index
    %262 = vector.load %arg3[%c0_101, %c0_102] : memref<128x512xbf16, #tpu.memory_space<vmem>>, vector<128x512xbf16>
    %cst_103 = arith.constant dense<0.000000e+00> : vector<8x512xf32>
    %263 = tpu.matmul %261, %262, %cst_103 {dimension_numbers = #tpu.dot_dimension_numbers<[1], [0], [0], [1], [0, 0, 1, 1], [], []>} : vector<8x128xbf16>, vector<128x512xbf16>, vector<8x512xf32> -> vector<8x512xf32>
    %264 = arith.addf %260, %263 : vector<8x512xf32>
    %265 = vector.extract_strided_slice %264 {offsets = [0, 0], sizes = [8, 128], strides = [1, 1]} : vector<8x512xf32> to vector<8x128xf32>
    %cst_104 = arith.constant 5.000000e-01 : f32
    %266 = vector.broadcast %cst_104 : f32 to vector<8x128xf32>
    %267 = arith.mulf %266, %265 : vector<8x128xf32>
    %268 = math.tanh %267 : vector<8x128xf32>
    %cst_105 = arith.constant 5.000000e-01 : f32
    %269 = vector.broadcast %cst_105 : f32 to vector<8x128xf32>
    %270 = arith.mulf %269, %268 : vector<8x128xf32>
    %cst_106 = arith.constant 5.000000e-01 : f32
    %271 = vector.broadcast %cst_106 : f32 to vector<8x128xf32>
    %272 = arith.addf %270, %271 : vector<8x128xf32>
    %273 = vector.extract_strided_slice %264 {offsets = [0, 128], sizes = [8, 128], strides = [1, 1]} : vector<8x512xf32> to vector<8x128xf32>
    %cst_107 = arith.constant 5.000000e-01 : f32
    %274 = vector.broadcast %cst_107 : f32 to vector<8x128xf32>
    %275 = arith.mulf %274, %273 : vector<8x128xf32>
    %276 = math.tanh %275 : vector<8x128xf32>
    %cst_108 = arith.constant 5.000000e-01 : f32
    %277 = vector.broadcast %cst_108 : f32 to vector<8x128xf32>
    %278 = arith.mulf %277, %276 : vector<8x128xf32>
    %cst_109 = arith.constant 5.000000e-01 : f32
    %279 = vector.broadcast %cst_109 : f32 to vector<8x128xf32>
    %280 = arith.addf %278, %279 : vector<8x128xf32>
    %281 = vector.extract_strided_slice %264 {offsets = [0, 256], sizes = [8, 128], strides = [1, 1]} : vector<8x512xf32> to vector<8x128xf32>
    %282 = math.tanh %281 : vector<8x128xf32>
    %283 = vector.extract_strided_slice %264 {offsets = [0, 384], sizes = [8, 128], strides = [1, 1]} : vector<8x512xf32> to vector<8x128xf32>
    %cst_110 = arith.constant 5.000000e-01 : f32
    %284 = vector.broadcast %cst_110 : f32 to vector<8x128xf32>
    %285 = arith.mulf %284, %283 : vector<8x128xf32>
    %286 = math.tanh %285 : vector<8x128xf32>
    %cst_111 = arith.constant 5.000000e-01 : f32
    %287 = vector.broadcast %cst_111 : f32 to vector<8x128xf32>
    %288 = arith.mulf %287, %286 : vector<8x128xf32>
    %cst_112 = arith.constant 5.000000e-01 : f32
    %289 = vector.broadcast %cst_112 : f32 to vector<8x128xf32>
    %290 = arith.addf %288, %289 : vector<8x128xf32>
    %291 = arith.mulf %280, %252 : vector<8x128xf32>
    %292 = arith.mulf %272, %282 : vector<8x128xf32>
    %293 = arith.addf %291, %292 : vector<8x128xf32>
    %294 = math.tanh %293 : vector<8x128xf32>
    %295 = arith.mulf %290, %294 : vector<8x128xf32>
    %296 = arith.index_cast %258 : i32 to index
    %c0_113 = arith.constant 0 : index
    %297 = vector.load %arg11[%296, %c0_113] : memref<64x128xf32, #tpu.memory_space<vmem>>, vector<8x128xf32>
    tpu.vector_store %arg11[%296, %c0_113], %295 {strides = array<i32>} : memref<64x128xf32, #tpu.memory_space<vmem>>, vector<8x128xf32>,
    %c7_i32 = arith.constant 7 : i32
    %c8_i32_114 = arith.constant 8 : i32
    %298 = arith.muli %c7_i32, %c8_i32_114 : i32
    %299 = tpu.assume_multiple %298, 8 : i32
    %300 = arith.index_cast %299 : i32 to index
    %c0_115 = arith.constant 0 : index
    %301 = vector.load %arg12[%300, %c0_115] : memref<64x512xf32, #tpu.memory_space<vmem>>, vector<8x512xf32>
    %302 = arith.truncf %295 : vector<8x128xf32> to vector<8x128xbf16>
    %c0_116 = arith.constant 0 : index
    %c0_117 = arith.constant 0 : index
    %303 = vector.load %arg3[%c0_116, %c0_117] : memref<128x512xbf16, #tpu.memory_space<vmem>>, vector<128x512xbf16>
    %cst_118 = arith.constant dense<0.000000e+00> : vector<8x512xf32>
    %304 = tpu.matmul %302, %303, %cst_118 {dimension_numbers = #tpu.dot_dimension_numbers<[1], [0], [0], [1], [0, 0, 1, 1], [], []>} : vector<8x128xbf16>, vector<128x512xbf16>, vector<8x512xf32> -> vector<8x512xf32>
    %305 = arith.addf %301, %304 : vector<8x512xf32>
    %306 = vector.extract_strided_slice %305 {offsets = [0, 0], sizes = [8, 128], strides = [1, 1]} : vector<8x512xf32> to vector<8x128xf32>
    %cst_119 = arith.constant 5.000000e-01 : f32
    %307 = vector.broadcast %cst_119 : f32 to vector<8x128xf32>
    %308 = arith.mulf %307, %306 : vector<8x128xf32>
    %309 = math.tanh %308 : vector<8x128xf32>
    %cst_120 = arith.constant 5.000000e-01 : f32
    %310 = vector.broadcast %cst_120 : f32 to vector<8x128xf32>
    %311 = arith.mulf %310, %309 : vector<8x128xf32>
    %cst_121 = arith.constant 5.000000e-01 : f32
    %312 = vector.broadcast %cst_121 : f32 to vector<8x128xf32>
    %313 = arith.addf %311, %312 : vector<8x128xf32>
    %314 = vector.extract_strided_slice %305 {offsets = [0, 128], sizes = [8, 128], strides = [1, 1]} : vector<8x512xf32> to vector<8x128xf32>
    %cst_122 = arith.constant 5.000000e-01 : f32
    %315 = vector.broadcast %cst_122 : f32 to vector<8x128xf32>
    %316 = arith.mulf %315, %314 : vector<8x128xf32>
    %317 = math.tanh %316 : vector<8x128xf32>
    %cst_123 = arith.constant 5.000000e-01 : f32
    %318 = vector.broadcast %cst_123 : f32 to vector<8x128xf32>
    %319 = arith.mulf %318, %317 : vector<8x128xf32>
    %cst_124 = arith.constant 5.000000e-01 : f32
    %320 = vector.broadcast %cst_124 : f32 to vector<8x128xf32>
    %321 = arith.addf %319, %320 : vector<8x128xf32>
    %322 = vector.extract_strided_slice %305 {offsets = [0, 256], sizes = [8, 128], strides = [1, 1]} : vector<8x512xf32> to vector<8x128xf32>
    %323 = math.tanh %322 : vector<8x128xf32>
    %324 = vector.extract_strided_slice %305 {offsets = [0, 384], sizes = [8, 128], strides = [1, 1]} : vector<8x512xf32> to vector<8x128xf32>
    %cst_125 = arith.constant 5.000000e-01 : f32
    %325 = vector.broadcast %cst_125 : f32 to vector<8x128xf32>
    %326 = arith.mulf %325, %324 : vector<8x128xf32>
    %327 = math.tanh %326 : vector<8x128xf32>
    %cst_126 = arith.constant 5.000000e-01 : f32
    %328 = vector.broadcast %cst_126 : f32 to vector<8x128xf32>
    %329 = arith.mulf %328, %327 : vector<8x128xf32>
    %cst_127 = arith.constant 5.000000e-01 : f32
    %330 = vector.broadcast %cst_127 : f32 to vector<8x128xf32>
    %331 = arith.addf %329, %330 : vector<8x128xf32>
    %332 = arith.mulf %321, %293 : vector<8x128xf32>
    %333 = arith.mulf %313, %323 : vector<8x128xf32>
    %334 = arith.addf %332, %333 : vector<8x128xf32>
    %335 = math.tanh %334 : vector<8x128xf32>
    %336 = arith.mulf %331, %335 : vector<8x128xf32>
    %337 = arith.index_cast %299 : i32 to index
    %c0_128 = arith.constant 0 : index
    %338 = vector.load %arg11[%337, %c0_128] : memref<64x128xf32, #tpu.memory_space<vmem>>, vector<8x128xf32>
    tpu.vector_store %arg11[%337, %c0_128], %336 {strides = array<i32>} : memref<64x128xf32, #tpu.memory_space<vmem>>, vector<8x128xf32>,
    %c8_i32_129 = arith.constant 8 : i32
    %c0_130 = arith.constant 0 : index
    %c0_131 = arith.constant 0 : index
    %339 = vector.load %arg11[%c0_130, %c0_131] : memref<64x128xf32, #tpu.memory_space<vmem>>, vector<64x128xf32>
    %340 = arith.truncf %339 : vector<64x128xf32> to vector<64x128xbf16>
    %c0_132 = arith.constant 0 : index
    %c0_133 = arith.constant 0 : index
    %341 = vector.load %arg5[%c0_132, %c0_133] : memref<128x512xbf16, #tpu.memory_space<vmem>>, vector<128x512xbf16>
    %cst_134 = arith.constant dense<0.000000e+00> : vector<64x512xf32>
    %342 = tpu.matmul %340, %341, %cst_134 {dimension_numbers = #tpu.dot_dimension_numbers<[1], [0], [0], [1], [0, 0, 1, 1], [], []>} : vector<64x128xbf16>, vector<128x512xbf16>, vector<64x512xf32> -> vector<64x512xf32>
    %c0_135 = arith.constant 0 : index
    %c0_136 = arith.constant 0 : index
    %343 = vector.load %arg7[%c0_135, %c0_136] : memref<1x512xf32, #tpu.memory_space<vmem>>, vector<1x512xf32>
    %344 = vector.broadcast %343 : vector<1x512xf32> to vector<64x512xf32>
    %345 = arith.addf %342, %344 : vector<64x512xf32>
    %c0_137 = arith.constant 0 : index
    %c0_138 = arith.constant 0 : index
    %346 = vector.load %arg12[%c0_137, %c0_138] : memref<64x512xf32, #tpu.memory_space<vmem>>, vector<64x512xf32>
    tpu.vector_store %arg12[%c0_137, %c0_138], %345 {strides = array<i32>} : memref<64x512xf32, #tpu.memory_space<vmem>>, vector<64x512xf32>,
    %cst_139 = arith.constant 0.000000e+00 : f32
    %347 = vector.broadcast %cst_139 : f32 to vector<8x128xf32>
    %cst_140 = arith.constant 0.000000e+00 : f32
    %348 = vector.broadcast %cst_140 : f32 to vector<8x128xf32>
    %c0_i32_141 = arith.constant 0 : i32
    %c8_i32_142 = arith.constant 8 : i32
    %349 = arith.muli %c0_i32_141, %c8_i32_142 : i32
    %350 = tpu.assume_multiple %349, 8 : i32
    %351 = arith.index_cast %350 : i32 to index
    %c0_143 = arith.constant 0 : index
    %352 = vector.load %arg12[%351, %c0_143] : memref<64x512xf32, #tpu.memory_space<vmem>>, vector<8x512xf32>
    %353 = arith.truncf %347 : vector<8x128xf32> to vector<8x128xbf16>
    %c0_144 = arith.constant 0 : index
    %c0_145 = arith.constant 0 : index
    %354 = vector.load %arg6[%c0_144, %c0_145] : memref<128x512xbf16, #tpu.memory_space<vmem>>, vector<128x512xbf16>
    %cst_146 = arith.constant dense<0.000000e+00> : vector<8x512xf32>
    %355 = tpu.matmul %353, %354, %cst_146 {dimension_numbers = #tpu.dot_dimension_numbers<[1], [0], [0], [1], [0, 0, 1, 1], [], []>} : vector<8x128xbf16>, vector<128x512xbf16>, vector<8x512xf32> -> vector<8x512xf32>
    %356 = arith.addf %352, %355 : vector<8x512xf32>
    %357 = vector.extract_strided_slice %356 {offsets = [0, 0], sizes = [8, 128], strides = [1, 1]} : vector<8x512xf32> to vector<8x128xf32>
    %cst_147 = arith.constant 5.000000e-01 : f32
    %358 = vector.broadcast %cst_147 : f32 to vector<8x128xf32>
    %359 = arith.mulf %358, %357 : vector<8x128xf32>
    %360 = math.tanh %359 : vector<8x128xf32>
    %cst_148 = arith.constant 5.000000e-01 : f32
    %361 = vector.broadcast %cst_148 : f32 to vector<8x128xf32>
    %362 = arith.mulf %361, %360 : vector<8x128xf32>
    %cst_149 = arith.constant 5.000000e-01 : f32
    %363 = vector.broadcast %cst_149 : f32 to vector<8x128xf32>
    %364 = arith.addf %362, %363 : vector<8x128xf32>
    %365 = vector.extract_strided_slice %356 {offsets = [0, 128], sizes = [8, 128], strides = [1, 1]} : vector<8x512xf32> to vector<8x128xf32>
    %cst_150 = arith.constant 5.000000e-01 : f32
    %366 = vector.broadcast %cst_150 : f32 to vector<8x128xf32>
    %367 = arith.mulf %366, %365 : vector<8x128xf32>
    %368 = math.tanh %367 : vector<8x128xf32>
    %cst_151 = arith.constant 5.000000e-01 : f32
    %369 = vector.broadcast %cst_151 : f32 to vector<8x128xf32>
    %370 = arith.mulf %369, %368 : vector<8x128xf32>
    %cst_152 = arith.constant 5.000000e-01 : f32
    %371 = vector.broadcast %cst_152 : f32 to vector<8x128xf32>
    %372 = arith.addf %370, %371 : vector<8x128xf32>
    %373 = vector.extract_strided_slice %356 {offsets = [0, 256], sizes = [8, 128], strides = [1, 1]} : vector<8x512xf32> to vector<8x128xf32>
    %374 = math.tanh %373 : vector<8x128xf32>
    %375 = vector.extract_strided_slice %356 {offsets = [0, 384], sizes = [8, 128], strides = [1, 1]} : vector<8x512xf32> to vector<8x128xf32>
    %cst_153 = arith.constant 5.000000e-01 : f32
    %376 = vector.broadcast %cst_153 : f32 to vector<8x128xf32>
    %377 = arith.mulf %376, %375 : vector<8x128xf32>
    %378 = math.tanh %377 : vector<8x128xf32>
    %cst_154 = arith.constant 5.000000e-01 : f32
    %379 = vector.broadcast %cst_154 : f32 to vector<8x128xf32>
    %380 = arith.mulf %379, %378 : vector<8x128xf32>
    %cst_155 = arith.constant 5.000000e-01 : f32
    %381 = vector.broadcast %cst_155 : f32 to vector<8x128xf32>
    %382 = arith.addf %380, %381 : vector<8x128xf32>
    %383 = arith.mulf %372, %348 : vector<8x128xf32>
    %384 = arith.mulf %364, %374 : vector<8x128xf32>
    %385 = arith.addf %383, %384 : vector<8x128xf32>
    %386 = math.tanh %385 : vector<8x128xf32>
    %387 = arith.mulf %382, %386 : vector<8x128xf32>
    %c1_i32_156 = arith.constant 1 : i32
    %c8_i32_157 = arith.constant 8 : i32
    %388 = arith.muli %c1_i32_156, %c8_i32_157 : i32
    %389 = tpu.assume_multiple %388, 8 : i32
    %390 = arith.index_cast %389 : i32 to index
    %c0_158 = arith.constant 0 : index
    %391 = vector.load %arg12[%390, %c0_158] : memref<64x512xf32, #tpu.memory_space<vmem>>, vector<8x512xf32>
    %392 = arith.truncf %387 : vector<8x128xf32> to vector<8x128xbf16>
    %c0_159 = arith.constant 0 : index
    %c0_160 = arith.constant 0 : index
    %393 = vector.load %arg6[%c0_159, %c0_160] : memref<128x512xbf16, #tpu.memory_space<vmem>>, vector<128x512xbf16>
    %cst_161 = arith.constant dense<0.000000e+00> : vector<8x512xf32>
    %394 = tpu.matmul %392, %393, %cst_161 {dimension_numbers = #tpu.dot_dimension_numbers<[1], [0], [0], [1], [0, 0, 1, 1], [], []>} : vector<8x128xbf16>, vector<128x512xbf16>, vector<8x512xf32> -> vector<8x512xf32>
    %395 = arith.addf %391, %394 : vector<8x512xf32>
    %396 = vector.extract_strided_slice %395 {offsets = [0, 0], sizes = [8, 128], strides = [1, 1]} : vector<8x512xf32> to vector<8x128xf32>
    %cst_162 = arith.constant 5.000000e-01 : f32
    %397 = vector.broadcast %cst_162 : f32 to vector<8x128xf32>
    %398 = arith.mulf %397, %396 : vector<8x128xf32>
    %399 = math.tanh %398 : vector<8x128xf32>
    %cst_163 = arith.constant 5.000000e-01 : f32
    %400 = vector.broadcast %cst_163 : f32 to vector<8x128xf32>
    %401 = arith.mulf %400, %399 : vector<8x128xf32>
    %cst_164 = arith.constant 5.000000e-01 : f32
    %402 = vector.broadcast %cst_164 : f32 to vector<8x128xf32>
    %403 = arith.addf %401, %402 : vector<8x128xf32>
    %404 = vector.extract_strided_slice %395 {offsets = [0, 128], sizes = [8, 128], strides = [1, 1]} : vector<8x512xf32> to vector<8x128xf32>
    %cst_165 = arith.constant 5.000000e-01 : f32
    %405 = vector.broadcast %cst_165 : f32 to vector<8x128xf32>
    %406 = arith.mulf %405, %404 : vector<8x128xf32>
    %407 = math.tanh %406 : vector<8x128xf32>
    %cst_166 = arith.constant 5.000000e-01 : f32
    %408 = vector.broadcast %cst_166 : f32 to vector<8x128xf32>
    %409 = arith.mulf %408, %407 : vector<8x128xf32>
    %cst_167 = arith.constant 5.000000e-01 : f32
    %410 = vector.broadcast %cst_167 : f32 to vector<8x128xf32>
    %411 = arith.addf %409, %410 : vector<8x128xf32>
    %412 = vector.extract_strided_slice %395 {offsets = [0, 256], sizes = [8, 128], strides = [1, 1]} : vector<8x512xf32> to vector<8x128xf32>
    %413 = math.tanh %412 : vector<8x128xf32>
    %414 = vector.extract_strided_slice %395 {offsets = [0, 384], sizes = [8, 128], strides = [1, 1]} : vector<8x512xf32> to vector<8x128xf32>
    %cst_168 = arith.constant 5.000000e-01 : f32
    %415 = vector.broadcast %cst_168 : f32 to vector<8x128xf32>
    %416 = arith.mulf %415, %414 : vector<8x128xf32>
    %417 = math.tanh %416 : vector<8x128xf32>
    %cst_169 = arith.constant 5.000000e-01 : f32
    %418 = vector.broadcast %cst_169 : f32 to vector<8x128xf32>
    %419 = arith.mulf %418, %417 : vector<8x128xf32>
    %cst_170 = arith.constant 5.000000e-01 : f32
    %420 = vector.broadcast %cst_170 : f32 to vector<8x128xf32>
    %421 = arith.addf %419, %420 : vector<8x128xf32>
    %422 = arith.mulf %411, %385 : vector<8x128xf32>
    %423 = arith.mulf %403, %413 : vector<8x128xf32>
    %424 = arith.addf %422, %423 : vector<8x128xf32>
    %425 = math.tanh %424 : vector<8x128xf32>
    %426 = arith.mulf %421, %425 : vector<8x128xf32>
    %c2_i32_171 = arith.constant 2 : i32
    %c8_i32_172 = arith.constant 8 : i32
    %427 = arith.muli %c2_i32_171, %c8_i32_172 : i32
    %428 = tpu.assume_multiple %427, 8 : i32
    %429 = arith.index_cast %428 : i32 to index
    %c0_173 = arith.constant 0 : index
    %430 = vector.load %arg12[%429, %c0_173] : memref<64x512xf32, #tpu.memory_space<vmem>>, vector<8x512xf32>
    %431 = arith.truncf %426 : vector<8x128xf32> to vector<8x128xbf16>
    %c0_174 = arith.constant 0 : index
    %c0_175 = arith.constant 0 : index
    %432 = vector.load %arg6[%c0_174, %c0_175] : memref<128x512xbf16, #tpu.memory_space<vmem>>, vector<128x512xbf16>
    %cst_176 = arith.constant dense<0.000000e+00> : vector<8x512xf32>
    %433 = tpu.matmul %431, %432, %cst_176 {dimension_numbers = #tpu.dot_dimension_numbers<[1], [0], [0], [1], [0, 0, 1, 1], [], []>} : vector<8x128xbf16>, vector<128x512xbf16>, vector<8x512xf32> -> vector<8x512xf32>
    %434 = arith.addf %430, %433 : vector<8x512xf32>
    %435 = vector.extract_strided_slice %434 {offsets = [0, 0], sizes = [8, 128], strides = [1, 1]} : vector<8x512xf32> to vector<8x128xf32>
    %cst_177 = arith.constant 5.000000e-01 : f32
    %436 = vector.broadcast %cst_177 : f32 to vector<8x128xf32>
    %437 = arith.mulf %436, %435 : vector<8x128xf32>
    %438 = math.tanh %437 : vector<8x128xf32>
    %cst_178 = arith.constant 5.000000e-01 : f32
    %439 = vector.broadcast %cst_178 : f32 to vector<8x128xf32>
    %440 = arith.mulf %439, %438 : vector<8x128xf32>
    %cst_179 = arith.constant 5.000000e-01 : f32
    %441 = vector.broadcast %cst_179 : f32 to vector<8x128xf32>
    %442 = arith.addf %440, %441 : vector<8x128xf32>
    %443 = vector.extract_strided_slice %434 {offsets = [0, 128], sizes = [8, 128], strides = [1, 1]} : vector<8x512xf32> to vector<8x128xf32>
    %cst_180 = arith.constant 5.000000e-01 : f32
    %444 = vector.broadcast %cst_180 : f32 to vector<8x128xf32>
    %445 = arith.mulf %444, %443 : vector<8x128xf32>
    %446 = math.tanh %445 : vector<8x128xf32>
    %cst_181 = arith.constant 5.000000e-01 : f32
    %447 = vector.broadcast %cst_181 : f32 to vector<8x128xf32>
    %448 = arith.mulf %447, %446 : vector<8x128xf32>
    %cst_182 = arith.constant 5.000000e-01 : f32
    %449 = vector.broadcast %cst_182 : f32 to vector<8x128xf32>
    %450 = arith.addf %448, %449 : vector<8x128xf32>
    %451 = vector.extract_strided_slice %434 {offsets = [0, 256], sizes = [8, 128], strides = [1, 1]} : vector<8x512xf32> to vector<8x128xf32>
    %452 = math.tanh %451 : vector<8x128xf32>
    %453 = vector.extract_strided_slice %434 {offsets = [0, 384], sizes = [8, 128], strides = [1, 1]} : vector<8x512xf32> to vector<8x128xf32>
    %cst_183 = arith.constant 5.000000e-01 : f32
    %454 = vector.broadcast %cst_183 : f32 to vector<8x128xf32>
    %455 = arith.mulf %454, %453 : vector<8x128xf32>
    %456 = math.tanh %455 : vector<8x128xf32>
    %cst_184 = arith.constant 5.000000e-01 : f32
    %457 = vector.broadcast %cst_184 : f32 to vector<8x128xf32>
    %458 = arith.mulf %457, %456 : vector<8x128xf32>
    %cst_185 = arith.constant 5.000000e-01 : f32
    %459 = vector.broadcast %cst_185 : f32 to vector<8x128xf32>
    %460 = arith.addf %458, %459 : vector<8x128xf32>
    %461 = arith.mulf %450, %424 : vector<8x128xf32>
    %462 = arith.mulf %442, %452 : vector<8x128xf32>
    %463 = arith.addf %461, %462 : vector<8x128xf32>
    %464 = math.tanh %463 : vector<8x128xf32>
    %465 = arith.mulf %460, %464 : vector<8x128xf32>
    %c3_i32_186 = arith.constant 3 : i32
    %c8_i32_187 = arith.constant 8 : i32
    %466 = arith.muli %c3_i32_186, %c8_i32_187 : i32
    %467 = tpu.assume_multiple %466, 8 : i32
    %468 = arith.index_cast %467 : i32 to index
    %c0_188 = arith.constant 0 : index
    %469 = vector.load %arg12[%468, %c0_188] : memref<64x512xf32, #tpu.memory_space<vmem>>, vector<8x512xf32>
    %470 = arith.truncf %465 : vector<8x128xf32> to vector<8x128xbf16>
    %c0_189 = arith.constant 0 : index
    %c0_190 = arith.constant 0 : index
    %471 = vector.load %arg6[%c0_189, %c0_190] : memref<128x512xbf16, #tpu.memory_space<vmem>>, vector<128x512xbf16>
    %cst_191 = arith.constant dense<0.000000e+00> : vector<8x512xf32>
    %472 = tpu.matmul %470, %471, %cst_191 {dimension_numbers = #tpu.dot_dimension_numbers<[1], [0], [0], [1], [0, 0, 1, 1], [], []>} : vector<8x128xbf16>, vector<128x512xbf16>, vector<8x512xf32> -> vector<8x512xf32>
    %473 = arith.addf %469, %472 : vector<8x512xf32>
    %474 = vector.extract_strided_slice %473 {offsets = [0, 0], sizes = [8, 128], strides = [1, 1]} : vector<8x512xf32> to vector<8x128xf32>
    %cst_192 = arith.constant 5.000000e-01 : f32
    %475 = vector.broadcast %cst_192 : f32 to vector<8x128xf32>
    %476 = arith.mulf %475, %474 : vector<8x128xf32>
    %477 = math.tanh %476 : vector<8x128xf32>
    %cst_193 = arith.constant 5.000000e-01 : f32
    %478 = vector.broadcast %cst_193 : f32 to vector<8x128xf32>
    %479 = arith.mulf %478, %477 : vector<8x128xf32>
    %cst_194 = arith.constant 5.000000e-01 : f32
    %480 = vector.broadcast %cst_194 : f32 to vector<8x128xf32>
    %481 = arith.addf %479, %480 : vector<8x128xf32>
    %482 = vector.extract_strided_slice %473 {offsets = [0, 128], sizes = [8, 128], strides = [1, 1]} : vector<8x512xf32> to vector<8x128xf32>
    %cst_195 = arith.constant 5.000000e-01 : f32
    %483 = vector.broadcast %cst_195 : f32 to vector<8x128xf32>
    %484 = arith.mulf %483, %482 : vector<8x128xf32>
    %485 = math.tanh %484 : vector<8x128xf32>
    %cst_196 = arith.constant 5.000000e-01 : f32
    %486 = vector.broadcast %cst_196 : f32 to vector<8x128xf32>
    %487 = arith.mulf %486, %485 : vector<8x128xf32>
    %cst_197 = arith.constant 5.000000e-01 : f32
    %488 = vector.broadcast %cst_197 : f32 to vector<8x128xf32>
    %489 = arith.addf %487, %488 : vector<8x128xf32>
    %490 = vector.extract_strided_slice %473 {offsets = [0, 256], sizes = [8, 128], strides = [1, 1]} : vector<8x512xf32> to vector<8x128xf32>
    %491 = math.tanh %490 : vector<8x128xf32>
    %492 = vector.extract_strided_slice %473 {offsets = [0, 384], sizes = [8, 128], strides = [1, 1]} : vector<8x512xf32> to vector<8x128xf32>
    %cst_198 = arith.constant 5.000000e-01 : f32
    %493 = vector.broadcast %cst_198 : f32 to vector<8x128xf32>
    %494 = arith.mulf %493, %492 : vector<8x128xf32>
    %495 = math.tanh %494 : vector<8x128xf32>
    %cst_199 = arith.constant 5.000000e-01 : f32
    %496 = vector.broadcast %cst_199 : f32 to vector<8x128xf32>
    %497 = arith.mulf %496, %495 : vector<8x128xf32>
    %cst_200 = arith.constant 5.000000e-01 : f32
    %498 = vector.broadcast %cst_200 : f32 to vector<8x128xf32>
    %499 = arith.addf %497, %498 : vector<8x128xf32>
    %500 = arith.mulf %489, %463 : vector<8x128xf32>
    %501 = arith.mulf %481, %491 : vector<8x128xf32>
    %502 = arith.addf %500, %501 : vector<8x128xf32>
    %503 = math.tanh %502 : vector<8x128xf32>
    %504 = arith.mulf %499, %503 : vector<8x128xf32>
    %c4_i32_201 = arith.constant 4 : i32
    %c8_i32_202 = arith.constant 8 : i32
    %505 = arith.muli %c4_i32_201, %c8_i32_202 : i32
    %506 = tpu.assume_multiple %505, 8 : i32
    %507 = arith.index_cast %506 : i32 to index
    %c0_203 = arith.constant 0 : index
    %508 = vector.load %arg12[%507, %c0_203] : memref<64x512xf32, #tpu.memory_space<vmem>>, vector<8x512xf32>
    %509 = arith.truncf %504 : vector<8x128xf32> to vector<8x128xbf16>
    %c0_204 = arith.constant 0 : index
    %c0_205 = arith.constant 0 : index
    %510 = vector.load %arg6[%c0_204, %c0_205] : memref<128x512xbf16, #tpu.memory_space<vmem>>, vector<128x512xbf16>
    %cst_206 = arith.constant dense<0.000000e+00> : vector<8x512xf32>
    %511 = tpu.matmul %509, %510, %cst_206 {dimension_numbers = #tpu.dot_dimension_numbers<[1], [0], [0], [1], [0, 0, 1, 1], [], []>} : vector<8x128xbf16>, vector<128x512xbf16>, vector<8x512xf32> -> vector<8x512xf32>
    %512 = arith.addf %508, %511 : vector<8x512xf32>
    %513 = vector.extract_strided_slice %512 {offsets = [0, 0], sizes = [8, 128], strides = [1, 1]} : vector<8x512xf32> to vector<8x128xf32>
    %cst_207 = arith.constant 5.000000e-01 : f32
    %514 = vector.broadcast %cst_207 : f32 to vector<8x128xf32>
    %515 = arith.mulf %514, %513 : vector<8x128xf32>
    %516 = math.tanh %515 : vector<8x128xf32>
    %cst_208 = arith.constant 5.000000e-01 : f32
    %517 = vector.broadcast %cst_208 : f32 to vector<8x128xf32>
    %518 = arith.mulf %517, %516 : vector<8x128xf32>
    %cst_209 = arith.constant 5.000000e-01 : f32
    %519 = vector.broadcast %cst_209 : f32 to vector<8x128xf32>
    %520 = arith.addf %518, %519 : vector<8x128xf32>
    %521 = vector.extract_strided_slice %512 {offsets = [0, 128], sizes = [8, 128], strides = [1, 1]} : vector<8x512xf32> to vector<8x128xf32>
    %cst_210 = arith.constant 5.000000e-01 : f32
    %522 = vector.broadcast %cst_210 : f32 to vector<8x128xf32>
    %523 = arith.mulf %522, %521 : vector<8x128xf32>
    %524 = math.tanh %523 : vector<8x128xf32>
    %cst_211 = arith.constant 5.000000e-01 : f32
    %525 = vector.broadcast %cst_211 : f32 to vector<8x128xf32>
    %526 = arith.mulf %525, %524 : vector<8x128xf32>
    %cst_212 = arith.constant 5.000000e-01 : f32
    %527 = vector.broadcast %cst_212 : f32 to vector<8x128xf32>
    %528 = arith.addf %526, %527 : vector<8x128xf32>
    %529 = vector.extract_strided_slice %512 {offsets = [0, 256], sizes = [8, 128], strides = [1, 1]} : vector<8x512xf32> to vector<8x128xf32>
    %530 = math.tanh %529 : vector<8x128xf32>
    %531 = vector.extract_strided_slice %512 {offsets = [0, 384], sizes = [8, 128], strides = [1, 1]} : vector<8x512xf32> to vector<8x128xf32>
    %cst_213 = arith.constant 5.000000e-01 : f32
    %532 = vector.broadcast %cst_213 : f32 to vector<8x128xf32>
    %533 = arith.mulf %532, %531 : vector<8x128xf32>
    %534 = math.tanh %533 : vector<8x128xf32>
    %cst_214 = arith.constant 5.000000e-01 : f32
    %535 = vector.broadcast %cst_214 : f32 to vector<8x128xf32>
    %536 = arith.mulf %535, %534 : vector<8x128xf32>
    %cst_215 = arith.constant 5.000000e-01 : f32
    %537 = vector.broadcast %cst_215 : f32 to vector<8x128xf32>
    %538 = arith.addf %536, %537 : vector<8x128xf32>
    %539 = arith.mulf %528, %502 : vector<8x128xf32>
    %540 = arith.mulf %520, %530 : vector<8x128xf32>
    %541 = arith.addf %539, %540 : vector<8x128xf32>
    %542 = math.tanh %541 : vector<8x128xf32>
    %543 = arith.mulf %538, %542 : vector<8x128xf32>
    %c5_i32_216 = arith.constant 5 : i32
    %c8_i32_217 = arith.constant 8 : i32
    %544 = arith.muli %c5_i32_216, %c8_i32_217 : i32
    %545 = tpu.assume_multiple %544, 8 : i32
    %546 = arith.index_cast %545 : i32 to index
    %c0_218 = arith.constant 0 : index
    %547 = vector.load %arg12[%546, %c0_218] : memref<64x512xf32, #tpu.memory_space<vmem>>, vector<8x512xf32>
    %548 = arith.truncf %543 : vector<8x128xf32> to vector<8x128xbf16>
    %c0_219 = arith.constant 0 : index
    %c0_220 = arith.constant 0 : index
    %549 = vector.load %arg6[%c0_219, %c0_220] : memref<128x512xbf16, #tpu.memory_space<vmem>>, vector<128x512xbf16>
    %cst_221 = arith.constant dense<0.000000e+00> : vector<8x512xf32>
    %550 = tpu.matmul %548, %549, %cst_221 {dimension_numbers = #tpu.dot_dimension_numbers<[1], [0], [0], [1], [0, 0, 1, 1], [], []>} : vector<8x128xbf16>, vector<128x512xbf16>, vector<8x512xf32> -> vector<8x512xf32>
    %551 = arith.addf %547, %550 : vector<8x512xf32>
    %552 = vector.extract_strided_slice %551 {offsets = [0, 0], sizes = [8, 128], strides = [1, 1]} : vector<8x512xf32> to vector<8x128xf32>
    %cst_222 = arith.constant 5.000000e-01 : f32
    %553 = vector.broadcast %cst_222 : f32 to vector<8x128xf32>
    %554 = arith.mulf %553, %552 : vector<8x128xf32>
    %555 = math.tanh %554 : vector<8x128xf32>
    %cst_223 = arith.constant 5.000000e-01 : f32
    %556 = vector.broadcast %cst_223 : f32 to vector<8x128xf32>
    %557 = arith.mulf %556, %555 : vector<8x128xf32>
    %cst_224 = arith.constant 5.000000e-01 : f32
    %558 = vector.broadcast %cst_224 : f32 to vector<8x128xf32>
    %559 = arith.addf %557, %558 : vector<8x128xf32>
    %560 = vector.extract_strided_slice %551 {offsets = [0, 128], sizes = [8, 128], strides = [1, 1]} : vector<8x512xf32> to vector<8x128xf32>
    %cst_225 = arith.constant 5.000000e-01 : f32
    %561 = vector.broadcast %cst_225 : f32 to vector<8x128xf32>
    %562 = arith.mulf %561, %560 : vector<8x128xf32>
    %563 = math.tanh %562 : vector<8x128xf32>
    %cst_226 = arith.constant 5.000000e-01 : f32
    %564 = vector.broadcast %cst_226 : f32 to vector<8x128xf32>
    %565 = arith.mulf %564, %563 : vector<8x128xf32>
    %cst_227 = arith.constant 5.000000e-01 : f32
    %566 = vector.broadcast %cst_227 : f32 to vector<8x128xf32>
    %567 = arith.addf %565, %566 : vector<8x128xf32>
    %568 = vector.extract_strided_slice %551 {offsets = [0, 256], sizes = [8, 128], strides = [1, 1]} : vector<8x512xf32> to vector<8x128xf32>
    %569 = math.tanh %568 : vector<8x128xf32>
    %570 = vector.extract_strided_slice %551 {offsets = [0, 384], sizes = [8, 128], strides = [1, 1]} : vector<8x512xf32> to vector<8x128xf32>
    %cst_228 = arith.constant 5.000000e-01 : f32
    %571 = vector.broadcast %cst_228 : f32 to vector<8x128xf32>
    %572 = arith.mulf %571, %570 : vector<8x128xf32>
    %573 = math.tanh %572 : vector<8x128xf32>
    %cst_229 = arith.constant 5.000000e-01 : f32
    %574 = vector.broadcast %cst_229 : f32 to vector<8x128xf32>
    %575 = arith.mulf %574, %573 : vector<8x128xf32>
    %cst_230 = arith.constant 5.000000e-01 : f32
    %576 = vector.broadcast %cst_230 : f32 to vector<8x128xf32>
    %577 = arith.addf %575, %576 : vector<8x128xf32>
    %578 = arith.mulf %567, %541 : vector<8x128xf32>
    %579 = arith.mulf %559, %569 : vector<8x128xf32>
    %580 = arith.addf %578, %579 : vector<8x128xf32>
    %581 = math.tanh %580 : vector<8x128xf32>
    %582 = arith.mulf %577, %581 : vector<8x128xf32>
    %c6_i32_231 = arith.constant 6 : i32
    %c8_i32_232 = arith.constant 8 : i32
    %583 = arith.muli %c6_i32_231, %c8_i32_232 : i32
    %584 = tpu.assume_multiple %583, 8 : i32
    %585 = arith.index_cast %584 : i32 to index
    %c0_233 = arith.constant 0 : index
    %586 = vector.load %arg12[%585, %c0_233] : memref<64x512xf32, #tpu.memory_space<vmem>>, vector<8x512xf32>
    %587 = arith.truncf %582 : vector<8x128xf32> to vector<8x128xbf16>
    %c0_234 = arith.constant 0 : index
    %c0_235 = arith.constant 0 : index
    %588 = vector.load %arg6[%c0_234, %c0_235] : memref<128x512xbf16, #tpu.memory_space<vmem>>, vector<128x512xbf16>
    %cst_236 = arith.constant dense<0.000000e+00> : vector<8x512xf32>
    %589 = tpu.matmul %587, %588, %cst_236 {dimension_numbers = #tpu.dot_dimension_numbers<[1], [0], [0], [1], [0, 0, 1, 1], [], []>} : vector<8x128xbf16>, vector<128x512xbf16>, vector<8x512xf32> -> vector<8x512xf32>
    %590 = arith.addf %586, %589 : vector<8x512xf32>
    %591 = vector.extract_strided_slice %590 {offsets = [0, 0], sizes = [8, 128], strides = [1, 1]} : vector<8x512xf32> to vector<8x128xf32>
    %cst_237 = arith.constant 5.000000e-01 : f32
    %592 = vector.broadcast %cst_237 : f32 to vector<8x128xf32>
    %593 = arith.mulf %592, %591 : vector<8x128xf32>
    %594 = math.tanh %593 : vector<8x128xf32>
    %cst_238 = arith.constant 5.000000e-01 : f32
    %595 = vector.broadcast %cst_238 : f32 to vector<8x128xf32>
    %596 = arith.mulf %595, %594 : vector<8x128xf32>
    %cst_239 = arith.constant 5.000000e-01 : f32
    %597 = vector.broadcast %cst_239 : f32 to vector<8x128xf32>
    %598 = arith.addf %596, %597 : vector<8x128xf32>
    %599 = vector.extract_strided_slice %590 {offsets = [0, 128], sizes = [8, 128], strides = [1, 1]} : vector<8x512xf32> to vector<8x128xf32>
    %cst_240 = arith.constant 5.000000e-01 : f32
    %600 = vector.broadcast %cst_240 : f32 to vector<8x128xf32>
    %601 = arith.mulf %600, %599 : vector<8x128xf32>
    %602 = math.tanh %601 : vector<8x128xf32>
    %cst_241 = arith.constant 5.000000e-01 : f32
    %603 = vector.broadcast %cst_241 : f32 to vector<8x128xf32>
    %604 = arith.mulf %603, %602 : vector<8x128xf32>
    %cst_242 = arith.constant 5.000000e-01 : f32
    %605 = vector.broadcast %cst_242 : f32 to vector<8x128xf32>
    %606 = arith.addf %604, %605 : vector<8x128xf32>
    %607 = vector.extract_strided_slice %590 {offsets = [0, 256], sizes = [8, 128], strides = [1, 1]} : vector<8x512xf32> to vector<8x128xf32>
    %608 = math.tanh %607 : vector<8x128xf32>
    %609 = vector.extract_strided_slice %590 {offsets = [0, 384], sizes = [8, 128], strides = [1, 1]} : vector<8x512xf32> to vector<8x128xf32>
    %cst_243 = arith.constant 5.000000e-01 : f32
    %610 = vector.broadcast %cst_243 : f32 to vector<8x128xf32>
    %611 = arith.mulf %610, %609 : vector<8x128xf32>
    %612 = math.tanh %611 : vector<8x128xf32>
    %cst_244 = arith.constant 5.000000e-01 : f32
    %613 = vector.broadcast %cst_244 : f32 to vector<8x128xf32>
    %614 = arith.mulf %613, %612 : vector<8x128xf32>
    %cst_245 = arith.constant 5.000000e-01 : f32
    %615 = vector.broadcast %cst_245 : f32 to vector<8x128xf32>
    %616 = arith.addf %614, %615 : vector<8x128xf32>
    %617 = arith.mulf %606, %580 : vector<8x128xf32>
    %618 = arith.mulf %598, %608 : vector<8x128xf32>
    %619 = arith.addf %617, %618 : vector<8x128xf32>
    %620 = math.tanh %619 : vector<8x128xf32>
    %621 = arith.mulf %616, %620 : vector<8x128xf32>
    %c7_i32_246 = arith.constant 7 : i32
    %c8_i32_247 = arith.constant 8 : i32
    %622 = arith.muli %c7_i32_246, %c8_i32_247 : i32
    %623 = tpu.assume_multiple %622, 8 : i32
    %624 = arith.index_cast %623 : i32 to index
    %c0_248 = arith.constant 0 : index
    %625 = vector.load %arg12[%624, %c0_248] : memref<64x512xf32, #tpu.memory_space<vmem>>, vector<8x512xf32>
    %626 = arith.truncf %621 : vector<8x128xf32> to vector<8x128xbf16>
    %c0_249 = arith.constant 0 : index
    %c0_250 = arith.constant 0 : index
    %627 = vector.load %arg6[%c0_249, %c0_250] : memref<128x512xbf16, #tpu.memory_space<vmem>>, vector<128x512xbf16>
    %cst_251 = arith.constant dense<0.000000e+00> : vector<8x512xf32>
    %628 = tpu.matmul %626, %627, %cst_251 {dimension_numbers = #tpu.dot_dimension_numbers<[1], [0], [0], [1], [0, 0, 1, 1], [], []>} : vector<8x128xbf16>, vector<128x512xbf16>, vector<8x512xf32> -> vector<8x512xf32>
    %629 = arith.addf %625, %628 : vector<8x512xf32>
    %630 = vector.extract_strided_slice %629 {offsets = [0, 0], sizes = [8, 128], strides = [1, 1]} : vector<8x512xf32> to vector<8x128xf32>
    %cst_252 = arith.constant 5.000000e-01 : f32
    %631 = vector.broadcast %cst_252 : f32 to vector<8x128xf32>
    %632 = arith.mulf %631, %630 : vector<8x128xf32>
    %633 = math.tanh %632 : vector<8x128xf32>
    %cst_253 = arith.constant 5.000000e-01 : f32
    %634 = vector.broadcast %cst_253 : f32 to vector<8x128xf32>
    %635 = arith.mulf %634, %633 : vector<8x128xf32>
    %cst_254 = arith.constant 5.000000e-01 : f32
    %636 = vector.broadcast %cst_254 : f32 to vector<8x128xf32>
    %637 = arith.addf %635, %636 : vector<8x128xf32>
    %638 = vector.extract_strided_slice %629 {offsets = [0, 128], sizes = [8, 128], strides = [1, 1]} : vector<8x512xf32> to vector<8x128xf32>
    %cst_255 = arith.constant 5.000000e-01 : f32
    %639 = vector.broadcast %cst_255 : f32 to vector<8x128xf32>
    %640 = arith.mulf %639, %638 : vector<8x128xf32>
    %641 = math.tanh %640 : vector<8x128xf32>
    %cst_256 = arith.constant 5.000000e-01 : f32
    %642 = vector.broadcast %cst_256 : f32 to vector<8x128xf32>
    %643 = arith.mulf %642, %641 : vector<8x128xf32>
    %cst_257 = arith.constant 5.000000e-01 : f32
    %644 = vector.broadcast %cst_257 : f32 to vector<8x128xf32>
    %645 = arith.addf %643, %644 : vector<8x128xf32>
    %646 = vector.extract_strided_slice %629 {offsets = [0, 256], sizes = [8, 128], strides = [1, 1]} : vector<8x512xf32> to vector<8x128xf32>
    %647 = math.tanh %646 : vector<8x128xf32>
    %648 = vector.extract_strided_slice %629 {offsets = [0, 384], sizes = [8, 128], strides = [1, 1]} : vector<8x512xf32> to vector<8x128xf32>
    %cst_258 = arith.constant 5.000000e-01 : f32
    %649 = vector.broadcast %cst_258 : f32 to vector<8x128xf32>
    %650 = arith.mulf %649, %648 : vector<8x128xf32>
    %651 = math.tanh %650 : vector<8x128xf32>
    %cst_259 = arith.constant 5.000000e-01 : f32
    %652 = vector.broadcast %cst_259 : f32 to vector<8x128xf32>
    %653 = arith.mulf %652, %651 : vector<8x128xf32>
    %cst_260 = arith.constant 5.000000e-01 : f32
    %654 = vector.broadcast %cst_260 : f32 to vector<8x128xf32>
    %655 = arith.addf %653, %654 : vector<8x128xf32>
    %656 = arith.mulf %645, %619 : vector<8x128xf32>
    %657 = arith.mulf %637, %647 : vector<8x128xf32>
    %658 = arith.addf %656, %657 : vector<8x128xf32>
    %659 = math.tanh %658 : vector<8x128xf32>
    %660 = arith.mulf %655, %659 : vector<8x128xf32>
    %c8_i32_261 = arith.constant 8 : i32
    %661 = arith.truncf %660 : vector<8x128xf32> to vector<8x128xbf16>
    %c0_262 = arith.constant 0 : index
    %c0_263 = arith.constant 0 : index
    %662 = vector.load %arg8[%c0_262, %c0_263] : memref<128x128xbf16, #tpu.memory_space<vmem>>, vector<128x128xbf16>
    %cst_264 = arith.constant dense<0.000000e+00> : vector<8x128xf32>
    %663 = tpu.matmul %661, %662, %cst_264 {dimension_numbers = #tpu.dot_dimension_numbers<[1], [0], [0], [1], [0, 0, 1, 1], [], []>} : vector<8x128xbf16>, vector<128x128xbf16>, vector<8x128xf32> -> vector<8x128xf32>
    %c0_265 = arith.constant 0 : index
    %c0_266 = arith.constant 0 : index
    %664 = vector.load %arg9[%c0_265, %c0_266] : memref<1x128xf32, #tpu.memory_space<vmem>>, vector<1x128xf32>
    %665 = vector.broadcast %664 : vector<1x128xf32> to vector<8x128xf32>
    %666 = arith.addf %663, %665 : vector<8x128xf32>
    %667 = arith.mulf %666, %666 : vector<8x128xf32>
    %cst_267 = arith.constant dense<0.000000e+00> : vector<8xf32>
    %668 = vector.multi_reduction <add>, %667, %cst_267 [1] : vector<8x128xf32> to vector<8xf32>
    %669 = vector.shape_cast %668 : vector<8xf32> to vector<8x1xf32>
    %cst_268 = arith.constant 1.000000e-24 : f32
    %670 = vector.broadcast %cst_268 : f32 to vector<8x1xf32>
    %671 = arith.maximumf %669, %670 : vector<8x1xf32>
    %672 = math.rsqrt %671 : vector<8x1xf32>
    %673 = vector.broadcast %672 : vector<8x1xf32> to vector<8x128xf32>
    %674 = arith.mulf %666, %673 : vector<8x128xf32>
    %c0_269 = arith.constant 0 : index
    %c0_270 = arith.constant 0 : index
    %675 = vector.load %arg10[%c0_269, %c0_270] : memref<8x128xf32, #tpu.memory_space<vmem>>, vector<8x128xf32>
    tpu.vector_store %arg10[%c0_269, %c0_270], %674 {strides = array<i32>} : memref<8x128xf32, #tpu.memory_space<vmem>>, vector<8x128xf32>,
    return
  }
  func.func @transform_0(%arg0: i32) -> (i32, i32, i32) {
    %c0_i32 = arith.constant 0 : i32
    %c0_i32_0 = arith.constant 0 : i32
    %c0_i32_1 = arith.constant 0 : i32
    return %c0_i32, %arg0, %c0_i32_0 : i32, i32, i32
  }
  func.func @transform_1(%arg0: i32) -> (i32, i32) {
    %c0_i32 = arith.constant 0 : i32
    %c0_i32_0 = arith.constant 0 : i32
    %c0_i32_1 = arith.constant 0 : i32
    return %c0_i32, %c0_i32_0 : i32, i32
  }
  func.func @transform_2(%arg0: i32) -> (i32, i32) {
    %c0_i32 = arith.constant 0 : i32
    %c0_i32_0 = arith.constant 0 : i32
    %c0_i32_1 = arith.constant 0 : i32
    return %c0_i32, %c0_i32_0 : i32, i32
  }
  func.func @transform_3(%arg0: i32) -> (i32, i32) {
    %c0_i32 = arith.constant 0 : i32
    %c0_i32_0 = arith.constant 0 : i32
    %c0_i32_1 = arith.constant 0 : i32
    return %c0_i32, %c0_i32_0 : i32, i32
  }
  func.func @transform_4(%arg0: i32) -> (i32, i32) {
    %c0_i32 = arith.constant 0 : i32
    %c0_i32_0 = arith.constant 0 : i32
    %c0_i32_1 = arith.constant 0 : i32
    return %c0_i32, %c0_i32_0 : i32, i32
  }
  func.func @transform_5(%arg0: i32) -> (i32, i32) {
    %c0_i32 = arith.constant 0 : i32
    %c0_i32_0 = arith.constant 0 : i32
    %c0_i32_1 = arith.constant 0 : i32
    return %c0_i32, %c0_i32_0 : i32, i32
  }
  func.func @transform_6(%arg0: i32) -> (i32, i32) {
    %c0_i32 = arith.constant 0 : i32
    %c0_i32_0 = arith.constant 0 : i32
    %c0_i32_1 = arith.constant 0 : i32
    return %c0_i32, %c0_i32_0 : i32, i32
  }
  func.func @transform_7(%arg0: i32) -> (i32, i32) {
    %c0_i32 = arith.constant 0 : i32
    %c0_i32_0 = arith.constant 0 : i32
    %c0_i32_1 = arith.constant 0 : i32
    return %c0_i32, %c0_i32_0 : i32, i32
  }
  func.func @transform_8(%arg0: i32) -> (i32, i32) {
    %c0_i32 = arith.constant 0 : i32
    %c0_i32_0 = arith.constant 0 : i32
    %c0_i32_1 = arith.constant 0 : i32
    return %c0_i32, %c0_i32_0 : i32, i32
  }
  func.func @transform_9(%arg0: i32) -> (i32, i32) {
    %c0_i32 = arith.constant 0 : i32
    %c0_i32_0 = arith.constant 0 : i32
    return %arg0, %c0_i32 : i32, i32
  }
}

</mosaic_0001>

<llo_original>
// kernel: lstm_dvector_forward.1
$region0: #{lstm_dvector_forward.1}
  #allocation0 [shape = 'u32[]', space=smem, size = 0x4, offset = 0x4, fixed_abs, tag = 'smem constant byte address 0x4 - core index']
  #allocation1 [shape = 'u32[144,128]{1,0:T(1,128)}', space=vmem, size = 0x12000, scoped, tag = 'internal scratch']
  #allocation2 [shape = 'f32[64,128]{1,0:T(8,128)}', space=vmem, size = 0x8000, scoped, tag = 'scratch operand']
  #allocation3 [shape = 'f32[64,512]{1,0:T(8,128)}', space=vmem, size = 0x20000, scoped, tag = 'scratch operand']
  %s0 = inlined_call_operand.vmem [shape: f32[8,8,16], index: 0, kind: input, shape index: {}]
  %s1 = inlined_call_operand.vmem [shape: bf16[16,512], index: 1, kind: input, shape index: {}]
  %s2 = inlined_call_operand.hbm [shape: bf16[128,512], index: 2, kind: input, shape index: {}]
  %s3 = inlined_call_operand.vmem [shape: f32[1,512], index: 3, kind: input, shape index: {}]
  %s4 = inlined_call_operand.hbm [shape: bf16[128,512], index: 4, kind: input, shape index: {}]
  %s5 = inlined_call_operand.hbm [shape: bf16[128,512], index: 5, kind: input, shape index: {}]
  %s6 = inlined_call_operand.vmem [shape: f32[1,512], index: 6, kind: input, shape index: {}]
  %s7 = inlined_call_operand.vmem [shape: bf16[128,128], index: 7, kind: input, shape index: {}]
  %s8 = inlined_call_operand.vmem [shape: f32[1,128], index: 8, kind: input, shape index: {}]
  %s9 = inlined_call_operand.vmem [shape: f32[8,128], index: 9, kind: output, shape index: {}]
  %s10 = sld [smem:[#allocation0]]
  $region58: #{lstm_dvector_forward.1} parent=0
    _
  %s12 = ssub.s32 1, %s10
  %s13 = scalar_select 0, %s12, %s10
  $region1: #{lstm_dvector_forward.1} parent=0
    #allocation4 [shape = 'u8[131072]{0}', space=vmem, size = 0x20000, scoped, tag = 'input window, operand 2, single buffered']
    #allocation5 [shape = 's32[1]{0}', space=sflag, size = 0x4, scoped, tag = 'scoped memory for lstm_dvector_forward.1']
    #allocation6 [shape = 'u8[131072]{0}', space=vmem, size = 0x20000, scoped, tag = 'input window, operand 4, single buffered']
    #allocation7 [shape = 's32[1]{0}', space=sflag, size = 0x4, scoped, tag = 'scoped memory for lstm_dvector_forward.1']
    #allocation8 [shape = 'u8[131072]{0}', space=vmem, size = 0x20000, scoped, tag = 'input window, operand 5, single buffered']
    %14 = vsyncpa [#allocation5], 0
    %15 = vsyncpa [#allocation7], 0
    // Predicated region
    $region2: #{lstm_dvector_forward.1} parent=1 // pred_check
      _
    $region3: #{lstm_dvector_forward.1} parent=1 // pred_check_branch
      %17 = sbr.rel (0) target = $region5
    $region4: #{lstm_dvector_forward.1} parent=1 // pred_region
      _
    $region5: #{lstm_dvector_forward.1} parent=1 // pred_fallthru
      _
    // Predicated region
    $region6: #{lstm_dvector_forward.1} parent=1 // pred_check
      _
    $region7: #{lstm_dvector_forward.1} parent=1 // pred_check_branch
      %19 = sbr.rel (0) target = $region9
    $region8: #{lstm_dvector_forward.1} parent=1 // pred_region
      _
    $region9: #{lstm_dvector_forward.1} parent=1 // pred_fallthru
      _
    // Predicated region
    $region10: #{lstm_dvector_forward.1} parent=1 // pred_check
      _
    $region11: #{lstm_dvector_forward.1} parent=1 // pred_check_branch
      %21 = sbr.rel (0) target = $region13
    $region12: #{lstm_dvector_forward.1} parent=1 // pred_region
      %s23 = ssub.s32 4096, 4096
      %24 = vsyncadd [#allocation5], %s23
      %s25 = sshll.u32 [#allocation4], 4
      %s26 = int_to_ptr.vmem [resolvable:$true] %s25
      %31 = dma.hbm_to_vmem [thread:$0]  %s2, 4096, %s26, [#allocation5], 256, 256, 16
    $region13: #{lstm_dvector_forward.1} parent=1 // pred_fallthru
      _
    // Predicated region
    $region14: #{lstm_dvector_forward.1} parent=1 // pred_check
      _
    $region15: #{lstm_dvector_forward.1} parent=1 // pred_check_branch
      %33 = sbr.rel (0) target = $region17
    $region16: #{lstm_dvector_forward.1} parent=1 // pred_region
      _
    $region17: #{lstm_dvector_forward.1} parent=1 // pred_fallthru
      _
    // Predicated region
    $region18: #{lstm_dvector_forward.1} parent=1 // pred_check
      _
    $region19: #{lstm_dvector_forward.1} parent=1 // pred_check_branch
      %35 = sbr.rel (0) target = $region21
    $region20: #{lstm_dvector_forward.1} parent=1 // pred_region
      %s37 = ssub.s32 4096, 4096
      %38 = vsyncadd [#allocation7], %s37
      %s39 = sshll.u32 [#allocation6], 4
      %s40 = int_to_ptr.vmem [resolvable:$true] %s39
      %45 = dma.hbm_to_vmem [thread:$0]  %s4, 4096, %s40, [#allocation7], 256, 256, 16
    $region21: #{lstm_dvector_forward.1} parent=1 // pred_fallthru
      _
    // Predicated region
    $region22: #{lstm_dvector_forward.1} parent=1 // pred_check
      _
    $region23: #{lstm_dvector_forward.1} parent=1 // pred_check_branch
      %47 = sbr.rel (0) target = $region25
    $region24: #{lstm_dvector_forward.1} parent=1 // pred_region
      %s49 = ssub.s32 4096, 4096
      %50 = vsyncadd [#allocation7], %s49
      %s51 = sshll.u32 [#allocation8], 4
      %s52 = int_to_ptr.vmem [resolvable:$true] %s51
      %57 = dma.hbm_to_vmem [thread:$0]  %s5, 4096, %s52, [#allocation7], 256, 256, 16
    $region25: #{lstm_dvector_forward.1} parent=1 // pred_fallthru
      _
    // Predicated region
    $region26: #{lstm_dvector_forward.1} parent=1 // pred_check
      _
    $region27: #{lstm_dvector_forward.1} parent=1 // pred_check_branch
      %59 = sbr.rel (0) target = $region29
    $region28: #{lstm_dvector_forward.1} parent=1 // pred_region
      _
    $region29: #{lstm_dvector_forward.1} parent=1 // pred_fallthru
      _
    // Predicated region
    $region30: #{lstm_dvector_forward.1} parent=1 // pred_check
      _
    $region31: #{lstm_dvector_forward.1} parent=1 // pred_check_branch
      %61 = sbr.rel (0) target = $region33
    $region32: #{lstm_dvector_forward.1} parent=1 // pred_region
      _
    $region33: #{lstm_dvector_forward.1} parent=1 // pred_fallthru
      _
    // Predicated region
    $region34: #{lstm_dvector_forward.1} parent=1 // pred_check
      _
    $region35: #{lstm_dvector_forward.1} parent=1 // pred_check_branch
      %63 = sbr.rel (0) target = $region37
    $region36: #{lstm_dvector_forward.1} parent=1 // pred_region
      _
    $region37: #{lstm_dvector_forward.1} parent=1 // pred_fallthru
      _
    // Predicated region
    $region38: #{lstm_dvector_forward.1} parent=1 // pred_check
      _
    $region39: #{lstm_dvector_forward.1} parent=1 // pred_check_branch
      %65 = sbr.rel (0) target = $region41
    $region40: #{lstm_dvector_forward.1} parent=1 // pred_region
      %66 = dma.done [#allocation5], 4096
    $region41: #{lstm_dvector_forward.1} parent=1 // pred_fallthru
      _
    // Predicated region
    $region42: #{lstm_dvector_forward.1} parent=1 // pred_check
      _
    $region43: #{lstm_dvector_forward.1} parent=1 // pred_check_branch
      %68 = sbr.rel (0) target = $region45
    $region44: #{lstm_dvector_forward.1} parent=1 // pred_region
      %69 = dma.done [#allocation7], 4096
    $region45: #{lstm_dvector_forward.1} parent=1 // pred_fallthru
      _
    // Predicated region
    $region46: #{lstm_dvector_forward.1} parent=1 // pred_check
      _
    $region47: #{lstm_dvector_forward.1} parent=1 // pred_check_branch
      %71 = sbr.rel (0) target = $region49
    $region48: #{lstm_dvector_forward.1} parent=1 // pred_region
      %72 = dma.done [#allocation7], 4096
    $region49: #{lstm_dvector_forward.1} parent=1 // pred_fallthru
      _
    %v74 = vld [vmem:[%s0] sm:$0xff]
    %v75 = vld [vmem:[%s0 + $0x8] sm:$0xff]
    %v76 = vld [vmem:[%s0 + $0x10] sm:$0xff]
    %v77 = vld [vmem:[%s0 + $0x18] sm:$0xff]
    %v78 = vld [vmem:[%s0 + $0x20] sm:$0xff]
    %v79 = vld [vmem:[%s0 + $0x28] sm:$0xff]
    %v80 = vld [vmem:[%s0 + $0x30] sm:$0xff]
    %v81 = vld [vmem:[%s0 + $0x38] sm:$0xff]
    %v82 = vpack.c.bf16 %v75, %v74
    %v83 = vpack.c.bf16 %v77, %v76
    %v84 = vpack.c.bf16 %v79, %v78
    %v85 = vpack.c.bf16 %v81, %v80
    %v86 = vld [vmem:[%s1] sm:$0xff]
    %v87 = vld [vmem:[%s1 + $0x8] sm:$0xff]
    %v88 = vld [vmem:[%s1 + $0x10] sm:$0xff]
    %v89 = vld [vmem:[%s1 + $0x18] sm:$0xff]
    %v90 = vld [vmem:[%s3] sm:$0xf]
    %v92 = vlaneseq
    %v93 = vshrl.u32 %v92, 7
    %v94 = vsub.s32 0, %v93
    %v95 = vrot.slane %v90, %v94
    %v96 = vlaneseq
    %v97 = vshrl.u32 %v96, 7
    %v98 = vsub.s32 1, %v97
    %v99 = vrot.slane %v90, %v98
    %v100 = vlaneseq
    %v101 = vshrl.u32 %v100, 7
    %v102 = vsub.s32 2, %v101
    %v103 = vrot.slane %v90, %v102
    %v104 = vlaneseq
    %v105 = vshrl.u32 %v104, 7
    %v106 = vsub.s32 3, %v105
    %v107 = vrot.slane %v90, %v106
    %v116 = vunpack.c.l.b16 %v86
    %v117 = vunpack.c.h.b16 %v86
    %v118 = vunpack.c.l.b16 %v87
    %v119 = vunpack.c.h.b16 %v87
    %v120 = vunpack.c.l.b16 %v88
    %v121 = vunpack.c.h.b16 %v88
    %v122 = vunpack.c.l.b16 %v89
    %v123 = vunpack.c.h.b16 %v89
    %v124 = vpack.c.b16 %v120, %v116
    %v125 = vpack.c.b16 %v121, %v117
    %v126 = vpack.c.b16 %v122, %v118
    %v127 = vpack.c.b16 %v123, %v119
    %vm132 = vcmask 130048
    %v134 = vsel %vm132, %v82, 0
    %v137 = vsel %vm132, %v83, 0
    %v140 = vsel %vm132, %v84, 0
    %v143 = vsel %vm132, %v85, 0
    %145 = vmatprep.subr.bf16.mxu0 %v125
    %146 = vmatpush1.bf16.msra.mxu0 %v124
    %147 = vmatprep.subr.bf16.mxu0 0
    %148 = vmatpush1.bf16.msra.mxu0 0
    %149 = vmatprep.subr.bf16.mxu0 0
    %150 = vmatpush1.bf16.msra.mxu0 0
    %151 = vmatprep.subr.bf16.mxu0 0
    %152 = vmatpush1.bf16.msra.mxu0 0
    %153 = vmatprep.subr.bf16.mxu0 0
    %154 = vmatpush1.bf16.msra.mxu0 0
    %155 = vmatprep.subr.bf16.mxu0 0
    %156 = vmatpush1.bf16.msra.mxu0 0
    %157 = vmatprep.subr.bf16.mxu0 0
    %158 = vmatpush1.bf16.msra.mxu0 0
    %159 = vmatprep.subr.bf16.mxu0 0
    %160 = vmatpush1.bf16.msra.mxu0 0
    %161 = vmatprep.subr.bf16.mxu0 0
    %162 = vmatpush1.bf16.msra.mxu0 0
    %163 = vmatprep.subr.bf16.mxu0 0
    %164 = vmatpush1.bf16.msra.mxu0 0
    %165 = vmatprep.subr.bf16.mxu0 0
    %166 = vmatpush1.bf16.msra.mxu0 0
    %167 = vmatprep.subr.bf16.mxu0 0
    %168 = vmatpush1.bf16.msra.mxu0 0
    %169 = vmatprep.subr.bf16.mxu0 0
    %170 = vmatpush1.bf16.msra.mxu0 0
    %171 = vmatprep.subr.bf16.mxu0 0
    %172 = vmatpush1.bf16.msra.mxu0 0
    %173 = vmatprep.subr.bf16.mxu0 0
    %174 = vmatpush1.bf16.msra.mxu0 0
    %175 = vmatprep.subr.bf16.mxu0 0
    %176 = vmatpush1.bf16.msra.mxu0 0
    %177 = vmatprep.mubr.bf16.mxu0 0
    %178 = vmatmul.mubr.bf16.gmra.mrb[0].mxu0 %v134
    %v179 = vpop.f32.mrb[0].mxu0
    %v180 = vadd.f32 %v95, %v179
    %v181 = vpop.f32.mrb[0].mxu0
    %v182 = vadd.f32 %v99, %v181
    %v183 = vpop.f32.mrb[0].mxu0
    %v184 = vadd.f32 %v95, %v183
    %v185 = vpop.f32.mrb[0].mxu0
    %v186 = vadd.f32 %v99, %v185
    %187 = vmatprep.mubr.bf16.mxu0 0
    %188 = vmatmul.mubr.bf16.gmra.mrb[0].mxu0 %v137
    %v189 = vpop.f32.mrb[0].mxu0
    %v190 = vadd.f32 %v95, %v189
    %v191 = vpop.f32.mrb[0].mxu0
    %v192 = vadd.f32 %v99, %v191
    %v193 = vpop.f32.mrb[0].mxu0
    %v194 = vadd.f32 %v95, %v193
    %v195 = vpop.f32.mrb[0].mxu0
    %v196 = vadd.f32 %v99, %v195
    %197 = vmatprep.mubr.bf16.mxu0 0
    %198 = vmatmul.mubr.bf16.gmra.mrb[0].mxu0 %v140
    %v199 = vpop.f32.mrb[0].mxu0
    %v200 = vadd.f32 %v95, %v199
    %v201 = vpop.f32.mrb[0].mxu0
    %v202 = vadd.f32 %v99, %v201
    %v203 = vpop.f32.mrb[0].mxu0
    %v204 = vadd.f32 %v95, %v203
    %v205 = vpop.f32.mrb[0].mxu0
    %v206 = vadd.f32 %v99, %v205
    %207 = vmatprep.mubr.bf16.mxu0 0
    %208 = vmatmul.mubr.bf16.gmra.mrb[0].mxu0 %v143
    %v209 = vpop.f32.mrb[0].mxu0
    %v210 = vadd.f32 %v95, %v209
    %v211 = vpop.f32.mrb[0].mxu0
    %v212 = vadd.f32 %v99, %v211
    %v213 = vpop.f32.mrb[0].mxu0
    %v214 = vadd.f32 %v95, %v213
    %v215 = vpop.f32.mrb[0].mxu0
    %v216 = vadd.f32 %v99, %v215
    %217 = vdwg.mxu0
    %218 = vmatprep.subr.bf16.mxu0 %v127
    %219 = vmatpush1.bf16.msra.mxu0 %v126
    %220 = vmatprep.subr.bf16.mxu0 0
    %221 = vmatpush1.bf16.msra.mxu0 0
    %222 = vmatprep.subr.bf16.mxu0 0
    %223 = vmatpush1.bf16.msra.mxu0 0
    %224 = vmatprep.subr.bf16.mxu0 0
    %225 = vmatpush1.bf16.msra.mxu0 0
    %226 = vmatprep.subr.bf16.mxu0 0
    %227 = vmatpush1.bf16.msra.mxu0 0
    %228 = vmatprep.subr.bf16.mxu0 0
    %229 = vmatpush1.bf16.msra.mxu0 0
    %230 = vmatprep.subr.bf16.mxu0 0
    %231 = vmatpush1.bf16.msra.mxu0 0
    %232 = vmatprep.subr.bf16.mxu0 0
    %233 = vmatpush1.bf16.msra.mxu0 0
    %234 = vmatprep.subr.bf16.mxu0 0
    %235 = vmatpush1.bf16.msra.mxu0 0
    %236 = vmatprep.subr.bf16.mxu0 0
    %237 = vmatpush1.bf16.msra.mxu0 0
    %238 = vmatprep.subr.bf16.mxu0 0
    %239 = vmatpush1.bf16.msra.mxu0 0
    %240 = vmatprep.subr.bf16.mxu0 0
    %241 = vmatpush1.bf16.msra.mxu0 0
    %242 = vmatprep.subr.bf16.mxu0 0
    %243 = vmatpush1.bf16.msra.mxu0 0
    %244 = vmatprep.subr.bf16.mxu0 0
    %245 = vmatpush1.bf16.msra.mxu0 0
    %246 = vmatprep.subr.bf16.mxu0 0
    %247 = vmatpush1.bf16.msra.mxu0 0
    %248 = vmatprep.subr.bf16.mxu0 0
    %249 = vmatpush1.bf16.msra.mxu0 0
    %250 = vmatprep.mubr.bf16.mxu0 0
    %251 = vmatmul.mubr.bf16.gmra.mrb[0].mxu0 %v134
    %v252 = vpop.f32.mrb[0].mxu0
    %v253 = vadd.f32 %v103, %v252
    %v254 = vpop.f32.mrb[0].mxu0
    %v255 = vadd.f32 %v107, %v254
    %v256 = vpop.f32.mrb[0].mxu0
    %v257 = vadd.f32 %v103, %v256
    %v258 = vpop.f32.mrb[0].mxu0
    %v259 = vadd.f32 %v107, %v258
    %260 = vmatprep.mubr.bf16.mxu0 0
    %261 = vmatmul.mubr.bf16.gmra.mrb[0].mxu0 %v137
    %v262 = vpop.f32.mrb[0].mxu0
    %v263 = vadd.f32 %v103, %v262
    %v264 = vpop.f32.mrb[0].mxu0
    %v265 = vadd.f32 %v107, %v264
    %v266 = vpop.f32.mrb[0].mxu0
    %v267 = vadd.f32 %v103, %v266
    %v268 = vpop.f32.mrb[0].mxu0
    %v269 = vadd.f32 %v107, %v268
    %270 = vmatprep.mubr.bf16.mxu0 0
    %271 = vmatmul.mubr.bf16.gmra.mrb[0].mxu0 %v140
    %v272 = vpop.f32.mrb[0].mxu0
    %v273 = vadd.f32 %v103, %v272
    %v274 = vpop.f32.mrb[0].mxu0
    %v275 = vadd.f32 %v107, %v274
    %v276 = vpop.f32.mrb[0].mxu0
    %v277 = vadd.f32 %v103, %v276
    %v278 = vpop.f32.mrb[0].mxu0
    %v279 = vadd.f32 %v107, %v278
    %280 = vmatprep.mubr.bf16.mxu0 0
    %281 = vmatmul.mubr.bf16.gmra.mrb[0].mxu0 %v143
    %v282 = vpop.f32.mrb[0].mxu0
    %v283 = vadd.f32 %v103, %v282
    %v284 = vpop.f32.mrb[0].mxu0
    %v285 = vadd.f32 %v107, %v284
    %v286 = vpop.f32.mrb[0].mxu0
    %v287 = vadd.f32 %v103, %v286
    %v288 = vpop.f32.mrb[0].mxu0
    %v289 = vadd.f32 %v107, %v288
    %290 = vdwg.mxu0
    %291 = vst [vmem:[#allocation3] sm:$0xff] %v180
    %292 = vst [vmem:[#allocation3 + $0x8] sm:$0xff] %v182
    %293 = vst [vmem:[#allocation3 + $0x10] sm:$0xff] %v253
    %294 = vst [vmem:[#allocation3 + $0x18] sm:$0xff] %v255
    %295 = vst [vmem:[#allocation3 + $0x20] sm:$0xff] %v184
    %296 = vst [vmem:[#allocation3 + $0x28] sm:$0xff] %v186
    %297 = vst [vmem:[#allocation3 + $0x30] sm:$0xff] %v257
    %298 = vst [vmem:[#allocation3 + $0x38] sm:$0xff] %v259
    %299 = vst [vmem:[#allocation3 + $0x40] sm:$0xff] %v190
    %300 = vst [vmem:[#allocation3 + $0x48] sm:$0xff] %v192
    %301 = vst [vmem:[#allocation3 + $0x50] sm:$0xff] %v263
    %302 = vst [vmem:[#allocation3 + $0x58] sm:$0xff] %v265
    %303 = vst [vmem:[#allocation3 + $0x60] sm:$0xff] %v194
    %304 = vst [vmem:[#allocation3 + $0x68] sm:$0xff] %v196
    %305 = vst [vmem:[#allocation3 + $0x70] sm:$0xff] %v267
    %306 = vst [vmem:[#allocation3 + $0x78] sm:$0xff] %v269
    %307 = vst [vmem:[#allocation3 + $0x80] sm:$0xff] %v200
    %308 = vst [vmem:[#allocation3 + $0x88] sm:$0xff] %v202
    %309 = vst [vmem:[#allocation3 + $0x90] sm:$0xff] %v273
    %310 = vst [vmem:[#allocation3 + $0x98] sm:$0xff] %v275
    %311 = vst [vmem:[#allocation3 + $0xa0] sm:$0xff] %v204
    %312 = vst [vmem:[#allocation3 + $0xa8] sm:$0xff] %v206
    %313 = vst [vmem:[#allocation3 + $0xb0] sm:$0xff] %v277
    %314 = vst [vmem:[#allocation3 + $0xb8] sm:$0xff] %v279
    %315 = vst [vmem:[#allocation3 + $0xc0] sm:$0xff] %v210
    %316 = vst [vmem:[#allocation3 + $0xc8] sm:$0xff] %v212
    %317 = vst [vmem:[#allocation3 + $0xd0] sm:$0xff] %v283
    %318 = vst [vmem:[#allocation3 + $0xd8] sm:$0xff] %v285
    %319 = vst [vmem:[#allocation3 + $0xe0] sm:$0xff] %v214
    %320 = vst [vmem:[#allocation3 + $0xe8] sm:$0xff] %v216
    %321 = vst [vmem:[#allocation3 + $0xf0] sm:$0xff] %v287
    %322 = vst [vmem:[#allocation3 + $0xf8] sm:$0xff] %v289
    %s323 = smul.u32 0, 4
    %s324 = smul.addr %s323, 8
    %s325 = scalar_lea.vmem [#allocation3], %s324
    %v326 = vld [vmem:[%s325] sm:$0xff]
    %v327 = vld [vmem:[%s325 + $0x8] sm:$0xff]
    %v328 = vld [vmem:[%s325 + $0x10] sm:$0xff]
    %v329 = vld [vmem:[%s325 + $0x18] sm:$0xff]
    %v330 = vld [vmem:[#allocation4] sm:$0xff]
    %v331 = vld [vmem:[#allocation4 + $0x8] sm:$0xff]
    %v332 = vld [vmem:[#allocation4 + $0x10] sm:$0xff]
    %v333 = vld [vmem:[#allocation4 + $0x18] sm:$0xff]
    %v334 = vld [vmem:[#allocation4 + $0x20] sm:$0xff]
    %v335 = vld [vmem:[#allocation4 + $0x28] sm:$0xff]
    %v336 = vld [vmem:[#allocation4 + $0x30] sm:$0xff]
    %v337 = vld [vmem:[#allocation4 + $0x38] sm:$0xff]
    %v338 = vld [vmem:[#allocation4 + $0x40] sm:$0xff]
    %v339 = vld [vmem:[#allocation4 + $0x48] sm:$0xff]
    %v340 = vld [vmem:[#allocation4 + $0x50] sm:$0xff]
    %v341 = vld [vmem:[#allocation4 + $0x58] sm:$0xff]
    %v342 = vld [vmem:[#allocation4 + $0x60] sm:$0xff]
    %v343 = vld [vmem:[#allocation4 + $0x68] sm:$0xff]
    %v344 = vld [vmem:[#allocation4 + $0x70] sm:$0xff]
    %v345 = vld [vmem:[#allocation4 + $0x78] sm:$0xff]
    %v346 = vld [vmem:[#allocation4 + $0x80] sm:$0xff]
    %v347 = vld [vmem:[#allocation4 + $0x88] sm:$0xff]
    %v348 = vld [vmem:[#allocation4 + $0x90] sm:$0xff]
    %v349 = vld [vmem:[#allocation4 + $0x98] sm:$0xff]
    %v350 = vld [vmem:[#allocation4 + $0xa0] sm:$0xff]
    %v351 = vld [vmem:[#allocation4 + $0xa8] sm:$0xff]
    %v352 = vld [vmem:[#allocation4 + $0xb0] sm:$0xff]
    %v353 = vld [vmem:[#allocation4 + $0xb8] sm:$0xff]
    %v354 = vld [vmem:[#allocation4 + $0xc0] sm:$0xff]
    %v355 = vld [vmem:[#allocation4 + $0xc8] sm:$0xff]
    %v356 = vld [vmem:[#allocation4 + $0xd0] sm:$0xff]
    %v357 = vld [vmem:[#allocation4 + $0xd8] sm:$0xff]
    %v358 = vld [vmem:[#allocation4 + $0xe0] sm:$0xff]
    %v359 = vld [vmem:[#allocation4 + $0xe8] sm:$0xff]
    %v360 = vld [vmem:[#allocation4 + $0xf0] sm:$0xff]
    %v361 = vld [vmem:[#allocation4 + $0xf8] sm:$0xff]
    %v394 = vunpack.c.l.b16 %v330
    %v395 = vunpack.c.h.b16 %v330
    %v396 = vunpack.c.l.b16 %v331
    %v397 = vunpack.c.h.b16 %v331
    %v398 = vunpack.c.l.b16 %v332
    %v399 = vunpack.c.h.b16 %v332
    %v400 = vunpack.c.l.b16 %v333
    %v401 = vunpack.c.h.b16 %v333
    %v402 = vunpack.c.l.b16 %v334
    %v403 = vunpack.c.h.b16 %v334
    %v404 = vunpack.c.l.b16 %v335
    %v405 = vunpack.c.h.b16 %v335
    %v406 = vunpack.c.l.b16 %v336
    %v407 = vunpack.c.h.b16 %v336
    %v408 = vunpack.c.l.b16 %v337
    %v409 = vunpack.c.h.b16 %v337
    %v410 = vunpack.c.l.b16 %v338
    %v411 = vunpack.c.h.b16 %v338
    %v412 = vunpack.c.l.b16 %v339
    %v413 = vunpack.c.h.b16 %v339
    %v414 = vunpack.c.l.b16 %v340
    %v415 = vunpack.c.h.b16 %v340
    %v416 = vunpack.c.l.b16 %v341
    %v417 = vunpack.c.h.b16 %v341
    %v418 = vunpack.c.l.b16 %v342
    %v419 = vunpack.c.h.b16 %v342
    %v420 = vunpack.c.l.b16 %v343
    %v421 = vunpack.c.h.b16 %v343
    %v422 = vunpack.c.l.b16 %v344
    %v423 = vunpack.c.h.b16 %v344
    %v424 = vunpack.c.l.b16 %v345
    %v425 = vunpack.c.h.b16 %v345
    %v426 = vunpack.c.l.b16 %v346
    %v427 = vunpack.c.h.b16 %v346
    %v428 = vunpack.c.l.b16 %v347
    %v429 = vunpack.c.h.b16 %v347
    %v430 = vunpack.c.l.b16 %v348
    %v431 = vunpack.c.h.b16 %v348
    %v432 = vunpack.c.l.b16 %v349
    %v433 = vunpack.c.h.b16 %v349
    %v434 = vunpack.c.l.b16 %v350
    %v435 = vunpack.c.h.b16 %v350
    %v436 = vunpack.c.l.b16 %v351
    %v437 = vunpack.c.h.b16 %v351
    %v438 = vunpack.c.l.b16 %v352
    %v439 = vunpack.c.h.b16 %v352
    %v440 = vunpack.c.l.b16 %v353
    %v441 = vunpack.c.h.b16 %v353
    %v442 = vunpack.c.l.b16 %v354
    %v443 = vunpack.c.h.b16 %v354
    %v444 = vunpack.c.l.b16 %v355
    %v445 = vunpack.c.h.b16 %v355
    %v446 = vunpack.c.l.b16 %v356
    %v447 = vunpack.c.h.b16 %v356
    %v448 = vunpack.c.l.b16 %v357
    %v449 = vunpack.c.h.b16 %v357
    %v450 = vunpack.c.l.b16 %v358
    %v451 = vunpack.c.h.b16 %v358
    %v452 = vunpack.c.l.b16 %v359
    %v453 = vunpack.c.h.b16 %v359
    %v454 = vunpack.c.l.b16 %v360
    %v455 = vunpack.c.h.b16 %v360
    %v456 = vunpack.c.l.b16 %v361
    %v457 = vunpack.c.h.b16 %v361
    %v458 = vpack.c.b16 %v398, %v394
    %v459 = vpack.c.b16 %v399, %v395
    %v460 = vpack.c.b16 %v400, %v396
    %v461 = vpack.c.b16 %v401, %v397
    %v462 = vpack.c.b16 %v406, %v402
    %v463 = vpack.c.b16 %v407, %v403
    %v464 = vpack.c.b16 %v408, %v404
    %v465 = vpack.c.b16 %v409, %v405
    %v466 = vpack.c.b16 %v414, %v410
    %v467 = vpack.c.b16 %v415, %v411
    %v468 = vpack.c.b16 %v416, %v412
    %v469 = vpack.c.b16 %v417, %v413
    %v470 = vpack.c.b16 %v422, %v418
    %v471 = vpack.c.b16 %v423, %v419
    %v472 = vpack.c.b16 %v424, %v420
    %v473 = vpack.c.b16 %v425, %v421
    %v474 = vpack.c.b16 %v430, %v426
    %v475 = vpack.c.b16 %v431, %v427
    %v476 = vpack.c.b16 %v432, %v428
    %v477 = vpack.c.b16 %v433, %v429
    %v478 = vpack.c.b16 %v438, %v434
    %v479 = vpack.c.b16 %v439, %v435
    %v480 = vpack.c.b16 %v440, %v436
    %v481 = vpack.c.b16 %v441, %v437
    %v482 = vpack.c.b16 %v446, %v442
    %v483 = vpack.c.b16 %v447, %v443
    %v484 = vpack.c.b16 %v448, %v444
    %v485 = vpack.c.b16 %v449, %v445
    %v486 = vpack.c.b16 %v454, %v450
    %v487 = vpack.c.b16 %v455, %v451
    %v488 = vpack.c.b16 %v456, %v452
    %v489 = vpack.c.b16 %v457, %v453
    %522 = vmatprep.subr.bf16.mxu0 %v459
    %523 = vmatpush1.bf16.msra.mxu0 %v458
    %524 = vmatprep.subr.bf16.mxu0 %v463
    %525 = vmatpush1.bf16.msra.mxu0 %v462
    %526 = vmatprep.subr.bf16.mxu0 %v467
    %527 = vmatpush1.bf16.msra.mxu0 %v466
    %528 = vmatprep.subr.bf16.mxu0 %v471
    %529 = vmatpush1.bf16.msra.mxu0 %v470
    %530 = vmatprep.subr.bf16.mxu0 %v475
    %531 = vmatpush1.bf16.msra.mxu0 %v474
    %532 = vmatprep.subr.bf16.mxu0 %v479
    %533 = vmatpush1.bf16.msra.mxu0 %v478
    %534 = vmatprep.subr.bf16.mxu0 %v483
    %535 = vmatpush1.bf16.msra.mxu0 %v482
    %536 = vmatprep.subr.bf16.mxu0 %v487
    %537 = vmatpush1.bf16.msra.mxu0 %v486
    %538 = vmatprep.subr.bf16.mxu0 0
    %539 = vmatpush1.bf16.msra.mxu0 0
    %540 = vmatprep.subr.bf16.mxu0 0
    %541 = vmatpush1.bf16.msra.mxu0 0
    %542 = vmatprep.subr.bf16.mxu0 0
    %543 = vmatpush1.bf16.msra.mxu0 0
    %544 = vmatprep.subr.bf16.mxu0 0
    %545 = vmatpush1.bf16.msra.mxu0 0
    %546 = vmatprep.subr.bf16.mxu0 0
    %547 = vmatpush1.bf16.msra.mxu0 0
    %548 = vmatprep.subr.bf16.mxu0 0
    %549 = vmatpush1.bf16.msra.mxu0 0
    %550 = vmatprep.subr.bf16.mxu0 0
    %551 = vmatpush1.bf16.msra.mxu0 0
    %552 = vmatprep.subr.bf16.mxu0 0
    %553 = vmatpush1.bf16.msra.mxu0 0
    %554 = vmatprep.mubr.bf16.mxu0 0
    %555 = vmatmul.mubr.bf16.gmra.mrb[0].mxu0 0
    %v556 = vpop.f32.mrb[0].mxu0
    %v557 = vadd.f32 0.0, %v556
    %v558 = vpop.f32.mrb[0].mxu0
    %v559 = vadd.f32 0.0, %v558
    %v560 = vpop.f32.mrb[0].mxu0
    %v561 = vpop.f32.mrb[0].mxu0
    %562 = vdwg.mxu0
    %563 = vmatprep.subr.bf16.mxu0 %v461
    %564 = vmatpush1.bf16.msra.mxu0 %v460
    %565 = vmatprep.subr.bf16.mxu0 %v465
    %566 = vmatpush1.bf16.msra.mxu0 %v464
    %567 = vmatprep.subr.bf16.mxu0 %v469
    %568 = vmatpush1.bf16.msra.mxu0 %v468
    %569 = vmatprep.subr.bf16.mxu0 %v473
    %570 = vmatpush1.bf16.msra.mxu0 %v472
    %571 = vmatprep.subr.bf16.mxu0 %v477
    %572 = vmatpush1.bf16.msra.mxu0 %v476
    %573 = vmatprep.subr.bf16.mxu0 %v481
    %574 = vmatpush1.bf16.msra.mxu0 %v480
    %575 = vmatprep.subr.bf16.mxu0 %v485
    %576 = vmatpush1.bf16.msra.mxu0 %v484
    %577 = vmatprep.subr.bf16.mxu0 %v489
    %578 = vmatpush1.bf16.msra.mxu0 %v488
    %579 = vmatprep.subr.bf16.mxu0 0
    %580 = vmatpush1.bf16.msra.mxu0 0
    %581 = vmatprep.subr.bf16.mxu0 0
    %582 = vmatpush1.bf16.msra.mxu0 0
    %583 = vmatprep.subr.bf16.mxu0 0
    %584 = vmatpush1.bf16.msra.mxu0 0
    %585 = vmatprep.subr.bf16.mxu0 0
    %586 = vmatpush1.bf16.msra.mxu0 0
    %587 = vmatprep.subr.bf16.mxu0 0
    %588 = vmatpush1.bf16.msra.mxu0 0
    %589 = vmatprep.subr.bf16.mxu0 0
    %590 = vmatpush1.bf16.msra.mxu0 0
    %591 = vmatprep.subr.bf16.mxu0 0
    %592 = vmatpush1.bf16.msra.mxu0 0
    %593 = vmatprep.subr.bf16.mxu0 0
    %594 = vmatpush1.bf16.msra.mxu0 0
    %595 = vmatprep.mubr.bf16.mxu0 0
    %596 = vmatmul.mubr.bf16.gmra.mrb[0].mxu0 0
    %v597 = vpop.f32.mrb[0].mxu0
    %v598 = vadd.f32 0.0, %v597
    %v599 = vpop.f32.mrb[0].mxu0
    %v600 = vadd.f32 0.0, %v599
    %v601 = vpop.f32.mrb[0].mxu0
    %v602 = vpop.f32.mrb[0].mxu0
    %603 = vdwg.mxu0
    %v604 = vadd.f32 %v326, %v557
    %v605 = vadd.f32 %v327, %v559
    %v606 = vadd.f32 %v328, %v598
    %v607 = vadd.f32 %v329, %v600
    %v608 = vmul.f32 %v604, 0.5
    %v609 = vtanh.pop %v608
    %v610 = vmul.f32 %v609, 0.5
    %v611 = vadd.f32 %v610, 0.5
    %v612 = vmul.f32 %v605, 0.5
    %v613 = vtanh.pop %v612
    %v614 = vmul.f32 %v613, 0.5
    %v615 = vadd.f32 %v614, 0.5
    %v616 = vtanh.pop %v606
    %v617 = vmul.f32 %v607, 0.5
    %v618 = vtanh.pop %v617
    %v619 = vmul.f32 %v618, 0.5
    %v620 = vadd.f32 %v619, 0.5
    %v621 = vmul.f32 %v615, 0.0
    %v622 = vmul.f32 %v611, %v616
    %v623 = vadd.f32 %v621, %v622
    %v624 = vtanh.pop %v623
    %v625 = vmul.f32 %v620, %v624
    %626 = vst [vmem:[#allocation2] sm:$0xff] %v625
    %s627 = smul.u32 1, 4
    %s628 = smul.addr %s627, 8
    %s629 = scalar_lea.vmem [#allocation3], %s628
    %v630 = vld [vmem:[%s629] sm:$0xff]
    %v631 = vld [vmem:[%s629 + $0x8] sm:$0xff]
    %v632 = vld [vmem:[%s629 + $0x10] sm:$0xff]
    %v633 = vld [vmem:[%s629 + $0x18] sm:$0xff]
    %v634 = vpack.c.bf16 %v625, %v625
    %v635 = vld [vmem:[#allocation4] sm:$0xff]
    %v636 = vld [vmem:[#allocation4 + $0x8] sm:$0xff]
    %v637 = vld [vmem:[#allocation4 + $0x10] sm:$0xff]
    %v638 = vld [vmem:[#allocation4 + $0x18] sm:$0xff]
    %v639 = vld [vmem:[#allocation4 + $0x20] sm:$0xff]
    %v640 = vld [vmem:[#allocation4 + $0x28] sm:$0xff]
    %v641 = vld [vmem:[#allocation4 + $0x30] sm:$0xff]
    %v642 = vld [vmem:[#allocation4 + $0x38] sm:$0xff]
    %v643 = vld [vmem:[#allocation4 + $0x40] sm:$0xff]
    %v644 = vld [vmem:[#allocation4 + $0x48] sm:$0xff]
    %v645 = vld [vmem:[#allocation4 + $0x50] sm:$0xff]
    %v646 = vld [vmem:[#allocation4 + $0x58] sm:$0xff]
    %v647 = vld [vmem:[#allocation4 + $0x60] sm:$0xff]
    %v648 = vld [vmem:[#allocation4 + $0x68] sm:$0xff]
    %v649 = vld [vmem:[#allocation4 + $0x70] sm:$0xff]
    %v650 = vld [vmem:[#allocation4 + $0x78] sm:$0xff]
    %v651 = vld [vmem:[#allocation4 + $0x80] sm:$0xff]
    %v652 = vld [vmem:[#allocation4 + $0x88] sm:$0xff]
    %v653 = vld [vmem:[#allocation4 + $0x90] sm:$0xff]
    %v654 = vld [vmem:[#allocation4 + $0x98] sm:$0xff]
    %v655 = vld [vmem:[#allocation4 + $0xa0] sm:$0xff]
    %v656 = vld [vmem:[#allocation4 + $0xa8] sm:$0xff]
    %v657 = vld [vmem:[#allocation4 + $0xb0] sm:$0xff]
    %v658 = vld [vmem:[#allocation4 + $0xb8] sm:$0xff]
    %v659 = vld [vmem:[#allocation4 + $0xc0] sm:$0xff]
    %v660 = vld [vmem:[#allocation4 + $0xc8] sm:$0xff]
    %v661 = vld [vmem:[#allocation4 + $0xd0] sm:$0xff]
    %v662 = vld [vmem:[#allocation4 + $0xd8] sm:$0xff]
    %v663 = vld [vmem:[#allocation4 + $0xe0] sm:$0xff]
    %v664 = vld [vmem:[#allocation4 + $0xe8] sm:$0xff]
    %v665 = vld [vmem:[#allocation4 + $0xf0] sm:$0xff]
    %v666 = vld [vmem:[#allocation4 + $0xf8] sm:$0xff]
    %v699 = vunpack.c.l.b16 %v635
    %v700 = vunpack.c.h.b16 %v635
    %v701 = vunpack.c.l.b16 %v636
    %v702 = vunpack.c.h.b16 %v636
    %v703 = vunpack.c.l.b16 %v637
    %v704 = vunpack.c.h.b16 %v637
    %v705 = vunpack.c.l.b16 %v638
    %v706 = vunpack.c.h.b16 %v638
    %v707 = vunpack.c.l.b16 %v639
    %v708 = vunpack.c.h.b16 %v639
    %v709 = vunpack.c.l.b16 %v640
    %v710 = vunpack.c.h.b16 %v640
    %v711 = vunpack.c.l.b16 %v641
    %v712 = vunpack.c.h.b16 %v641
    %v713 = vunpack.c.l.b16 %v642
    %v714 = vunpack.c.h.b16 %v642
    %v715 = vunpack.c.l.b16 %v643
    %v716 = vunpack.c.h.b16 %v643
    %v717 = vunpack.c.l.b16 %v644
    %v718 = vunpack.c.h.b16 %v644
    %v719 = vunpack.c.l.b16 %v645
    %v720 = vunpack.c.h.b16 %v645
    %v721 = vunpack.c.l.b16 %v646
    %v722 = vunpack.c.h.b16 %v646
    %v723 = vunpack.c.l.b16 %v647
    %v724 = vunpack.c.h.b16 %v647
    %v725 = vunpack.c.l.b16 %v648
    %v726 = vunpack.c.h.b16 %v648
    %v727 = vunpack.c.l.b16 %v649
    %v728 = vunpack.c.h.b16 %v649
    %v729 = vunpack.c.l.b16 %v650
    %v730 = vunpack.c.h.b16 %v650
    %v731 = vunpack.c.l.b16 %v651
    %v732 = vunpack.c.h.b16 %v651
    %v733 = vunpack.c.l.b16 %v652
    %v734 = vunpack.c.h.b16 %v652
    %v735 = vunpack.c.l.b16 %v653
    %v736 = vunpack.c.h.b16 %v653
    %v737 = vunpack.c.l.b16 %v654
    %v738 = vunpack.c.h.b16 %v654
    %v739 = vunpack.c.l.b16 %v655
    %v740 = vunpack.c.h.b16 %v655
    %v741 = vunpack.c.l.b16 %v656
    %v742 = vunpack.c.h.b16 %v656
    %v743 = vunpack.c.l.b16 %v657
    %v744 = vunpack.c.h.b16 %v657
    %v745 = vunpack.c.l.b16 %v658
    %v746 = vunpack.c.h.b16 %v658
    %v747 = vunpack.c.l.b16 %v659
    %v748 = vunpack.c.h.b16 %v659
    %v749 = vunpack.c.l.b16 %v660
    %v750 = vunpack.c.h.b16 %v660
    %v751 = vunpack.c.l.b16 %v661
    %v752 = vunpack.c.h.b16 %v661
    %v753 = vunpack.c.l.b16 %v662
    %v754 = vunpack.c.h.b16 %v662
    %v755 = vunpack.c.l.b16 %v663
    %v756 = vunpack.c.h.b16 %v663
    %v757 = vunpack.c.l.b16 %v664
    %v758 = vunpack.c.h.b16 %v664
    %v759 = vunpack.c.l.b16 %v665
    %v760 = vunpack.c.h.b16 %v665
    %v761 = vunpack.c.l.b16 %v666
    %v762 = vunpack.c.h.b16 %v666
    %v763 = vpack.c.b16 %v703, %v699
    %v764 = vpack.c.b16 %v704, %v700
    %v765 = vpack.c.b16 %v705, %v701
    %v766 = vpack.c.b16 %v706, %v702
    %v767 = vpack.c.b16 %v711, %v707
    %v768 = vpack.c.b16 %v712, %v708
    %v769 = vpack.c.b16 %v713, %v709
    %v770 = vpack.c.b16 %v714, %v710
    %v771 = vpack.c.b16 %v719, %v715
    %v772 = vpack.c.b16 %v720, %v716
    %v773 = vpack.c.b16 %v721, %v717
    %v774 = vpack.c.b16 %v722, %v718
    %v775 = vpack.c.b16 %v727, %v723
    %v776 = vpack.c.b16 %v728, %v724
    %v777 = vpack.c.b16 %v729, %v725
    %v778 = vpack.c.b16 %v730, %v726
    %v779 = vpack.c.b16 %v735, %v731
    %v780 = vpack.c.b16 %v736, %v732
    %v781 = vpack.c.b16 %v737, %v733
    %v782 = vpack.c.b16 %v738, %v734
    %v783 = vpack.c.b16 %v743, %v739
    %v784 = vpack.c.b16 %v744, %v740
    %v785 = vpack.c.b16 %v745, %v741
    %v786 = vpack.c.b16 %v746, %v742
    %v787 = vpack.c.b16 %v751, %v747
    %v788 = vpack.c.b16 %v752, %v748
    %v789 = vpack.c.b16 %v753, %v749
    %v790 = vpack.c.b16 %v754, %v750
    %v791 = vpack.c.b16 %v759, %v755
    %v792 = vpack.c.b16 %v760, %v756
    %v793 = vpack.c.b16 %v761, %v757
    %v794 = vpack.c.b16 %v762, %v758
    %827 = vmatprep.subr.bf16.mxu0 %v764
    %828 = vmatpush1.bf16.msra.mxu0 %v763
    %829 = vmatprep.subr.bf16.mxu0 %v768
    %830 = vmatpush1.bf16.msra.mxu0 %v767
    %831 = vmatprep.subr.bf16.mxu0 %v772
    %832 = vmatpush1.bf16.msra.mxu0 %v771
    %833 = vmatprep.subr.bf16.mxu0 %v776
    %834 = vmatpush1.bf16.msra.mxu0 %v775
    %835 = vmatprep.subr.bf16.mxu0 %v780
    %836 = vmatpush1.bf16.msra.mxu0 %v779
    %837 = vmatprep.subr.bf16.mxu0 %v784
    %838 = vmatpush1.bf16.msra.mxu0 %v783
    %839 = vmatprep.subr.bf16.mxu0 %v788
    %840 = vmatpush1.bf16.msra.mxu0 %v787
    %841 = vmatprep.subr.bf16.mxu0 %v792
    %842 = vmatpush1.bf16.msra.mxu0 %v791
    %843 = vmatprep.subr.bf16.mxu0 0
    %844 = vmatpush1.bf16.msra.mxu0 0
    %845 = vmatprep.subr.bf16.mxu0 0
    %846 = vmatpush1.bf16.msra.mxu0 0
    %847 = vmatprep.subr.bf16.mxu0 0
    %848 = vmatpush1.bf16.msra.mxu0 0
    %849 = vmatprep.subr.bf16.mxu0 0
    %850 = vmatpush1.bf16.msra.mxu0 0
    %851 = vmatprep.subr.bf16.mxu0 0
    %852 = vmatpush1.bf16.msra.mxu0 0
    %853 = vmatprep.subr.bf16.mxu0 0
    %854 = vmatpush1.bf16.msra.mxu0 0
    %855 = vmatprep.subr.bf16.mxu0 0
    %856 = vmatpush1.bf16.msra.mxu0 0
    %857 = vmatprep.subr.bf16.mxu0 0
    %858 = vmatpush1.bf16.msra.mxu0 0
    %859 = vmatprep.mubr.bf16.mxu0 0
    %860 = vmatmul.mubr.bf16.gmra.mrb[0].mxu0 %v634
    %v861 = vpop.f32.mrb[0].mxu0
    %v862 = vadd.f32 0.0, %v861
    %v863 = vpop.f32.mrb[0].mxu0
    %v864 = vadd.f32 0.0, %v863
    %v865 = vpop.f32.mrb[0].mxu0
    %v866 = vpop.f32.mrb[0].mxu0
    %867 = vdwg.mxu0
    %868 = vmatprep.subr.bf16.mxu0 %v766
    %869 = vmatpush1.bf16.msra.mxu0 %v765
    %870 = vmatprep.subr.bf16.mxu0 %v770
    %871 = vmatpush1.bf16.msra.mxu0 %v769
    %872 = vmatprep.subr.bf16.mxu0 %v774
    %873 = vmatpush1.bf16.msra.mxu0 %v773
    %874 = vmatprep.subr.bf16.mxu0 %v778
    %875 = vmatpush1.bf16.msra.mxu0 %v777
    %876 = vmatprep.subr.bf16.mxu0 %v782
    %877 = vmatpush1.bf16.msra.mxu0 %v781
    %878 = vmatprep.subr.bf16.mxu0 %v786
    %879 = vmatpush1.bf16.msra.mxu0 %v785
    %880 = vmatprep.subr.bf16.mxu0 %v790
    %881 = vmatpush1.bf16.msra.mxu0 %v789
    %882 = vmatprep.subr.bf16.mxu0 %v794
    %883 = vmatpush1.bf16.msra.mxu0 %v793
    %884 = vmatprep.subr.bf16.mxu0 0
    %885 = vmatpush1.bf16.msra.mxu0 0
    %886 = vmatprep.subr.bf16.mxu0 0
    %887 = vmatpush1.bf16.msra.mxu0 0
    %888 = vmatprep.subr.bf16.mxu0 0
    %889 = vmatpush1.bf16.msra.mxu0 0
    %890 = vmatprep.subr.bf16.mxu0 0
    %891 = vmatpush1.bf16.msra.mxu0 0
    %892 = vmatprep.subr.bf16.mxu0 0
    %893 = vmatpush1.bf16.msra.mxu0 0
    %894 = vmatprep.subr.bf16.mxu0 0
    %895 = vmatpush1.bf16.msra.mxu0 0
    %896 = vmatprep.subr.bf16.mxu0 0
    %897 = vmatpush1.bf16.msra.mxu0 0
    %898 = vmatprep.subr.bf16.mxu0 0
    %899 = vmatpush1.bf16.msra.mxu0 0
    %900 = vmatprep.mubr.bf16.mxu0 0
    %901 = vmatmul.mubr.bf16.gmra.mrb[0].mxu0 %v634
    %v902 = vpop.f32.mrb[0].mxu0
    %v903 = vadd.f32 0.0, %v902
    %v904 = vpop.f32.mrb[0].mxu0
    %v905 = vadd.f32 0.0, %v904
    %v906 = vpop.f32.mrb[0].mxu0
    %v907 = vpop.f32.mrb[0].mxu0
    %908 = vdwg.mxu0
    %v909 = vadd.f32 %v630, %v862
    %v910 = vadd.f32 %v631, %v864
    %v911 = vadd.f32 %v632, %v903
    %v912 = vadd.f32 %v633, %v905
    %v913 = vmul.f32 %v909, 0.5
    %v914 = vtanh.pop %v913
    %v915 = vmul.f32 %v914, 0.5
    %v916 = vadd.f32 %v915, 0.5
    %v917 = vmul.f32 %v910, 0.5
    %v918 = vtanh.pop %v917
    %v919 = vmul.f32 %v918, 0.5
    %v920 = vadd.f32 %v919, 0.5
    %v921 = vtanh.pop %v911
    %v922 = vmul.f32 %v912, 0.5
    %v923 = vtanh.pop %v922
    %v924 = vmul.f32 %v923, 0.5
    %v925 = vadd.f32 %v924, 0.5
    %v926 = vmul.f32 %v920, %v623
    %v927 = vmul.f32 %v916, %v921
    %v928 = vadd.f32 %v926, %v927
    %v929 = vtanh.pop %v928
    %v930 = vmul.f32 %v925, %v929
    %s931 = scalar_lea.vmem [#allocation2], 8
    %932 = vst [vmem:[%s931] sm:$0xff] %v930
    %s933 = smul.u32 2, 4
    %s934 = smul.addr %s933, 8
    %s935 = scalar_lea.vmem [#allocation3], %s934
    %v936 = vld [vmem:[%s935] sm:$0xff]
    %v937 = vld [vmem:[%s935 + $0x8] sm:$0xff]
    %v938 = vld [vmem:[%s935 + $0x10] sm:$0xff]
    %v939 = vld [vmem:[%s935 + $0x18] sm:$0xff]
    %v940 = vpack.c.bf16 %v930, %v930
    %v941 = vld [vmem:[#allocation4] sm:$0xff]
    %v942 = vld [vmem:[#allocation4 + $0x8] sm:$0xff]
    %v943 = vld [vmem:[#allocation4 + $0x10] sm:$0xff]
    %v944 = vld [vmem:[#allocation4 + $0x18] sm:$0xff]
    %v945 = vld [vmem:[#allocation4 + $0x20] sm:$0xff]
    %v946 = vld [vmem:[#allocation4 + $0x28] sm:$0xff]
    %v947 = vld [vmem:[#allocation4 + $0x30] sm:$0xff]
    %v948 = vld [vmem:[#allocation4 + $0x38] sm:$0xff]
    %v949 = vld [vmem:[#allocation4 + $0x40] sm:$0xff]
    %v950 = vld [vmem:[#allocation4 + $0x48] sm:$0xff]
    %v951 = vld [vmem:[#allocation4 + $0x50] sm:$0xff]
    %v952 = vld [vmem:[#allocation4 + $0x58] sm:$0xff]
    %v953 = vld [vmem:[#allocation4 + $0x60] sm:$0xff]
    %v954 = vld [vmem:[#allocation4 + $0x68] sm:$0xff]
    %v955 = vld [vmem:[#allocation4 + $0x70] sm:$0xff]
    %v956 = vld [vmem:[#allocation4 + $0x78] sm:$0xff]
    %v957 = vld [vmem:[#allocation4 + $0x80] sm:$0xff]
    %v958 = vld [vmem:[#allocation4 + $0x88] sm:$0xff]
    %v959 = vld [vmem:[#allocation4 + $0x90] sm:$0xff]
    %v960 = vld [vmem:[#allocation4 + $0x98] sm:$0xff]
    %v961 = vld [vmem:[#allocation4 + $0xa0] sm:$0xff]
    %v962 = vld [vmem:[#allocation4 + $0xa8] sm:$0xff]
    %v963 = vld [vmem:[#allocation4 + $0xb0] sm:$0xff]
    %v964 = vld [vmem:[#allocation4 + $0xb8] sm:$0xff]
    %v965 = vld [vmem:[#allocation4 + $0xc0] sm:$0xff]
    %v966 = vld [vmem:[#allocation4 + $0xc8] sm:$0xff]
    %v967 = vld [vmem:[#allocation4 + $0xd0] sm:$0xff]
    %v968 = vld [vmem:[#allocation4 + $0xd8] sm:$0xff]
    %v969 = vld [vmem:[#allocation4 + $0xe0] sm:$0xff]
    %v970 = vld [vmem:[#allocation4 + $0xe8] sm:$0xff]
    %v971 = vld [vmem:[#allocation4 + $0xf0] sm:$0xff]
    %v972 = vld [vmem:[#allocation4 + $0xf8] sm:$0xff]
    %v1005 = vunpack.c.l.b16 %v941
    %v1006 = vunpack.c.h.b16 %v941
    %v1007 = vunpack.c.l.b16 %v942
    %v1008 = vunpack.c.h.b16 %v942
    %v1009 = vunpack.c.l.b16 %v943
    %v1010 = vunpack.c.h.b16 %v943
    %v1011 = vunpack.c.l.b16 %v944
    %v1012 = vunpack.c.h.b16 %v944
    %v1013 = vunpack.c.l.b16 %v945
    %v1014 = vunpack.c.h.b16 %v945
    %v1015 = vunpack.c.l.b16 %v946
    %v1016 = vunpack.c.h.b16 %v946
    %v1017 = vunpack.c.l.b16 %v947
    %v1018 = vunpack.c.h.b16 %v947
    %v1019 = vunpack.c.l.b16 %v948
    %v1020 = vunpack.c.h.b16 %v948
    %v1021 = vunpack.c.l.b16 %v949
    %v1022 = vunpack.c.h.b16 %v949
    %v1023 = vunpack.c.l.b16 %v950
    %v1024 = vunpack.c.h.b16 %v950
    %v1025 = vunpack.c.l.b16 %v951
    %v1026 = vunpack.c.h.b16 %v951
    %v1027 = vunpack.c.l.b16 %v952
    %v1028 = vunpack.c.h.b16 %v952
    %v1029 = vunpack.c.l.b16 %v953
    %v1030 = vunpack.c.h.b16 %v953
    %v1031 = vunpack.c.l.b16 %v954
    %v1032 = vunpack.c.h.b16 %v954
    %v1033 = vunpack.c.l.b16 %v955
    %v1034 = vunpack.c.h.b16 %v955
    %v1035 = vunpack.c.l.b16 %v956
    %v1036 = vunpack.c.h.b16 %v956
    %v1037 = vunpack.c.l.b16 %v957
    %v1038 = vunpack.c.h.b16 %v957
    %v1039 = vunpack.c.l.b16 %v958
    %v1040 = vunpack.c.h.b16 %v958
    %v1041 = vunpack.c.l.b16 %v959
    %v1042 = vunpack.c.h.b16 %v959
    %v1043 = vunpack.c.l.b16 %v960
    %v1044 = vunpack.c.h.b16 %v960
    %v1045 = vunpack.c.l.b16 %v961
    %v1046 = vunpack.c.h.b16 %v961
    %v1047 = vunpack.c.l.b16 %v962
    %v1048 = vunpack.c.h.b16 %v962
    %v1049 = vunpack.c.l.b16 %v963
    %v1050 = vunpack.c.h.b16 %v963
    %v1051 = vunpack.c.l.b16 %v964
    %v1052 = vunpack.c.h.b16 %v964
    %v1053 = vunpack.c.l.b16 %v965
    %v1054 = vunpack.c.h.b16 %v965
    %v1055 = vunpack.c.l.b16 %v966
    %v1056 = vunpack.c.h.b16 %v966
    %v1057 = vunpack.c.l.b16 %v967
    %v1058 = vunpack.c.h.b16 %v967
    %v1059 = vunpack.c.l.b16 %v968
    %v1060 = vunpack.c.h.b16 %v968
    %v1061 = vunpack.c.l.b16 %v969
    %v1062 = vunpack.c.h.b16 %v969
    %v1063 = vunpack.c.l.b16 %v970
    %v1064 = vunpack.c.h.b16 %v970
    %v1065 = vunpack.c.l.b16 %v971
    %v1066 = vunpack.c.h.b16 %v971
    %v1067 = vunpack.c.l.b16 %v972
    %v1068 = vunpack.c.h.b16 %v972
    %v1069 = vpack.c.b16 %v1009, %v1005
    %v1070 = vpack.c.b16 %v1010, %v1006
    %v1071 = vpack.c.b16 %v1011, %v1007
    %v1072 = vpack.c.b16 %v1012, %v1008
    %v1073 = vpack.c.b16 %v1017, %v1013
    %v1074 = vpack.c.b16 %v1018, %v1014
    %v1075 = vpack.c.b16 %v1019, %v1015
    %v1076 = vpack.c.b16 %v1020, %v1016
    %v1077 = vpack.c.b16 %v1025, %v1021
    %v1078 = vpack.c.b16 %v1026, %v1022
    %v1079 = vpack.c.b16 %v1027, %v1023
    %v1080 = vpack.c.b16 %v1028, %v1024
    %v1081 = vpack.c.b16 %v1033, %v1029
    %v1082 = vpack.c.b16 %v1034, %v1030
    %v1083 = vpack.c.b16 %v1035, %v1031
    %v1084 = vpack.c.b16 %v1036, %v1032
    %v1085 = vpack.c.b16 %v1041, %v1037
    %v1086 = vpack.c.b16 %v1042, %v1038
    %v1087 = vpack.c.b16 %v1043, %v1039
    %v1088 = vpack.c.b16 %v1044, %v1040
    %v1089 = vpack.c.b16 %v1049, %v1045
    %v1090 = vpack.c.b16 %v1050, %v1046
    %v1091 = vpack.c.b16 %v1051, %v1047
    %v1092 = vpack.c.b16 %v1052, %v1048
    %v1093 = vpack.c.b16 %v1057, %v1053
    %v1094 = vpack.c.b16 %v1058, %v1054
    %v1095 = vpack.c.b16 %v1059, %v1055
    %v1096 = vpack.c.b16 %v1060, %v1056
    %v1097 = vpack.c.b16 %v1065, %v1061
    %v1098 = vpack.c.b16 %v1066, %v1062
    %v1099 = vpack.c.b16 %v1067, %v1063
    %v1100 = vpack.c.b16 %v1068, %v1064
    %1133 = vmatprep.subr.bf16.mxu0 %v1070
    %1134 = vmatpush1.bf16.msra.mxu0 %v1069
    %1135 = vmatprep.subr.bf16.mxu0 %v1074
    %1136 = vmatpush1.bf16.msra.mxu0 %v1073
    %1137 = vmatprep.subr.bf16.mxu0 %v1078
    %1138 = vmatpush1.bf16.msra.mxu0 %v1077
    %1139 = vmatprep.subr.bf16.mxu0 %v1082
    %1140 = vmatpush1.bf16.msra.mxu0 %v1081
    %1141 = vmatprep.subr.bf16.mxu0 %v1086
    %1142 = vmatpush1.bf16.msra.mxu0 %v1085
    %1143 = vmatprep.subr.bf16.mxu0 %v1090
    %1144 = vmatpush1.bf16.msra.mxu0 %v1089
    %1145 = vmatprep.subr.bf16.mxu0 %v1094
    %1146 = vmatpush1.bf16.msra.mxu0 %v1093
    %1147 = vmatprep.subr.bf16.mxu0 %v1098
    %1148 = vmatpush1.bf16.msra.mxu0 %v1097
    %1149 = vmatprep.subr.bf16.mxu0 0
    %1150 = vmatpush1.bf16.msra.mxu0 0
    %1151 = vmatprep.subr.bf16.mxu0 0
    %1152 = vmatpush1.bf16.msra.mxu0 0
    %1153 = vmatprep.subr.bf16.mxu0 0
    %1154 = vmatpush1.bf16.msra.mxu0 0
    %1155 = vmatprep.subr.bf16.mxu0 0
    %1156 = vmatpush1.bf16.msra.mxu0 0
    %1157 = vmatprep.subr.bf16.mxu0 0
    %1158 = vmatpush1.bf16.msra.mxu0 0
    %1159 = vmatprep.subr.bf16.mxu0 0
    %1160 = vmatpush1.bf16.msra.mxu0 0
    %1161 = vmatprep.subr.bf16.mxu0 0
    %1162 = vmatpush1.bf16.msra.mxu0 0
    %1163 = vmatprep.subr.bf16.mxu0 0
    %1164 = vmatpush1.bf16.msra.mxu0 0
    %1165 = vmatprep.mubr.bf16.mxu0 0
    %1166 = vmatmul.mubr.bf16.gmra.mrb[0].mxu0 %v940
    %v1167 = vpop.f32.mrb[0].mxu0
    %v1168 = vadd.f32 0.0, %v1167
    %v1169 = vpop.f32.mrb[0].mxu0
    %v1170 = vadd.f32 0.0, %v1169
    %v1171 = vpop.f32.mrb[0].mxu0
    %v1172 = vpop.f32.mrb[0].mxu0
    %1173 = vdwg.mxu0
    %1174 = vmatprep.subr.bf16.mxu0 %v1072
    %1175 = vmatpush1.bf16.msra.mxu0 %v1071
    %1176 = vmatprep.subr.bf16.mxu0 %v1076
    %1177 = vmatpush1.bf16.msra.mxu0 %v1075
    %1178 = vmatprep.subr.bf16.mxu0 %v1080
    %1179 = vmatpush1.bf16.msra.mxu0 %v1079
    %1180 = vmatprep.subr.bf16.mxu0 %v1084
    %1181 = vmatpush1.bf16.msra.mxu0 %v1083
    %1182 = vmatprep.subr.bf16.mxu0 %v1088
    %1183 = vmatpush1.bf16.msra.mxu0 %v1087
    %1184 = vmatprep.subr.bf16.mxu0 %v1092
    %1185 = vmatpush1.bf16.msra.mxu0 %v1091
    %1186 = vmatprep.subr.bf16.mxu0 %v1096
    %1187 = vmatpush1.bf16.msra.mxu0 %v1095
    %1188 = vmatprep.subr.bf16.mxu0 %v1100
    %1189 = vmatpush1.bf16.msra.mxu0 %v1099
    %1190 = vmatprep.subr.bf16.mxu0 0
    %1191 = vmatpush1.bf16.msra.mxu0 0
    %1192 = vmatprep.subr.bf16.mxu0 0
    %1193 = vmatpush1.bf16.msra.mxu0 0
    %1194 = vmatprep.subr.bf16.mxu0 0
    %1195 = vmatpush1.bf16.msra.mxu0 0
    %1196 = vmatprep.subr.bf16.mxu0 0
    %1197 = vmatpush1.bf16.msra.mxu0 0
    %1198 = vmatprep.subr.bf16.mxu0 0
    %1199 = vmatpush1.bf16.msra.mxu0 0
    %1200 = vmatprep.subr.bf16.mxu0 0
    %1201 = vmatpush1.bf16.msra.mxu0 0
    %1202 = vmatprep.subr.bf16.mxu0 0
    %1203 = vmatpush1.bf16.msra.mxu0 0
    %1204 = vmatprep.subr.bf16.mxu0 0
    %1205 = vmatpush1.bf16.msra.mxu0 0
    %1206 = vmatprep.mubr.bf16.mxu0 0
    %1207 = vmatmul.mubr.bf16.gmra.mrb[0].mxu0 %v940
    %v1208 = vpop.f32.mrb[0].mxu0
    %v1209 = vadd.f32 0.0, %v1208
    %v1210 = vpop.f32.mrb[0].mxu0
    %v1211 = vadd.f32 0.0, %v1210
    %v1212 = vpop.f32.mrb[0].mxu0
    %v1213 = vpop.f32.mrb[0].mxu0
    %1214 = vdwg.mxu0
    %v1215 = vadd.f32 %v936, %v1168
    %v1216 = vadd.f32 %v937, %v1170
    %v1217 = vadd.f32 %v938, %v1209
    %v1218 = vadd.f32 %v939, %v1211
    %v1219 = vmul.f32 %v1215, 0.5
    %v1220 = vtanh.pop %v1219
    %v1221 = vmul.f32 %v1220, 0.5
    %v1222 = vadd.f32 %v1221, 0.5
    %v1223 = vmul.f32 %v1216, 0.5
    %v1224 = vtanh.pop %v1223
    %v1225 = vmul.f32 %v1224, 0.5
    %v1226 = vadd.f32 %v1225, 0.5
    %v1227 = vtanh.pop %v1217
    %v1228 = vmul.f32 %v1218, 0.5
    %v1229 = vtanh.pop %v1228
    %v1230 = vmul.f32 %v1229, 0.5
    %v1231 = vadd.f32 %v1230, 0.5
    %v1232 = vmul.f32 %v1226, %v928
    %v1233 = vmul.f32 %v1222, %v1227
    %v1234 = vadd.f32 %v1232, %v1233
    %v1235 = vtanh.pop %v1234
    %v1236 = vmul.f32 %v1231, %v1235
    %s1237 = scalar_lea.vmem [#allocation2], 16
    %1238 = vst [vmem:[%s1237] sm:$0xff] %v1236
    %s1239 = smul.u32 3, 4
    %s1240 = smul.addr %s1239, 8
    %s1241 = scalar_lea.vmem [#allocation3], %s1240
    %v1242 = vld [vmem:[%s1241] sm:$0xff]
    %v1243 = vld [vmem:[%s1241 + $0x8] sm:$0xff]
    %v1244 = vld [vmem:[%s1241 + $0x10] sm:$0xff]
    %v1245 = vld [vmem:[%s1241 + $0x18] sm:$0xff]
    %v1246 = vpack.c.bf16 %v1236, %v1236
    %v1247 = vld [vmem:[#allocation4] sm:$0xff]
    %v1248 = vld [vmem:[#allocation4 + $0x8] sm:$0xff]
    %v1249 = vld [vmem:[#allocation4 + $0x10] sm:$0xff]
    %v1250 = vld [vmem:[#allocation4 + $0x18] sm:$0xff]
    %v1251 = vld [vmem:[#allocation4 + $0x20] sm:$0xff]
    %v1252 = vld [vmem:[#allocation4 + $0x28] sm:$0xff]
    %v1253 = vld [vmem:[#allocation4 + $0x30] sm:$0xff]
    %v1254 = vld [vmem:[#allocation4 + $0x38] sm:$0xff]
    %v1255 = vld [vmem:[#allocation4 + $0x40] sm:$0xff]
    %v1256 = vld [vmem:[#allocation4 + $0x48] sm:$0xff]
    %v1257 = vld [vmem:[#allocation4 + $0x50] sm:$0xff]
    %v1258 = vld [vmem:[#allocation4 + $0x58] sm:$0xff]
    %v1259 = vld [vmem:[#allocation4 + $0x60] sm:$0xff]
    %v1260 = vld [vmem:[#allocation4 + $0x68] sm:$0xff]
    %v1261 = vld [vmem:[#allocation4 + $0x70] sm:$0xff]
    %v1262 = vld [vmem:[#allocation4 + $0x78] sm:$0xff]
    %v1263 = vld [vmem:[#allocation4 + $0x80] sm:$0xff]
    %v1264 = vld [vmem:[#allocation4 + $0x88] sm:$0xff]
    %v1265 = vld [vmem:[#allocation4 + $0x90] sm:$0xff]
    %v1266 = vld [vmem:[#allocation4 + $0x98] sm:$0xff]
    %v1267 = vld [vmem:[#allocation4 + $0xa0] sm:$0xff]
    %v1268 = vld [vmem:[#allocation4 + $0xa8] sm:$0xff]
    %v1269 = vld [vmem:[#allocation4 + $0xb0] sm:$0xff]
    %v1270 = vld [vmem:[#allocation4 + $0xb8] sm:$0xff]
    %v1271 = vld [vmem:[#allocation4 + $0xc0] sm:$0xff]
    %v1272 = vld [vmem:[#allocation4 + $0xc8] sm:$0xff]
    %v1273 = vld [vmem:[#allocation4 + $0xd0] sm:$0xff]
    %v1274 = vld [vmem:[#allocation4 + $0xd8] sm:$0xff]
    %v1275 = vld [vmem:[#allocation4 + $0xe0] sm:$0xff]
    %v1276 = vld [vmem:[#allocation4 + $0xe8] sm:$0xff]
    %v1277 = vld [vmem:[#allocation4 + $0xf0] sm:$0xff]
    %v1278 = vld [vmem:[#allocation4 + $0xf8] sm:$0xff]
    %v1311 = vunpack.c.l.b16 %v1247
    %v1312 = vunpack.c.h.b16 %v1247
    %v1313 = vunpack.c.l.b16 %v1248
    %v1314 = vunpack.c.h.b16 %v1248
    %v1315 = vunpack.c.l.b16 %v1249
    %v1316 = vunpack.c.h.b16 %v1249
    %v1317 = vunpack.c.l.b16 %v1250
    %v1318 = vunpack.c.h.b16 %v1250
    %v1319 = vunpack.c.l.b16 %v1251
    %v1320 = vunpack.c.h.b16 %v1251
    %v1321 = vunpack.c.l.b16 %v1252
    %v1322 = vunpack.c.h.b16 %v1252
    %v1323 = vunpack.c.l.b16 %v1253
    %v1324 = vunpack.c.h.b16 %v1253
    %v1325 = vunpack.c.l.b16 %v1254
    %v1326 = vunpack.c.h.b16 %v1254
    %v1327 = vunpack.c.l.b16 %v1255
    %v1328 = vunpack.c.h.b16 %v1255
    %v1329 = vunpack.c.l.b16 %v1256
    %v1330 = vunpack.c.h.b16 %v1256
    %v1331 = vunpack.c.l.b16 %v1257
    %v1332 = vunpack.c.h.b16 %v1257
    %v1333 = vunpack.c.l.b16 %v1258
    %v1334 = vunpack.c.h.b16 %v1258
    %v1335 = vunpack.c.l.b16 %v1259
    %v1336 = vunpack.c.h.b16 %v1259
    %v1337 = vunpack.c.l.b16 %v1260
    %v1338 = vunpack.c.h.b16 %v1260
    %v1339 = vunpack.c.l.b16 %v1261
    %v1340 = vunpack.c.h.b16 %v1261
    %v1341 = vunpack.c.l.b16 %v1262
    %v1342 = vunpack.c.h.b16 %v1262
    %v1343 = vunpack.c.l.b16 %v1263
    %v1344 = vunpack.c.h.b16 %v1263
    %v1345 = vunpack.c.l.b16 %v1264
    %v1346 = vunpack.c.h.b16 %v1264
    %v1347 = vunpack.c.l.b16 %v1265
    %v1348 = vunpack.c.h.b16 %v1265
    %v1349 = vunpack.c.l.b16 %v1266
    %v1350 = vunpack.c.h.b16 %v1266
    %v1351 = vunpack.c.l.b16 %v1267
    %v1352 = vunpack.c.h.b16 %v1267
    %v1353 = vunpack.c.l.b16 %v1268
    %v1354 = vunpack.c.h.b16 %v1268
    %v1355 = vunpack.c.l.b16 %v1269
    %v1356 = vunpack.c.h.b16 %v1269
    %v1357 = vunpack.c.l.b16 %v1270
    %v1358 = vunpack.c.h.b16 %v1270
    %v1359 = vunpack.c.l.b16 %v1271
    %v1360 = vunpack.c.h.b16 %v1271
    %v1361 = vunpack.c.l.b16 %v1272
    %v1362 = vunpack.c.h.b16 %v1272
    %v1363 = vunpack.c.l.b16 %v1273
    %v1364 = vunpack.c.h.b16 %v1273
    %v1365 = vunpack.c.l.b16 %v1274
    %v1366 = vunpack.c.h.b16 %v1274
    %v1367 = vunpack.c.l.b16 %v1275
    %v1368 = vunpack.c.h.b16 %v1275
    %v1369 = vunpack.c.l.b16 %v1276
    %v1370 = vunpack.c.h.b16 %v1276
    %v1371 = vunpack.c.l.b16 %v1277
    %v1372 = vunpack.c.h.b16 %v1277
    %v1373 = vunpack.c.l.b16 %v1278
    %v1374 = vunpack.c.h.b16 %v1278
    %v1375 = vpack.c.b16 %v1315, %v1311
    %v1376 = vpack.c.b16 %v1316, %v1312
    %v1377 = vpack.c.b16 %v1317, %v1313
    %v1378 = vpack.c.b16 %v1318, %v1314
    %v1379 = vpack.c.b16 %v1323, %v1319
    %v1380 = vpack.c.b16 %v1324, %v1320
    %v1381 = vpack.c.b16 %v1325, %v1321
    %v1382 = vpack.c.b16 %v1326, %v1322
    %v1383 = vpack.c.b16 %v1331, %v1327
    %v1384 = vpack.c.b16 %v1332, %v1328
    %v1385 = vpack.c.b16 %v1333, %v1329
    %v1386 = vpack.c.b16 %v1334, %v1330
    %v1387 = vpack.c.b16 %v1339, %v1335
    %v1388 = vpack.c.b16 %v1340, %v1336
    %v1389 = vpack.c.b16 %v1341, %v1337
    %v1390 = vpack.c.b16 %v1342, %v1338
    %v1391 = vpack.c.b16 %v1347, %v1343
    %v1392 = vpack.c.b16 %v1348, %v1344
    %v1393 = vpack.c.b16 %v1349, %v1345
    %v1394 = vpack.c.b16 %v1350, %v1346
    %v1395 = vpack.c.b16 %v1355, %v1351
    %v1396 = vpack.c.b16 %v1356, %v1352
    %v1397 = vpack.c.b16 %v1357, %v1353
    %v1398 = vpack.c.b16 %v1358, %v1354
    %v1399 = vpack.c.b16 %v1363, %v1359
    %v1400 = vpack.c.b16 %v1364, %v1360
    %v1401 = vpack.c.b16 %v1365, %v1361
    %v1402 = vpack.c.b16 %v1366, %v1362
    %v1403 = vpack.c.b16 %v1371, %v1367
    %v1404 = vpack.c.b16 %v1372, %v1368
    %v1405 = vpack.c.b16 %v1373, %v1369
    %v1406 = vpack.c.b16 %v1374, %v1370
    %1439 = vmatprep.subr.bf16.mxu0 %v1376
    %1440 = vmatpush1.bf16.msra.mxu0 %v1375
    %1441 = vmatprep.subr.bf16.mxu0 %v1380
    %1442 = vmatpush1.bf16.msra.mxu0 %v1379
    %1443 = vmatprep.subr.bf16.mxu0 %v1384
    %1444 = vmatpush1.bf16.msra.mxu0 %v1383
    %1445 = vmatprep.subr.bf16.mxu0 %v1388
    %1446 = vmatpush1.bf16.msra.mxu0 %v1387
    %1447 = vmatprep.subr.bf16.mxu0 %v1392
    %1448 = vmatpush1.bf16.msra.mxu0 %v1391
    %1449 = vmatprep.subr.bf16.mxu0 %v1396
    %1450 = vmatpush1.bf16.msra.mxu0 %v1395
    %1451 = vmatprep.subr.bf16.mxu0 %v1400
    %1452 = vmatpush1.bf16.msra.mxu0 %v1399
    %1453 = vmatprep.subr.bf16.mxu0 %v1404
    %1454 = vmatpush1.bf16.msra.mxu0 %v1403
    %1455 = vmatprep.subr.bf16.mxu0 0
    %1456 = vmatpush1.bf16.msra.mxu0 0
    %1457 = vmatprep.subr.bf16.mxu0 0
    %1458 = vmatpush1.bf16.msra.mxu0 0
    %1459 = vmatprep.subr.bf16.mxu0 0
    %1460 = vmatpush1.bf16.msra.mxu0 0
    %1461 = vmatprep.subr.bf16.mxu0 0
    %1462 = vmatpush1.bf16.msra.mxu0 0
    %1463 = vmatprep.subr.bf16.mxu0 0
    %1464 = vmatpush1.bf16.msra.mxu0 0
    %1465 = vmatprep.subr.bf16.mxu0 0
    %1466 = vmatpush1.bf16.msra.mxu0 0
    %1467 = vmatprep.subr.bf16.mxu0 0
    %1468 = vmatpush1.bf16.msra.mxu0 0
    %1469 = vmatprep.subr.bf16.mxu0 0
    %1470 = vmatpush1.bf16.msra.mxu0 0
    %1471 = vmatprep.mubr.bf16.mxu0 0
    %1472 = vmatmul.mubr.bf16.gmra.mrb[0].mxu0 %v1246
    %v1473 = vpop.f32.mrb[0].mxu0
    %v1474 = vadd.f32 0.0, %v1473
    %v1475 = vpop.f32.mrb[0].mxu0
    %v1476 = vadd.f32 0.0, %v1475
    %v1477 = vpop.f32.mrb[0].mxu0
    %v1478 = vpop.f32.mrb[0].mxu0
    %1479 = vdwg.mxu0
    %1480 = vmatprep.subr.bf16.mxu0 %v1378
    %1481 = vmatpush1.bf16.msra.mxu0 %v1377
    %1482 = vmatprep.subr.bf16.mxu0 %v1382
    %1483 = vmatpush1.bf16.msra.mxu0 %v1381
    %1484 = vmatprep.subr.bf16.mxu0 %v1386
    %1485 = vmatpush1.bf16.msra.mxu0 %v1385
    %1486 = vmatprep.subr.bf16.mxu0 %v1390
    %1487 = vmatpush1.bf16.msra.mxu0 %v1389
    %1488 = vmatprep.subr.bf16.mxu0 %v1394
    %1489 = vmatpush1.bf16.msra.mxu0 %v1393
    %1490 = vmatprep.subr.bf16.mxu0 %v1398
    %1491 = vmatpush1.bf16.msra.mxu0 %v1397
    %1492 = vmatprep.subr.bf16.mxu0 %v1402
    %1493 = vmatpush1.bf16.msra.mxu0 %v1401
    %1494 = vmatprep.subr.bf16.mxu0 %v1406
    %1495 = vmatpush1.bf16.msra.mxu0 %v1405
    %1496 = vmatprep.subr.bf16.mxu0 0
    %1497 = vmatpush1.bf16.msra.mxu0 0
    %1498 = vmatprep.subr.bf16.mxu0 0
    %1499 = vmatpush1.bf16.msra.mxu0 0
    %1500 = vmatprep.subr.bf16.mxu0 0
    %1501 = vmatpush1.bf16.msra.mxu0 0
    %1502 = vmatprep.subr.bf16.mxu0 0
    %1503 = vmatpush1.bf16.msra.mxu0 0
    %1504 = vmatprep.subr.bf16.mxu0 0
    %1505 = vmatpush1.bf16.msra.mxu0 0
    %1506 = vmatprep.subr.bf16.mxu0 0
    %1507 = vmatpush1.bf16.msra.mxu0 0
    %1508 = vmatprep.subr.bf16.mxu0 0
    %1509 = vmatpush1.bf16.msra.mxu0 0
    %1510 = vmatprep.subr.bf16.mxu0 0
    %1511 = vmatpush1.bf16.msra.mxu0 0
    %1512 = vmatprep.mubr.bf16.mxu0 0
    %1513 = vmatmul.mubr.bf16.gmra.mrb[0].mxu0 %v1246
    %v1514 = vpop.f32.mrb[0].mxu0
    %v1515 = vadd.f32 0.0, %v1514
    %v1516 = vpop.f32.mrb[0].mxu0
    %v1517 = vadd.f32 0.0, %v1516
    %v1518 = vpop.f32.mrb[0].mxu0
    %v1519 = vpop.f32.mrb[0].mxu0
    %1520 = vdwg.mxu0
    %v1521 = vadd.f32 %v1242, %v1474
    %v1522 = vadd.f32 %v1243, %v1476
    %v1523 = vadd.f32 %v1244, %v1515
    %v1524 = vadd.f32 %v1245, %v1517
    %v1525 = vmul.f32 %v1521, 0.5
    %v1526 = vtanh.pop %v1525
    %v1527 = vmul.f32 %v1526, 0.5
    %v1528 = vadd.f32 %v1527, 0.5
    %v1529 = vmul.f32 %v1522, 0.5
    %v1530 = vtanh.pop %v1529
    %v1531 = vmul.f32 %v1530, 0.5
    %v1532 = vadd.f32 %v1531, 0.5
    %v1533 = vtanh.pop %v1523
    %v1534 = vmul.f32 %v1524, 0.5
    %v1535 = vtanh.pop %v1534
    %v1536 = vmul.f32 %v1535, 0.5
    %v1537 = vadd.f32 %v1536, 0.5
    %v1538 = vmul.f32 %v1532, %v1234
    %v1539 = vmul.f32 %v1528, %v1533
    %v1540 = vadd.f32 %v1538, %v1539
    %v1541 = vtanh.pop %v1540
    %v1542 = vmul.f32 %v1537, %v1541
    %s1543 = scalar_lea.vmem [#allocation2], 24
    %1544 = vst [vmem:[%s1543] sm:$0xff] %v1542
    %s1545 = smul.u32 4, 4
    %s1546 = smul.addr %s1545, 8
    %s1547 = scalar_lea.vmem [#allocation3], %s1546
    %v1548 = vld [vmem:[%s1547] sm:$0xff]
    %v1549 = vld [vmem:[%s1547 + $0x8] sm:$0xff]
    %v1550 = vld [vmem:[%s1547 + $0x10] sm:$0xff]
    %v1551 = vld [vmem:[%s1547 + $0x18] sm:$0xff]
    %v1552 = vpack.c.bf16 %v1542, %v1542
    %v1553 = vld [vmem:[#allocation4] sm:$0xff]
    %v1554 = vld [vmem:[#allocation4 + $0x8] sm:$0xff]
    %v1555 = vld [vmem:[#allocation4 + $0x10] sm:$0xff]
    %v1556 = vld [vmem:[#allocation4 + $0x18] sm:$0xff]
    %v1557 = vld [vmem:[#allocation4 + $0x20] sm:$0xff]
    %v1558 = vld [vmem:[#allocation4 + $0x28] sm:$0xff]
    %v1559 = vld [vmem:[#allocation4 + $0x30] sm:$0xff]
    %v1560 = vld [vmem:[#allocation4 + $0x38] sm:$0xff]
    %v1561 = vld [vmem:[#allocation4 + $0x40] sm:$0xff]
    %v1562 = vld [vmem:[#allocation4 + $0x48] sm:$0xff]
    %v1563 = vld [vmem:[#allocation4 + $0x50] sm:$0xff]
    %v1564 = vld [vmem:[#allocation4 + $0x58] sm:$0xff]
    %v1565 = vld [vmem:[#allocation4 + $0x60] sm:$0xff]
    %v1566 = vld [vmem:[#allocation4 + $0x68] sm:$0xff]
    %v1567 = vld [vmem:[#allocation4 + $0x70] sm:$0xff]
    %v1568 = vld [vmem:[#allocation4 + $0x78] sm:$0xff]
    %v1569 = vld [vmem:[#allocation4 + $0x80] sm:$0xff]
    %v1570 = vld [vmem:[#allocation4 + $0x88] sm:$0xff]
    %v1571 = vld [vmem:[#allocation4 + $0x90] sm:$0xff]
    %v1572 = vld [vmem:[#allocation4 + $0x98] sm:$0xff]
    %v1573 = vld [vmem:[#allocation4 + $0xa0] sm:$0xff]
    %v1574 = vld [vmem:[#allocation4 + $0xa8] sm:$0xff]
    %v1575 = vld [vmem:[#allocation4 + $0xb0] sm:$0xff]
    %v1576 = vld [vmem:[#allocation4 + $0xb8] sm:$0xff]
    %v1577 = vld [vmem:[#allocation4 + $0xc0] sm:$0xff]
    %v1578 = vld [vmem:[#allocation4 + $0xc8] sm:$0xff]
    %v1579 = vld [vmem:[#allocation4 + $0xd0] sm:$0xff]
    %v1580 = vld [vmem:[#allocation4 + $0xd8] sm:$0xff]
    %v1581 = vld [vmem:[#allocation4 + $0xe0] sm:$0xff]
    %v1582 = vld [vmem:[#allocation4 + $0xe8] sm:$0xff]
    %v1583 = vld [vmem:[#allocation4 + $0xf0] sm:$0xff]
    %v1584 = vld [vmem:[#allocation4 + $0xf8] sm:$0xff]
    %v1617 = vunpack.c.l.b16 %v1553
    %v1618 = vunpack.c.h.b16 %v1553
    %v1619 = vunpack.c.l.b16 %v1554
    %v1620 = vunpack.c.h.b16 %v1554
    %v1621 = vunpack.c.l.b16 %v1555
    %v1622 = vunpack.c.h.b16 %v1555
    %v1623 = vunpack.c.l.b16 %v1556
    %v1624 = vunpack.c.h.b16 %v1556
    %v1625 = vunpack.c.l.b16 %v1557
    %v1626 = vunpack.c.h.b16 %v1557
    %v1627 = vunpack.c.l.b16 %v1558
    %v1628 = vunpack.c.h.b16 %v1558
    %v1629 = vunpack.c.l.b16 %v1559
    %v1630 = vunpack.c.h.b16 %v1559
    %v1631 = vunpack.c.l.b16 %v1560
    %v1632 = vunpack.c.h.b16 %v1560
    %v1633 = vunpack.c.l.b16 %v1561
    %v1634 = vunpack.c.h.b16 %v1561
    %v1635 = vunpack.c.l.b16 %v1562
    %v1636 = vunpack.c.h.b16 %v1562
    %v1637 = vunpack.c.l.b16 %v1563
    %v1638 = vunpack.c.h.b16 %v1563
    %v1639 = vunpack.c.l.b16 %v1564
    %v1640 = vunpack.c.h.b16 %v1564
    %v1641 = vunpack.c.l.b16 %v1565
    %v1642 = vunpack.c.h.b16 %v1565
    %v1643 = vunpack.c.l.b16 %v1566
    %v1644 = vunpack.c.h.b16 %v1566
    %v1645 = vunpack.c.l.b16 %v1567
    %v1646 = vunpack.c.h.b16 %v1567
    %v1647 = vunpack.c.l.b16 %v1568
    %v1648 = vunpack.c.h.b16 %v1568
    %v1649 = vunpack.c.l.b16 %v1569
    %v1650 = vunpack.c.h.b16 %v1569
    %v1651 = vunpack.c.l.b16 %v1570
    %v1652 = vunpack.c.h.b16 %v1570
    %v1653 = vunpack.c.l.b16 %v1571
    %v1654 = vunpack.c.h.b16 %v1571
    %v1655 = vunpack.c.l.b16 %v1572
    %v1656 = vunpack.c.h.b16 %v1572
    %v1657 = vunpack.c.l.b16 %v1573
    %v1658 = vunpack.c.h.b16 %v1573
    %v1659 = vunpack.c.l.b16 %v1574
    %v1660 = vunpack.c.h.b16 %v1574
    %v1661 = vunpack.c.l.b16 %v1575
    %v1662 = vunpack.c.h.b16 %v1575
    %v1663 = vunpack.c.l.b16 %v1576
    %v1664 = vunpack.c.h.b16 %v1576
    %v1665 = vunpack.c.l.b16 %v1577
    %v1666 = vunpack.c.h.b16 %v1577
    %v1667 = vunpack.c.l.b16 %v1578
    %v1668 = vunpack.c.h.b16 %v1578
    %v1669 = vunpack.c.l.b16 %v1579
    %v1670 = vunpack.c.h.b16 %v1579
    %v1671 = vunpack.c.l.b16 %v1580
    %v1672 = vunpack.c.h.b16 %v1580
    %v1673 = vunpack.c.l.b16 %v1581
    %v1674 = vunpack.c.h.b16 %v1581
    %v1675 = vunpack.c.l.b16 %v1582
    %v1676 = vunpack.c.h.b16 %v1582
    %v1677 = vunpack.c.l.b16 %v1583
    %v1678 = vunpack.c.h.b16 %v1583
    %v1679 = vunpack.c.l.b16 %v1584
    %v1680 = vunpack.c.h.b16 %v1584
    %v1681 = vpack.c.b16 %v1621, %v1617
    %v1682 = vpack.c.b16 %v1622, %v1618
    %v1683 = vpack.c.b16 %v1623, %v1619
    %v1684 = vpack.c.b16 %v1624, %v1620
    %v1685 = vpack.c.b16 %v1629, %v1625
    %v1686 = vpack.c.b16 %v1630, %v1626
    %v1687 = vpack.c.b16 %v1631, %v1627
    %v1688 = vpack.c.b16 %v1632, %v1628
    %v1689 = vpack.c.b16 %v1637, %v1633
    %v1690 = vpack.c.b16 %v1638, %v1634
    %v1691 = vpack.c.b16 %v1639, %v1635
    %v1692 = vpack.c.b16 %v1640, %v1636
    %v1693 = vpack.c.b16 %v1645, %v1641
    %v1694 = vpack.c.b16 %v1646, %v1642
    %v1695 = vpack.c.b16 %v1647, %v1643
    %v1696 = vpack.c.b16 %v1648, %v1644
    %v1697 = vpack.c.b16 %v1653, %v1649
    %v1698 = vpack.c.b16 %v1654, %v1650
    %v1699 = vpack.c.b16 %v1655, %v1651
    %v1700 = vpack.c.b16 %v1656, %v1652
    %v1701 = vpack.c.b16 %v1661, %v1657
    %v1702 = vpack.c.b16 %v1662, %v1658
    %v1703 = vpack.c.b16 %v1663, %v1659
    %v1704 = vpack.c.b16 %v1664, %v1660
    %v1705 = vpack.c.b16 %v1669, %v1665
    %v1706 = vpack.c.b16 %v1670, %v1666
    %v1707 = vpack.c.b16 %v1671, %v1667
    %v1708 = vpack.c.b16 %v1672, %v1668
    %v1709 = vpack.c.b16 %v1677, %v1673
    %v1710 = vpack.c.b16 %v1678, %v1674
    %v1711 = vpack.c.b16 %v1679, %v1675
    %v1712 = vpack.c.b16 %v1680, %v1676
    %1745 = vmatprep.subr.bf16.mxu0 %v1682
    %1746 = vmatpush1.bf16.msra.mxu0 %v1681
    %1747 = vmatprep.subr.bf16.mxu0 %v1686
    %1748 = vmatpush1.bf16.msra.mxu0 %v1685
    %1749 = vmatprep.subr.bf16.mxu0 %v1690
    %1750 = vmatpush1.bf16.msra.mxu0 %v1689
    %1751 = vmatprep.subr.bf16.mxu0 %v1694
    %1752 = vmatpush1.bf16.msra.mxu0 %v1693
    %1753 = vmatprep.subr.bf16.mxu0 %v1698
    %1754 = vmatpush1.bf16.msra.mxu0 %v1697
    %1755 = vmatprep.subr.bf16.mxu0 %v1702
    %1756 = vmatpush1.bf16.msra.mxu0 %v1701
    %1757 = vmatprep.subr.bf16.mxu0 %v1706
    %1758 = vmatpush1.bf16.msra.mxu0 %v1705
    %1759 = vmatprep.subr.bf16.mxu0 %v1710
    %1760 = vmatpush1.bf16.msra.mxu0 %v1709
    %1761 = vmatprep.subr.bf16.mxu0 0
    %1762 = vmatpush1.bf16.msra.mxu0 0
    %1763 = vmatprep.subr.bf16.mxu0 0
    %1764 = vmatpush1.bf16.msra.mxu0 0
    %1765 = vmatprep.subr.bf16.mxu0 0
    %1766 = vmatpush1.bf16.msra.mxu0 0
    %1767 = vmatprep.subr.bf16.mxu0 0
    %1768 = vmatpush1.bf16.msra.mxu0 0
    %1769 = vmatprep.subr.bf16.mxu0 0
    %1770 = vmatpush1.bf16.msra.mxu0 0
    %1771 = vmatprep.subr.bf16.mxu0 0
    %1772 = vmatpush1.bf16.msra.mxu0 0
    %1773 = vmatprep.subr.bf16.mxu0 0
    %1774 = vmatpush1.bf16.msra.mxu0 0
    %1775 = vmatprep.subr.bf16.mxu0 0
    %1776 = vmatpush1.bf16.msra.mxu0 0
    %1777 = vmatprep.mubr.bf16.mxu0 0
    %1778 = vmatmul.mubr.bf16.gmra.mrb[0].mxu0 %v1552
    %v1779 = vpop.f32.mrb[0].mxu0
    %v1780 = vadd.f32 0.0, %v1779
    %v1781 = vpop.f32.mrb[0].mxu0
    %v1782 = vadd.f32 0.0, %v1781
    %v1783 = vpop.f32.mrb[0].mxu0
    %v1784 = vpop.f32.mrb[0].mxu0
    %1785 = vdwg.mxu0
    %1786 = vmatprep.subr.bf16.mxu0 %v1684
    %1787 = vmatpush1.bf16.msra.mxu0 %v1683
    %1788 = vmatprep.subr.bf16.mxu0 %v1688
    %1789 = vmatpush1.bf16.msra.mxu0 %v1687
    %1790 = vmatprep.subr.bf16.mxu0 %v1692
    %1791 = vmatpush1.bf16.msra.mxu0 %v1691
    %1792 = vmatprep.subr.bf16.mxu0 %v1696
    %1793 = vmatpush1.bf16.msra.mxu0 %v1695
    %1794 = vmatprep.subr.bf16.mxu0 %v1700
    %1795 = vmatpush1.bf16.msra.mxu0 %v1699
    %1796 = vmatprep.subr.bf16.mxu0 %v1704
    %1797 = vmatpush1.bf16.msra.mxu0 %v1703
    %1798 = vmatprep.subr.bf16.mxu0 %v1708
    %1799 = vmatpush1.bf16.msra.mxu0 %v1707
    %1800 = vmatprep.subr.bf16.mxu0 %v1712
    %1801 = vmatpush1.bf16.msra.mxu0 %v1711
    %1802 = vmatprep.subr.bf16.mxu0 0
    %1803 = vmatpush1.bf16.msra.mxu0 0
    %1804 = vmatprep.subr.bf16.mxu0 0
    %1805 = vmatpush1.bf16.msra.mxu0 0
    %1806 = vmatprep.subr.bf16.mxu0 0
    %1807 = vmatpush1.bf16.msra.mxu0 0
    %1808 = vmatprep.subr.bf16.mxu0 0
    %1809 = vmatpush1.bf16.msra.mxu0 0
    %1810 = vmatprep.subr.bf16.mxu0 0
    %1811 = vmatpush1.bf16.msra.mxu0 0
    %1812 = vmatprep.subr.bf16.mxu0 0
    %1813 = vmatpush1.bf16.msra.mxu0 0
    %1814 = vmatprep.subr.bf16.mxu0 0
    %1815 = vmatpush1.bf16.msra.mxu0 0
    %1816 = vmatprep.subr.bf16.mxu0 0
    %1817 = vmatpush1.bf16.msra.mxu0 0
    %1818 = vmatprep.mubr.bf16.mxu0 0
    %1819 = vmatmul.mubr.bf16.gmra.mrb[0].mxu0 %v1552
    %v1820 = vpop.f32.mrb[0].mxu0
    %v1821 = vadd.f32 0.0, %v1820
    %v1822 = vpop.f32.mrb[0].mxu0
    %v1823 = vadd.f32 0.0, %v1822
    %v1824 = vpop.f32.mrb[0].mxu0
    %v1825 = vpop.f32.mrb[0].mxu0
    %1826 = vdwg.mxu0
    %v1827 = vadd.f32 %v1548, %v1780
    %v1828 = vadd.f32 %v1549, %v1782
    %v1829 = vadd.f32 %v1550, %v1821
    %v1830 = vadd.f32 %v1551, %v1823
    %v1831 = vmul.f32 %v1827, 0.5
    %v1832 = vtanh.pop %v1831
    %v1833 = vmul.f32 %v1832, 0.5
    %v1834 = vadd.f32 %v1833, 0.5
    %v1835 = vmul.f32 %v1828, 0.5
    %v1836 = vtanh.pop %v1835
    %v1837 = vmul.f32 %v1836, 0.5
    %v1838 = vadd.f32 %v1837, 0.5
    %v1839 = vtanh.pop %v1829
    %v1840 = vmul.f32 %v1830, 0.5
    %v1841 = vtanh.pop %v1840
    %v1842 = vmul.f32 %v1841, 0.5
    %v1843 = vadd.f32 %v1842, 0.5
    %v1844 = vmul.f32 %v1838, %v1540
    %v1845 = vmul.f32 %v1834, %v1839
    %v1846 = vadd.f32 %v1844, %v1845
    %v1847 = vtanh.pop %v1846
    %v1848 = vmul.f32 %v1843, %v1847
    %s1849 = scalar_lea.vmem [#allocation2], 32
    %1850 = vst [vmem:[%s1849] sm:$0xff] %v1848
    %s1851 = smul.u32 5, 4
    %s1852 = smul.addr %s1851, 8
    %s1853 = scalar_lea.vmem [#allocation3], %s1852
    %v1854 = vld [vmem:[%s1853] sm:$0xff]
    %v1855 = vld [vmem:[%s1853 + $0x8] sm:$0xff]
    %v1856 = vld [vmem:[%s1853 + $0x10] sm:$0xff]
    %v1857 = vld [vmem:[%s1853 + $0x18] sm:$0xff]
    %v1858 = vpack.c.bf16 %v1848, %v1848
    %v1859 = vld [vmem:[#allocation4] sm:$0xff]
    %v1860 = vld [vmem:[#allocation4 + $0x8] sm:$0xff]
    %v1861 = vld [vmem:[#allocation4 + $0x10] sm:$0xff]
    %v1862 = vld [vmem:[#allocation4 + $0x18] sm:$0xff]
    %v1863 = vld [vmem:[#allocation4 + $0x20] sm:$0xff]
    %v1864 = vld [vmem:[#allocation4 + $0x28] sm:$0xff]
    %v1865 = vld [vmem:[#allocation4 + $0x30] sm:$0xff]
    %v1866 = vld [vmem:[#allocation4 + $0x38] sm:$0xff]
    %v1867 = vld [vmem:[#allocation4 + $0x40] sm:$0xff]
    %v1868 = vld [vmem:[#allocation4 + $0x48] sm:$0xff]
    %v1869 = vld [vmem:[#allocation4 + $0x50] sm:$0xff]
    %v1870 = vld [vmem:[#allocation4 + $0x58] sm:$0xff]
    %v1871 = vld [vmem:[#allocation4 + $0x60] sm:$0xff]
    %v1872 = vld [vmem:[#allocation4 + $0x68] sm:$0xff]
    %v1873 = vld [vmem:[#allocation4 + $0x70] sm:$0xff]
    %v1874 = vld [vmem:[#allocation4 + $0x78] sm:$0xff]
    %v1875 = vld [vmem:[#allocation4 + $0x80] sm:$0xff]
    %v1876 = vld [vmem:[#allocation4 + $0x88] sm:$0xff]
    %v1877 = vld [vmem:[#allocation4 + $0x90] sm:$0xff]
    %v1878 = vld [vmem:[#allocation4 + $0x98] sm:$0xff]
    %v1879 = vld [vmem:[#allocation4 + $0xa0] sm:$0xff]
    %v1880 = vld [vmem:[#allocation4 + $0xa8] sm:$0xff]
    %v1881 = vld [vmem:[#allocation4 + $0xb0] sm:$0xff]
    %v1882 = vld [vmem:[#allocation4 + $0xb8] sm:$0xff]
    %v1883 = vld [vmem:[#allocation4 + $0xc0] sm:$0xff]
    %v1884 = vld [vmem:[#allocation4 + $0xc8] sm:$0xff]
    %v1885 = vld [vmem:[#allocation4 + $0xd0] sm:$0xff]
    %v1886 = vld [vmem:[#allocation4 + $0xd8] sm:$0xff]
    %v1887 = vld [vmem:[#allocation4 + $0xe0] sm:$0xff]
    %v1888 = vld [vmem:[#allocation4 + $0xe8] sm:$0xff]
    %v1889 = vld [vmem:[#allocation4 + $0xf0] sm:$0xff]
    %v1890 = vld [vmem:[#allocation4 + $0xf8] sm:$0xff]
    %v1923 = vunpack.c.l.b16 %v1859
    %v1924 = vunpack.c.h.b16 %v1859
    %v1925 = vunpack.c.l.b16 %v1860
    %v1926 = vunpack.c.h.b16 %v1860
    %v1927 = vunpack.c.l.b16 %v1861
    %v1928 = vunpack.c.h.b16 %v1861
    %v1929 = vunpack.c.l.b16 %v1862
    %v1930 = vunpack.c.h.b16 %v1862
    %v1931 = vunpack.c.l.b16 %v1863
    %v1932 = vunpack.c.h.b16 %v1863
    %v1933 = vunpack.c.l.b16 %v1864
    %v1934 = vunpack.c.h.b16 %v1864
    %v1935 = vunpack.c.l.b16 %v1865
    %v1936 = vunpack.c.h.b16 %v1865
    %v1937 = vunpack.c.l.b16 %v1866
    %v1938 = vunpack.c.h.b16 %v1866
    %v1939 = vunpack.c.l.b16 %v1867
    %v1940 = vunpack.c.h.b16 %v1867
    %v1941 = vunpack.c.l.b16 %v1868
    %v1942 = vunpack.c.h.b16 %v1868
    %v1943 = vunpack.c.l.b16 %v1869
    %v1944 = vunpack.c.h.b16 %v1869
    %v1945 = vunpack.c.l.b16 %v1870
    %v1946 = vunpack.c.h.b16 %v1870
    %v1947 = vunpack.c.l.b16 %v1871
    %v1948 = vunpack.c.h.b16 %v1871
    %v1949 = vunpack.c.l.b16 %v1872
    %v1950 = vunpack.c.h.b16 %v1872
    %v1951 = vunpack.c.l.b16 %v1873
    %v1952 = vunpack.c.h.b16 %v1873
    %v1953 = vunpack.c.l.b16 %v1874
    %v1954 = vunpack.c.h.b16 %v1874
    %v1955 = vunpack.c.l.b16 %v1875
    %v1956 = vunpack.c.h.b16 %v1875
    %v1957 = vunpack.c.l.b16 %v1876
    %v1958 = vunpack.c.h.b16 %v1876
    %v1959 = vunpack.c.l.b16 %v1877
    %v1960 = vunpack.c.h.b16 %v1877
    %v1961 = vunpack.c.l.b16 %v1878
    %v1962 = vunpack.c.h.b16 %v1878
    %v1963 = vunpack.c.l.b16 %v1879
    %v1964 = vunpack.c.h.b16 %v1879
    %v1965 = vunpack.c.l.b16 %v1880
    %v1966 = vunpack.c.h.b16 %v1880
    %v1967 = vunpack.c.l.b16 %v1881
    %v1968 = vunpack.c.h.b16 %v1881
    %v1969 = vunpack.c.l.b16 %v1882
    %v1970 = vunpack.c.h.b16 %v1882
    %v1971 = vunpack.c.l.b16 %v1883
    %v1972 = vunpack.c.h.b16 %v1883
    %v1973 = vunpack.c.l.b16 %v1884
    %v1974 = vunpack.c.h.b16 %v1884
    %v1975 = vunpack.c.l.b16 %v1885
    %v1976 = vunpack.c.h.b16 %v1885
    %v1977 = vunpack.c.l.b16 %v1886
    %v1978 = vunpack.c.h.b16 %v1886
    %v1979 = vunpack.c.l.b16 %v1887
    %v1980 = vunpack.c.h.b16 %v1887
    %v1981 = vunpack.c.l.b16 %v1888
    %v1982 = vunpack.c.h.b16 %v1888
    %v1983 = vunpack.c.l.b16 %v1889
    %v1984 = vunpack.c.h.b16 %v1889
    %v1985 = vunpack.c.l.b16 %v1890
    %v1986 = vunpack.c.h.b16 %v1890
    %v1987 = vpack.c.b16 %v1927, %v1923
    %v1988 = vpack.c.b16 %v1928, %v1924
    %v1989 = vpack.c.b16 %v1929, %v1925
    %v1990 = vpack.c.b16 %v1930, %v1926
    %v1991 = vpack.c.b16 %v1935, %v1931
    %v1992 = vpack.c.b16 %v1936, %v1932
    %v1993 = vpack.c.b16 %v1937, %v1933
    %v1994 = vpack.c.b16 %v1938, %v1934
    %v1995 = vpack.c.b16 %v1943, %v1939
    %v1996 = vpack.c.b16 %v1944, %v1940
    %v1997 = vpack.c.b16 %v1945, %v1941
    %v1998 = vpack.c.b16 %v1946, %v1942
    %v1999 = vpack.c.b16 %v1951, %v1947
    %v2000 = vpack.c.b16 %v1952, %v1948
    %v2001 = vpack.c.b16 %v1953, %v1949
    %v2002 = vpack.c.b16 %v1954, %v1950
    %v2003 = vpack.c.b16 %v1959, %v1955
    %v2004 = vpack.c.b16 %v1960, %v1956
    %v2005 = vpack.c.b16 %v1961, %v1957
    %v2006 = vpack.c.b16 %v1962, %v1958
    %v2007 = vpack.c.b16 %v1967, %v1963
    %v2008 = vpack.c.b16 %v1968, %v1964
    %v2009 = vpack.c.b16 %v1969, %v1965
    %v2010 = vpack.c.b16 %v1970, %v1966
    %v2011 = vpack.c.b16 %v1975, %v1971
    %v2012 = vpack.c.b16 %v1976, %v1972
    %v2013 = vpack.c.b16 %v1977, %v1973
    %v2014 = vpack.c.b16 %v1978, %v1974
    %v2015 = vpack.c.b16 %v1983, %v1979
    %v2016 = vpack.c.b16 %v1984, %v1980
    %v2017 = vpack.c.b16 %v1985, %v1981
    %v2018 = vpack.c.b16 %v1986, %v1982
    %2051 = vmatprep.subr.bf16.mxu0 %v1988
    %2052 = vmatpush1.bf16.msra.mxu0 %v1987
    %2053 = vmatprep.subr.bf16.mxu0 %v1992
    %2054 = vmatpush1.bf16.msra.mxu0 %v1991
    %2055 = vmatprep.subr.bf16.mxu0 %v1996
    %2056 = vmatpush1.bf16.msra.mxu0 %v1995
    %2057 = vmatprep.subr.bf16.mxu0 %v2000
    %2058 = vmatpush1.bf16.msra.mxu0 %v1999
    %2059 = vmatprep.subr.bf16.mxu0 %v2004
    %2060 = vmatpush1.bf16.msra.mxu0 %v2003
    %2061 = vmatprep.subr.bf16.mxu0 %v2008
    %2062 = vmatpush1.bf16.msra.mxu0 %v2007
    %2063 = vmatprep.subr.bf16.mxu0 %v2012
    %2064 = vmatpush1.bf16.msra.mxu0 %v2011
    %2065 = vmatprep.subr.bf16.mxu0 %v2016
    %2066 = vmatpush1.bf16.msra.mxu0 %v2015
    %2067 = vmatprep.subr.bf16.mxu0 0
    %2068 = vmatpush1.bf16.msra.mxu0 0
    %2069 = vmatprep.subr.bf16.mxu0 0
    %2070 = vmatpush1.bf16.msra.mxu0 0
    %2071 = vmatprep.subr.bf16.mxu0 0
    %2072 = vmatpush1.bf16.msra.mxu0 0
    %2073 = vmatprep.subr.bf16.mxu0 0
    %2074 = vmatpush1.bf16.msra.mxu0 0
    %2075 = vmatprep.subr.bf16.mxu0 0
    %2076 = vmatpush1.bf16.msra.mxu0 0
    %2077 = vmatprep.subr.bf16.mxu0 0
    %2078 = vmatpush1.bf16.msra.mxu0 0
    %2079 = vmatprep.subr.bf16.mxu0 0
    %2080 = vmatpush1.bf16.msra.mxu0 0
    %2081 = vmatprep.subr.bf16.mxu0 0
    %2082 = vmatpush1.bf16.msra.mxu0 0
    %2083 = vmatprep.mubr.bf16.mxu0 0
    %2084 = vmatmul.mubr.bf16.gmra.mrb[0].mxu0 %v1858
    %v2085 = vpop.f32.mrb[0].mxu0
    %v2086 = vadd.f32 0.0, %v2085
    %v2087 = vpop.f32.mrb[0].mxu0
    %v2088 = vadd.f32 0.0, %v2087
    %v2089 = vpop.f32.mrb[0].mxu0
    %v2090 = vpop.f32.mrb[0].mxu0
    %2091 = vdwg.mxu0
    %2092 = vmatprep.subr.bf16.mxu0 %v1990
    %2093 = vmatpush1.bf16.msra.mxu0 %v1989
    %2094 = vmatprep.subr.bf16.mxu0 %v1994
    %2095 = vmatpush1.bf16.msra.mxu0 %v1993
    %2096 = vmatprep.subr.bf16.mxu0 %v1998
    %2097 = vmatpush1.bf16.msra.mxu0 %v1997
    %2098 = vmatprep.subr.bf16.mxu0 %v2002
    %2099 = vmatpush1.bf16.msra.mxu0 %v2001
    %2100 = vmatprep.subr.bf16.mxu0 %v2006
    %2101 = vmatpush1.bf16.msra.mxu0 %v2005
    %2102 = vmatprep.subr.bf16.mxu0 %v2010
    %2103 = vmatpush1.bf16.msra.mxu0 %v2009
    %2104 = vmatprep.subr.bf16.mxu0 %v2014
    %2105 = vmatpush1.bf16.msra.mxu0 %v2013
    %2106 = vmatprep.subr.bf16.mxu0 %v2018
    %2107 = vmatpush1.bf16.msra.mxu0 %v2017
    %2108 = vmatprep.subr.bf16.mxu0 0
    %2109 = vmatpush1.bf16.msra.mxu0 0
    %2110 = vmatprep.subr.bf16.mxu0 0
    %2111 = vmatpush1.bf16.msra.mxu0 0
    %2112 = vmatprep.subr.bf16.mxu0 0
    %2113 = vmatpush1.bf16.msra.mxu0 0
    %2114 = vmatprep.subr.bf16.mxu0 0
    %2115 = vmatpush1.bf16.msra.mxu0 0
    %2116 = vmatprep.subr.bf16.mxu0 0
    %2117 = vmatpush1.bf16.msra.mxu0 0
    %2118 = vmatprep.subr.bf16.mxu0 0
    %2119 = vmatpush1.bf16.msra.mxu0 0
    %2120 = vmatprep.subr.bf16.mxu0 0
    %2121 = vmatpush1.bf16.msra.mxu0 0
    %2122 = vmatprep.subr.bf16.mxu0 0
    %2123 = vmatpush1.bf16.msra.mxu0 0
    %2124 = vmatprep.mubr.bf16.mxu0 0
    %2125 = vmatmul.mubr.bf16.gmra.mrb[0].mxu0 %v1858
    %v2126 = vpop.f32.mrb[0].mxu0
    %v2127 = vadd.f32 0.0, %v2126
    %v2128 = vpop.f32.mrb[0].mxu0
    %v2129 = vadd.f32 0.0, %v2128
    %v2130 = vpop.f32.mrb[0].mxu0
    %v2131 = vpop.f32.mrb[0].mxu0
    %2132 = vdwg.mxu0
    %v2133 = vadd.f32 %v1854, %v2086
    %v2134 = vadd.f32 %v1855, %v2088
    %v2135 = vadd.f32 %v1856, %v2127
    %v2136 = vadd.f32 %v1857, %v2129
    %v2137 = vmul.f32 %v2133, 0.5
    %v2138 = vtanh.pop %v2137
    %v2139 = vmul.f32 %v2138, 0.5
    %v2140 = vadd.f32 %v2139, 0.5
    %v2141 = vmul.f32 %v2134, 0.5
    %v2142 = vtanh.pop %v2141
    %v2143 = vmul.f32 %v2142, 0.5
    %v2144 = vadd.f32 %v2143, 0.5
    %v2145 = vtanh.pop %v2135
    %v2146 = vmul.f32 %v2136, 0.5
    %v2147 = vtanh.pop %v2146
    %v2148 = vmul.f32 %v2147, 0.5
    %v2149 = vadd.f32 %v2148, 0.5
    %v2150 = vmul.f32 %v2144, %v1846
    %v2151 = vmul.f32 %v2140, %v2145
    %v2152 = vadd.f32 %v2150, %v2151
    %v2153 = vtanh.pop %v2152
    %v2154 = vmul.f32 %v2149, %v2153
    %s2155 = scalar_lea.vmem [#allocation2], 40
    %2156 = vst [vmem:[%s2155] sm:$0xff] %v2154
    %s2157 = smul.u32 6, 4
    %s2158 = smul.addr %s2157, 8
    %s2159 = scalar_lea.vmem [#allocation3], %s2158
    %v2160 = vld [vmem:[%s2159] sm:$0xff]
    %v2161 = vld [vmem:[%s2159 + $0x8] sm:$0xff]
    %v2162 = vld [vmem:[%s2159 + $0x10] sm:$0xff]
    %v2163 = vld [vmem:[%s2159 + $0x18] sm:$0xff]
    %v2164 = vpack.c.bf16 %v2154, %v2154
    %v2165 = vld [vmem:[#allocation4] sm:$0xff]
    %v2166 = vld [vmem:[#allocation4 + $0x8] sm:$0xff]
    %v2167 = vld [vmem:[#allocation4 + $0x10] sm:$0xff]
    %v2168 = vld [vmem:[#allocation4 + $0x18] sm:$0xff]
    %v2169 = vld [vmem:[#allocation4 + $0x20] sm:$0xff]
    %v2170 = vld [vmem:[#allocation4 + $0x28] sm:$0xff]
    %v2171 = vld [vmem:[#allocation4 + $0x30] sm:$0xff]
    %v2172 = vld [vmem:[#allocation4 + $0x38] sm:$0xff]
    %v2173 = vld [vmem:[#allocation4 + $0x40] sm:$0xff]
    %v2174 = vld [vmem:[#allocation4 + $0x48] sm:$0xff]
    %v2175 = vld [vmem:[#allocation4 + $0x50] sm:$0xff]
    %v2176 = vld [vmem:[#allocation4 + $0x58] sm:$0xff]
    %v2177 = vld [vmem:[#allocation4 + $0x60] sm:$0xff]
    %v2178 = vld [vmem:[#allocation4 + $0x68] sm:$0xff]
    %v2179 = vld [vmem:[#allocation4 + $0x70] sm:$0xff]
    %v2180 = vld [vmem:[#allocation4 + $0x78] sm:$0xff]
    %v2181 = vld [vmem:[#allocation4 + $0x80] sm:$0xff]
    %v2182 = vld [vmem:[#allocation4 + $0x88] sm:$0xff]
    %v2183 = vld [vmem:[#allocation4 + $0x90] sm:$0xff]
    %v2184 = vld [vmem:[#allocation4 + $0x98] sm:$0xff]
    %v2185 = vld [vmem:[#allocation4 + $0xa0] sm:$0xff]
    %v2186 = vld [vmem:[#allocation4 + $0xa8] sm:$0xff]
    %v2187 = vld [vmem:[#allocation4 + $0xb0] sm:$0xff]
    %v2188 = vld [vmem:[#allocation4 + $0xb8] sm:$0xff]
    %v2189 = vld [vmem:[#allocation4 + $0xc0] sm:$0xff]
    %v2190 = vld [vmem:[#allocation4 + $0xc8] sm:$0xff]
    %v2191 = vld [vmem:[#allocation4 + $0xd0] sm:$0xff]
    %v2192 = vld [vmem:[#allocation4 + $0xd8] sm:$0xff]
    %v2193 = vld [vmem:[#allocation4 + $0xe0] sm:$0xff]
    %v2194 = vld [vmem:[#allocation4 + $0xe8] sm:$0xff]
    %v2195 = vld [vmem:[#allocation4 + $0xf0] sm:$0xff]
    %v2196 = vld [vmem:[#allocation4 + $0xf8] sm:$0xff]
    %v2229 = vunpack.c.l.b16 %v2165
    %v2230 = vunpack.c.h.b16 %v2165
    %v2231 = vunpack.c.l.b16 %v2166
    %v2232 = vunpack.c.h.b16 %v2166
    %v2233 = vunpack.c.l.b16 %v2167
    %v2234 = vunpack.c.h.b16 %v2167
    %v2235 = vunpack.c.l.b16 %v2168
    %v2236 = vunpack.c.h.b16 %v2168
    %v2237 = vunpack.c.l.b16 %v2169
    %v2238 = vunpack.c.h.b16 %v2169
    %v2239 = vunpack.c.l.b16 %v2170
    %v2240 = vunpack.c.h.b16 %v2170
    %v2241 = vunpack.c.l.b16 %v2171
    %v2242 = vunpack.c.h.b16 %v2171
    %v2243 = vunpack.c.l.b16 %v2172
    %v2244 = vunpack.c.h.b16 %v2172
    %v2245 = vunpack.c.l.b16 %v2173
    %v2246 = vunpack.c.h.b16 %v2173
    %v2247 = vunpack.c.l.b16 %v2174
    %v2248 = vunpack.c.h.b16 %v2174
    %v2249 = vunpack.c.l.b16 %v2175
    %v2250 = vunpack.c.h.b16 %v2175
    %v2251 = vunpack.c.l.b16 %v2176
    %v2252 = vunpack.c.h.b16 %v2176
    %v2253 = vunpack.c.l.b16 %v2177
    %v2254 = vunpack.c.h.b16 %v2177
    %v2255 = vunpack.c.l.b16 %v2178
    %v2256 = vunpack.c.h.b16 %v2178
    %v2257 = vunpack.c.l.b16 %v2179
    %v2258 = vunpack.c.h.b16 %v2179
    %v2259 = vunpack.c.l.b16 %v2180
    %v2260 = vunpack.c.h.b16 %v2180
    %v2261 = vunpack.c.l.b16 %v2181
    %v2262 = vunpack.c.h.b16 %v2181
    %v2263 = vunpack.c.l.b16 %v2182
    %v2264 = vunpack.c.h.b16 %v2182
    %v2265 = vunpack.c.l.b16 %v2183
    %v2266 = vunpack.c.h.b16 %v2183
    %v2267 = vunpack.c.l.b16 %v2184
    %v2268 = vunpack.c.h.b16 %v2184
    %v2269 = vunpack.c.l.b16 %v2185
    %v2270 = vunpack.c.h.b16 %v2185
    %v2271 = vunpack.c.l.b16 %v2186
    %v2272 = vunpack.c.h.b16 %v2186
    %v2273 = vunpack.c.l.b16 %v2187
    %v2274 = vunpack.c.h.b16 %v2187
    %v2275 = vunpack.c.l.b16 %v2188
    %v2276 = vunpack.c.h.b16 %v2188
    %v2277 = vunpack.c.l.b16 %v2189
    %v2278 = vunpack.c.h.b16 %v2189
    %v2279 = vunpack.c.l.b16 %v2190
    %v2280 = vunpack.c.h.b16 %v2190
    %v2281 = vunpack.c.l.b16 %v2191
    %v2282 = vunpack.c.h.b16 %v2191
    %v2283 = vunpack.c.l.b16 %v2192
    %v2284 = vunpack.c.h.b16 %v2192
    %v2285 = vunpack.c.l.b16 %v2193
    %v2286 = vunpack.c.h.b16 %v2193
    %v2287 = vunpack.c.l.b16 %v2194
    %v2288 = vunpack.c.h.b16 %v2194
    %v2289 = vunpack.c.l.b16 %v2195
    %v2290 = vunpack.c.h.b16 %v2195
    %v2291 = vunpack.c.l.b16 %v2196
    %v2292 = vunpack.c.h.b16 %v2196
    %v2293 = vpack.c.b16 %v2233, %v2229
    %v2294 = vpack.c.b16 %v2234, %v2230
    %v2295 = vpack.c.b16 %v2235, %v2231
    %v2296 = vpack.c.b16 %v2236, %v2232
    %v2297 = vpack.c.b16 %v2241, %v2237
    %v2298 = vpack.c.b16 %v2242, %v2238
    %v2299 = vpack.c.b16 %v2243, %v2239
    %v2300 = vpack.c.b16 %v2244, %v2240
    %v2301 = vpack.c.b16 %v2249, %v2245
    %v2302 = vpack.c.b16 %v2250, %v2246
    %v2303 = vpack.c.b16 %v2251, %v2247
    %v2304 = vpack.c.b16 %v2252, %v2248
    %v2305 = vpack.c.b16 %v2257, %v2253
    %v2306 = vpack.c.b16 %v2258, %v2254
    %v2307 = vpack.c.b16 %v2259, %v2255
    %v2308 = vpack.c.b16 %v2260, %v2256
    %v2309 = vpack.c.b16 %v2265, %v2261
    %v2310 = vpack.c.b16 %v2266, %v2262
    %v2311 = vpack.c.b16 %v2267, %v2263
    %v2312 = vpack.c.b16 %v2268, %v2264
    %v2313 = vpack.c.b16 %v2273, %v2269
    %v2314 = vpack.c.b16 %v2274, %v2270
    %v2315 = vpack.c.b16 %v2275, %v2271
    %v2316 = vpack.c.b16 %v2276, %v2272
    %v2317 = vpack.c.b16 %v2281, %v2277
    %v2318 = vpack.c.b16 %v2282, %v2278
    %v2319 = vpack.c.b16 %v2283, %v2279
    %v2320 = vpack.c.b16 %v2284, %v2280
    %v2321 = vpack.c.b16 %v2289, %v2285
    %v2322 = vpack.c.b16 %v2290, %v2286
    %v2323 = vpack.c.b16 %v2291, %v2287
    %v2324 = vpack.c.b16 %v2292, %v2288
    %2357 = vmatprep.subr.bf16.mxu0 %v2294
    %2358 = vmatpush1.bf16.msra.mxu0 %v2293
    %2359 = vmatprep.subr.bf16.mxu0 %v2298
    %2360 = vmatpush1.bf16.msra.mxu0 %v2297
    %2361 = vmatprep.subr.bf16.mxu0 %v2302
    %2362 = vmatpush1.bf16.msra.mxu0 %v2301
    %2363 = vmatprep.subr.bf16.mxu0 %v2306
    %2364 = vmatpush1.bf16.msra.mxu0 %v2305
    %2365 = vmatprep.subr.bf16.mxu0 %v2310
    %2366 = vmatpush1.bf16.msra.mxu0 %v2309
    %2367 = vmatprep.subr.bf16.mxu0 %v2314
    %2368 = vmatpush1.bf16.msra.mxu0 %v2313
    %2369 = vmatprep.subr.bf16.mxu0 %v2318
    %2370 = vmatpush1.bf16.msra.mxu0 %v2317
    %2371 = vmatprep.subr.bf16.mxu0 %v2322
    %2372 = vmatpush1.bf16.msra.mxu0 %v2321
    %2373 = vmatprep.subr.bf16.mxu0 0
    %2374 = vmatpush1.bf16.msra.mxu0 0
    %2375 = vmatprep.subr.bf16.mxu0 0
    %2376 = vmatpush1.bf16.msra.mxu0 0
    %2377 = vmatprep.subr.bf16.mxu0 0
    %2378 = vmatpush1.bf16.msra.mxu0 0
    %2379 = vmatprep.subr.bf16.mxu0 0
    %2380 = vmatpush1.bf16.msra.mxu0 0
    %2381 = vmatprep.subr.bf16.mxu0 0
    %2382 = vmatpush1.bf16.msra.mxu0 0
    %2383 = vmatprep.subr.bf16.mxu0 0
    %2384 = vmatpush1.bf16.msra.mxu0 0
    %2385 = vmatprep.subr.bf16.mxu0 0
    %2386 = vmatpush1.bf16.msra.mxu0 0
    %2387 = vmatprep.subr.bf16.mxu0 0
    %2388 = vmatpush1.bf16.msra.mxu0 0
    %2389 = vmatprep.mubr.bf16.mxu0 0
    %2390 = vmatmul.mubr.bf16.gmra.mrb[0].mxu0 %v2164
    %v2391 = vpop.f32.mrb[0].mxu0
    %v2392 = vadd.f32 0.0, %v2391
    %v2393 = vpop.f32.mrb[0].mxu0
    %v2394 = vadd.f32 0.0, %v2393
    %v2395 = vpop.f32.mrb[0].mxu0
    %v2396 = vpop.f32.mrb[0].mxu0
    %2397 = vdwg.mxu0
    %2398 = vmatprep.subr.bf16.mxu0 %v2296
    %2399 = vmatpush1.bf16.msra.mxu0 %v2295
    %2400 = vmatprep.subr.bf16.mxu0 %v2300
    %2401 = vmatpush1.bf16.msra.mxu0 %v2299
    %2402 = vmatprep.subr.bf16.mxu0 %v2304
    %2403 = vmatpush1.bf16.msra.mxu0 %v2303
    %2404 = vmatprep.subr.bf16.mxu0 %v2308
    %2405 = vmatpush1.bf16.msra.mxu0 %v2307
    %2406 = vmatprep.subr.bf16.mxu0 %v2312
    %2407 = vmatpush1.bf16.msra.mxu0 %v2311
    %2408 = vmatprep.subr.bf16.mxu0 %v2316
    %2409 = vmatpush1.bf16.msra.mxu0 %v2315
    %2410 = vmatprep.subr.bf16.mxu0 %v2320
    %2411 = vmatpush1.bf16.msra.mxu0 %v2319
    %2412 = vmatprep.subr.bf16.mxu0 %v2324
    %2413 = vmatpush1.bf16.msra.mxu0 %v2323
    %2414 = vmatprep.subr.bf16.mxu0 0
    %2415 = vmatpush1.bf16.msra.mxu0 0
    %2416 = vmatprep.subr.bf16.mxu0 0
    %2417 = vmatpush1.bf16.msra.mxu0 0
    %2418 = vmatprep.subr.bf16.mxu0 0
    %2419 = vmatpush1.bf16.msra.mxu0 0
    %2420 = vmatprep.subr.bf16.mxu0 0
    %2421 = vmatpush1.bf16.msra.mxu0 0
    %2422 = vmatprep.subr.bf16.mxu0 0
    %2423 = vmatpush1.bf16.msra.mxu0 0
    %2424 = vmatprep.subr.bf16.mxu0 0
    %2425 = vmatpush1.bf16.msra.mxu0 0
    %2426 = vmatprep.subr.bf16.mxu0 0
    %2427 = vmatpush1.bf16.msra.mxu0 0
    %2428 = vmatprep.subr.bf16.mxu0 0
    %2429 = vmatpush1.bf16.msra.mxu0 0
    %2430 = vmatprep.mubr.bf16.mxu0 0
    %2431 = vmatmul.mubr.bf16.gmra.mrb[0].mxu0 %v2164
    %v2432 = vpop.f32.mrb[0].mxu0
    %v2433 = vadd.f32 0.0, %v2432
    %v2434 = vpop.f32.mrb[0].mxu0
    %v2435 = vadd.f32 0.0, %v2434
    %v2436 = vpop.f32.mrb[0].mxu0
    %v2437 = vpop.f32.mrb[0].mxu0
    %2438 = vdwg.mxu0
    %v2439 = vadd.f32 %v2160, %v2392
    %v2440 = vadd.f32 %v2161, %v2394
    %v2441 = vadd.f32 %v2162, %v2433
    %v2442 = vadd.f32 %v2163, %v2435
    %v2443 = vmul.f32 %v2439, 0.5
    %v2444 = vtanh.pop %v2443
    %v2445 = vmul.f32 %v2444, 0.5
    %v2446 = vadd.f32 %v2445, 0.5
    %v2447 = vmul.f32 %v2440, 0.5
    %v2448 = vtanh.pop %v2447
    %v2449 = vmul.f32 %v2448, 0.5
    %v2450 = vadd.f32 %v2449, 0.5
    %v2451 = vtanh.pop %v2441
    %v2452 = vmul.f32 %v2442, 0.5
    %v2453 = vtanh.pop %v2452
    %v2454 = vmul.f32 %v2453, 0.5
    %v2455 = vadd.f32 %v2454, 0.5
    %v2456 = vmul.f32 %v2450, %v2152
    %v2457 = vmul.f32 %v2446, %v2451
    %v2458 = vadd.f32 %v2456, %v2457
    %v2459 = vtanh.pop %v2458
    %v2460 = vmul.f32 %v2455, %v2459
    %s2461 = scalar_lea.vmem [#allocation2], 48
    %2462 = vst [vmem:[%s2461] sm:$0xff] %v2460
    %s2463 = smul.u32 7, 4
    %s2464 = smul.addr %s2463, 8
    %s2465 = scalar_lea.vmem [#allocation3], %s2464
    %v2466 = vld [vmem:[%s2465] sm:$0xff]
    %v2467 = vld [vmem:[%s2465 + $0x8] sm:$0xff]
    %v2468 = vld [vmem:[%s2465 + $0x10] sm:$0xff]
    %v2469 = vld [vmem:[%s2465 + $0x18] sm:$0xff]
    %v2470 = vpack.c.bf16 %v2460, %v2460
    %v2471 = vld [vmem:[#allocation4] sm:$0xff]
    %v2472 = vld [vmem:[#allocation4 + $0x8] sm:$0xff]
    %v2473 = vld [vmem:[#allocation4 + $0x10] sm:$0xff]
    %v2474 = vld [vmem:[#allocation4 + $0x18] sm:$0xff]
    %v2475 = vld [vmem:[#allocation4 + $0x20] sm:$0xff]
    %v2476 = vld [vmem:[#allocation4 + $0x28] sm:$0xff]
    %v2477 = vld [vmem:[#allocation4 + $0x30] sm:$0xff]
    %v2478 = vld [vmem:[#allocation4 + $0x38] sm:$0xff]
    %v2479 = vld [vmem:[#allocation4 + $0x40] sm:$0xff]
    %v2480 = vld [vmem:[#allocation4 + $0x48] sm:$0xff]
    %v2481 = vld [vmem:[#allocation4 + $0x50] sm:$0xff]
    %v2482 = vld [vmem:[#allocation4 + $0x58] sm:$0xff]
    %v2483 = vld [vmem:[#allocation4 + $0x60] sm:$0xff]
    %v2484 = vld [vmem:[#allocation4 + $0x68] sm:$0xff]
    %v2485 = vld [vmem:[#allocation4 + $0x70] sm:$0xff]
    %v2486 = vld [vmem:[#allocation4 + $0x78] sm:$0xff]
    %v2487 = vld [vmem:[#allocation4 + $0x80] sm:$0xff]
    %v2488 = vld [vmem:[#allocation4 + $0x88] sm:$0xff]
    %v2489 = vld [vmem:[#allocation4 + $0x90] sm:$0xff]
    %v2490 = vld [vmem:[#allocation4 + $0x98] sm:$0xff]
    %v2491 = vld [vmem:[#allocation4 + $0xa0] sm:$0xff]
    %v2492 = vld [vmem:[#allocation4 + $0xa8] sm:$0xff]
    %v2493 = vld [vmem:[#allocation4 + $0xb0] sm:$0xff]
    %v2494 = vld [vmem:[#allocation4 + $0xb8] sm:$0xff]
    %v2495 = vld [vmem:[#allocation4 + $0xc0] sm:$0xff]
    %v2496 = vld [vmem:[#allocation4 + $0xc8] sm:$0xff]
    %v2497 = vld [vmem:[#allocation4 + $0xd0] sm:$0xff]
    %v2498 = vld [vmem:[#allocation4 + $0xd8] sm:$0xff]
    %v2499 = vld [vmem:[#allocation4 + $0xe0] sm:$0xff]
    %v2500 = vld [vmem:[#allocation4 + $0xe8] sm:$0xff]
    %v2501 = vld [vmem:[#allocation4 + $0xf0] sm:$0xff]
    %v2502 = vld [vmem:[#allocation4 + $0xf8] sm:$0xff]
    %v2535 = vunpack.c.l.b16 %v2471
    %v2536 = vunpack.c.h.b16 %v2471
    %v2537 = vunpack.c.l.b16 %v2472
    %v2538 = vunpack.c.h.b16 %v2472
    %v2539 = vunpack.c.l.b16 %v2473
    %v2540 = vunpack.c.h.b16 %v2473
    %v2541 = vunpack.c.l.b16 %v2474
    %v2542 = vunpack.c.h.b16 %v2474
    %v2543 = vunpack.c.l.b16 %v2475
    %v2544 = vunpack.c.h.b16 %v2475
    %v2545 = vunpack.c.l.b16 %v2476
    %v2546 = vunpack.c.h.b16 %v2476
    %v2547 = vunpack.c.l.b16 %v2477
    %v2548 = vunpack.c.h.b16 %v2477
    %v2549 = vunpack.c.l.b16 %v2478
    %v2550 = vunpack.c.h.b16 %v2478
    %v2551 = vunpack.c.l.b16 %v2479
    %v2552 = vunpack.c.h.b16 %v2479
    %v2553 = vunpack.c.l.b16 %v2480
    %v2554 = vunpack.c.h.b16 %v2480
    %v2555 = vunpack.c.l.b16 %v2481
    %v2556 = vunpack.c.h.b16 %v2481
    %v2557 = vunpack.c.l.b16 %v2482
    %v2558 = vunpack.c.h.b16 %v2482
    %v2559 = vunpack.c.l.b16 %v2483
    %v2560 = vunpack.c.h.b16 %v2483
    %v2561 = vunpack.c.l.b16 %v2484
    %v2562 = vunpack.c.h.b16 %v2484
    %v2563 = vunpack.c.l.b16 %v2485
    %v2564 = vunpack.c.h.b16 %v2485
    %v2565 = vunpack.c.l.b16 %v2486
    %v2566 = vunpack.c.h.b16 %v2486
    %v2567 = vunpack.c.l.b16 %v2487
    %v2568 = vunpack.c.h.b16 %v2487
    %v2569 = vunpack.c.l.b16 %v2488
    %v2570 = vunpack.c.h.b16 %v2488
    %v2571 = vunpack.c.l.b16 %v2489
    %v2572 = vunpack.c.h.b16 %v2489
    %v2573 = vunpack.c.l.b16 %v2490
    %v2574 = vunpack.c.h.b16 %v2490
    %v2575 = vunpack.c.l.b16 %v2491
    %v2576 = vunpack.c.h.b16 %v2491
    %v2577 = vunpack.c.l.b16 %v2492
    %v2578 = vunpack.c.h.b16 %v2492
    %v2579 = vunpack.c.l.b16 %v2493
    %v2580 = vunpack.c.h.b16 %v2493
    %v2581 = vunpack.c.l.b16 %v2494
    %v2582 = vunpack.c.h.b16 %v2494
    %v2583 = vunpack.c.l.b16 %v2495
    %v2584 = vunpack.c.h.b16 %v2495
    %v2585 = vunpack.c.l.b16 %v2496
    %v2586 = vunpack.c.h.b16 %v2496
    %v2587 = vunpack.c.l.b16 %v2497
    %v2588 = vunpack.c.h.b16 %v2497
    %v2589 = vunpack.c.l.b16 %v2498
    %v2590 = vunpack.c.h.b16 %v2498
    %v2591 = vunpack.c.l.b16 %v2499
    %v2592 = vunpack.c.h.b16 %v2499
    %v2593 = vunpack.c.l.b16 %v2500
    %v2594 = vunpack.c.h.b16 %v2500
    %v2595 = vunpack.c.l.b16 %v2501
    %v2596 = vunpack.c.h.b16 %v2501
    %v2597 = vunpack.c.l.b16 %v2502
    %v2598 = vunpack.c.h.b16 %v2502
    %v2599 = vpack.c.b16 %v2539, %v2535
    %v2600 = vpack.c.b16 %v2540, %v2536
    %v2601 = vpack.c.b16 %v2541, %v2537
    %v2602 = vpack.c.b16 %v2542, %v2538
    %v2603 = vpack.c.b16 %v2547, %v2543
    %v2604 = vpack.c.b16 %v2548, %v2544
    %v2605 = vpack.c.b16 %v2549, %v2545
    %v2606 = vpack.c.b16 %v2550, %v2546
    %v2607 = vpack.c.b16 %v2555, %v2551
    %v2608 = vpack.c.b16 %v2556, %v2552
    %v2609 = vpack.c.b16 %v2557, %v2553
    %v2610 = vpack.c.b16 %v2558, %v2554
    %v2611 = vpack.c.b16 %v2563, %v2559
    %v2612 = vpack.c.b16 %v2564, %v2560
    %v2613 = vpack.c.b16 %v2565, %v2561
    %v2614 = vpack.c.b16 %v2566, %v2562
    %v2615 = vpack.c.b16 %v2571, %v2567
    %v2616 = vpack.c.b16 %v2572, %v2568
    %v2617 = vpack.c.b16 %v2573, %v2569
    %v2618 = vpack.c.b16 %v2574, %v2570
    %v2619 = vpack.c.b16 %v2579, %v2575
    %v2620 = vpack.c.b16 %v2580, %v2576
    %v2621 = vpack.c.b16 %v2581, %v2577
    %v2622 = vpack.c.b16 %v2582, %v2578
    %v2623 = vpack.c.b16 %v2587, %v2583
    %v2624 = vpack.c.b16 %v2588, %v2584
    %v2625 = vpack.c.b16 %v2589, %v2585
    %v2626 = vpack.c.b16 %v2590, %v2586
    %v2627 = vpack.c.b16 %v2595, %v2591
    %v2628 = vpack.c.b16 %v2596, %v2592
    %v2629 = vpack.c.b16 %v2597, %v2593
    %v2630 = vpack.c.b16 %v2598, %v2594
    %2663 = vmatprep.subr.bf16.mxu0 %v2600
    %2664 = vmatpush1.bf16.msra.mxu0 %v2599
    %2665 = vmatprep.subr.bf16.mxu0 %v2604
    %2666 = vmatpush1.bf16.msra.mxu0 %v2603
    %2667 = vmatprep.subr.bf16.mxu0 %v2608
    %2668 = vmatpush1.bf16.msra.mxu0 %v2607
    %2669 = vmatprep.subr.bf16.mxu0 %v2612
    %2670 = vmatpush1.bf16.msra.mxu0 %v2611
    %2671 = vmatprep.subr.bf16.mxu0 %v2616
    %2672 = vmatpush1.bf16.msra.mxu0 %v2615
    %2673 = vmatprep.subr.bf16.mxu0 %v2620
    %2674 = vmatpush1.bf16.msra.mxu0 %v2619
    %2675 = vmatprep.subr.bf16.mxu0 %v2624
    %2676 = vmatpush1.bf16.msra.mxu0 %v2623
    %2677 = vmatprep.subr.bf16.mxu0 %v2628
    %2678 = vmatpush1.bf16.msra.mxu0 %v2627
    %2679 = vmatprep.subr.bf16.mxu0 0
    %2680 = vmatpush1.bf16.msra.mxu0 0
    %2681 = vmatprep.subr.bf16.mxu0 0
    %2682 = vmatpush1.bf16.msra.mxu0 0
    %2683 = vmatprep.subr.bf16.mxu0 0
    %2684 = vmatpush1.bf16.msra.mxu0 0
    %2685 = vmatprep.subr.bf16.mxu0 0
    %2686 = vmatpush1.bf16.msra.mxu0 0
    %2687 = vmatprep.subr.bf16.mxu0 0
    %2688 = vmatpush1.bf16.msra.mxu0 0
    %2689 = vmatprep.subr.bf16.mxu0 0
    %2690 = vmatpush1.bf16.msra.mxu0 0
    %2691 = vmatprep.subr.bf16.mxu0 0
    %2692 = vmatpush1.bf16.msra.mxu0 0
    %2693 = vmatprep.subr.bf16.mxu0 0
    %2694 = vmatpush1.bf16.msra.mxu0 0
    %2695 = vmatprep.mubr.bf16.mxu0 0
    %2696 = vmatmul.mubr.bf16.gmra.mrb[0].mxu0 %v2470
    %v2697 = vpop.f32.mrb[0].mxu0
    %v2698 = vadd.f32 0.0, %v2697
    %v2699 = vpop.f32.mrb[0].mxu0
    %v2700 = vadd.f32 0.0, %v2699
    %v2701 = vpop.f32.mrb[0].mxu0
    %v2702 = vpop.f32.mrb[0].mxu0
    %2703 = vdwg.mxu0
    %2704 = vmatprep.subr.bf16.mxu0 %v2602
    %2705 = vmatpush1.bf16.msra.mxu0 %v2601
    %2706 = vmatprep.subr.bf16.mxu0 %v2606
    %2707 = vmatpush1.bf16.msra.mxu0 %v2605
    %2708 = vmatprep.subr.bf16.mxu0 %v2610
    %2709 = vmatpush1.bf16.msra.mxu0 %v2609
    %2710 = vmatprep.subr.bf16.mxu0 %v2614
    %2711 = vmatpush1.bf16.msra.mxu0 %v2613
    %2712 = vmatprep.subr.bf16.mxu0 %v2618
    %2713 = vmatpush1.bf16.msra.mxu0 %v2617
    %2714 = vmatprep.subr.bf16.mxu0 %v2622
    %2715 = vmatpush1.bf16.msra.mxu0 %v2621
    %2716 = vmatprep.subr.bf16.mxu0 %v2626
    %2717 = vmatpush1.bf16.msra.mxu0 %v2625
    %2718 = vmatprep.subr.bf16.mxu0 %v2630
    %2719 = vmatpush1.bf16.msra.mxu0 %v2629
    %2720 = vmatprep.subr.bf16.mxu0 0
    %2721 = vmatpush1.bf16.msra.mxu0 0
    %2722 = vmatprep.subr.bf16.mxu0 0
    %2723 = vmatpush1.bf16.msra.mxu0 0
    %2724 = vmatprep.subr.bf16.mxu0 0
    %2725 = vmatpush1.bf16.msra.mxu0 0
    %2726 = vmatprep.subr.bf16.mxu0 0
    %2727 = vmatpush1.bf16.msra.mxu0 0
    %2728 = vmatprep.subr.bf16.mxu0 0
    %2729 = vmatpush1.bf16.msra.mxu0 0
    %2730 = vmatprep.subr.bf16.mxu0 0
    %2731 = vmatpush1.bf16.msra.mxu0 0
    %2732 = vmatprep.subr.bf16.mxu0 0
    %2733 = vmatpush1.bf16.msra.mxu0 0
    %2734 = vmatprep.subr.bf16.mxu0 0
    %2735 = vmatpush1.bf16.msra.mxu0 0
    %2736 = vmatprep.mubr.bf16.mxu0 0
    %2737 = vmatmul.mubr.bf16.gmra.mrb[0].mxu0 %v2470
    %v2738 = vpop.f32.mrb[0].mxu0
    %v2739 = vadd.f32 0.0, %v2738
    %v2740 = vpop.f32.mrb[0].mxu0
    %v2741 = vadd.f32 0.0, %v2740
    %v2742 = vpop.f32.mrb[0].mxu0
    %v2743 = vpop.f32.mrb[0].mxu0
    %2744 = vdwg.mxu0
    %v2745 = vadd.f32 %v2466, %v2698
    %v2746 = vadd.f32 %v2467, %v2700
    %v2747 = vadd.f32 %v2468, %v2739
    %v2748 = vadd.f32 %v2469, %v2741
    %v2749 = vmul.f32 %v2745, 0.5
    %v2750 = vtanh.pop %v2749
    %v2751 = vmul.f32 %v2750, 0.5
    %v2752 = vadd.f32 %v2751, 0.5
    %v2753 = vmul.f32 %v2746, 0.5
    %v2754 = vtanh.pop %v2753
    %v2755 = vmul.f32 %v2754, 0.5
    %v2756 = vadd.f32 %v2755, 0.5
    %v2757 = vtanh.pop %v2747
    %v2758 = vmul.f32 %v2748, 0.5
    %v2759 = vtanh.pop %v2758
    %v2760 = vmul.f32 %v2759, 0.5
    %v2761 = vadd.f32 %v2760, 0.5
    %v2762 = vmul.f32 %v2756, %v2458
    %v2763 = vmul.f32 %v2752, %v2757
    %v2764 = vadd.f32 %v2762, %v2763
    %v2765 = vtanh.pop %v2764
    %v2766 = vmul.f32 %v2761, %v2765
    %s2767 = scalar_lea.vmem [#allocation2], 56
    %2768 = vst [vmem:[%s2767] sm:$0xff] %v2766
    %v2769 = vld [vmem:[#allocation2] sm:$0xff]
    %v2770 = vld [vmem:[#allocation2 + $0x8] sm:$0xff]
    %v2771 = vld [vmem:[#allocation2 + $0x10] sm:$0xff]
    %v2772 = vld [vmem:[#allocation2 + $0x18] sm:$0xff]
    %v2773 = vld [vmem:[#allocation2 + $0x20] sm:$0xff]
    %v2774 = vld [vmem:[#allocation2 + $0x28] sm:$0xff]
    %v2775 = vld [vmem:[#allocation2 + $0x30] sm:$0xff]
    %v2776 = vld [vmem:[#allocation2 + $0x38] sm:$0xff]
    %v2777 = vpack.c.bf16 %v2770, %v2769
    %v2778 = vpack.c.bf16 %v2772, %v2771
    %v2779 = vpack.c.bf16 %v2774, %v2773
    %v2780 = vpack.c.bf16 %v2776, %v2775
    %v2781 = vld [vmem:[#allocation6] sm:$0xff]
    %v2782 = vld [vmem:[#allocation6 + $0x8] sm:$0xff]
    %v2783 = vld [vmem:[#allocation6 + $0x10] sm:$0xff]
    %v2784 = vld [vmem:[#allocation6 + $0x18] sm:$0xff]
    %v2785 = vld [vmem:[#allocation6 + $0x20] sm:$0xff]
    %v2786 = vld [vmem:[#allocation6 + $0x28] sm:$0xff]
    %v2787 = vld [vmem:[#allocation6 + $0x30] sm:$0xff]
    %v2788 = vld [vmem:[#allocation6 + $0x38] sm:$0xff]
    %v2789 = vld [vmem:[#allocation6 + $0x40] sm:$0xff]
    %v2790 = vld [vmem:[#allocation6 + $0x48] sm:$0xff]
    %v2791 = vld [vmem:[#allocation6 + $0x50] sm:$0xff]
    %v2792 = vld [vmem:[#allocation6 + $0x58] sm:$0xff]
    %v2793 = vld [vmem:[#allocation6 + $0x60] sm:$0xff]
    %v2794 = vld [vmem:[#allocation6 + $0x68] sm:$0xff]
    %v2795 = vld [vmem:[#allocation6 + $0x70] sm:$0xff]
    %v2796 = vld [vmem:[#allocation6 + $0x78] sm:$0xff]
    %v2797 = vld [vmem:[#allocation6 + $0x80] sm:$0xff]
    %v2798 = vld [vmem:[#allocation6 + $0x88] sm:$0xff]
    %v2799 = vld [vmem:[#allocation6 + $0x90] sm:$0xff]
    %v2800 = vld [vmem:[#allocation6 + $0x98] sm:$0xff]
    %v2801 = vld [vmem:[#allocation6 + $0xa0] sm:$0xff]
    %v2802 = vld [vmem:[#allocation6 + $0xa8] sm:$0xff]
    %v2803 = vld [vmem:[#allocation6 + $0xb0] sm:$0xff]
    %v2804 = vld [vmem:[#allocation6 + $0xb8] sm:$0xff]
    %v2805 = vld [vmem:[#allocation6 + $0xc0] sm:$0xff]
    %v2806 = vld [vmem:[#allocation6 + $0xc8] sm:$0xff]
    %v2807 = vld [vmem:[#allocation6 + $0xd0] sm:$0xff]
    %v2808 = vld [vmem:[#allocation6 + $0xd8] sm:$0xff]
    %v2809 = vld [vmem:[#allocation6 + $0xe0] sm:$0xff]
    %v2810 = vld [vmem:[#allocation6 + $0xe8] sm:$0xff]
    %v2811 = vld [vmem:[#allocation6 + $0xf0] sm:$0xff]
    %v2812 = vld [vmem:[#allocation6 + $0xf8] sm:$0xff]
    %v2813 = vld [vmem:[%s6] sm:$0xf]
    %v2815 = vlaneseq
    %v2816 = vshrl.u32 %v2815, 7
    %v2817 = vsub.s32 0, %v2816
    %v2818 = vrot.slane %v2813, %v2817
    %v2819 = vlaneseq
    %v2820 = vshrl.u32 %v2819, 7
    %v2821 = vsub.s32 1, %v2820
    %v2822 = vrot.slane %v2813, %v2821
    %v2823 = vlaneseq
    %v2824 = vshrl.u32 %v2823, 7
    %v2825 = vsub.s32 2, %v2824
    %v2826 = vrot.slane %v2813, %v2825
    %v2827 = vlaneseq
    %v2828 = vshrl.u32 %v2827, 7
    %v2829 = vsub.s32 3, %v2828
    %v2830 = vrot.slane %v2813, %v2829
    %v2867 = vunpack.c.l.b16 %v2781
    %v2868 = vunpack.c.h.b16 %v2781
    %v2869 = vunpack.c.l.b16 %v2782
    %v2870 = vunpack.c.h.b16 %v2782
    %v2871 = vunpack.c.l.b16 %v2783
    %v2872 = vunpack.c.h.b16 %v2783
    %v2873 = vunpack.c.l.b16 %v2784
    %v2874 = vunpack.c.h.b16 %v2784
    %v2875 = vunpack.c.l.b16 %v2785
    %v2876 = vunpack.c.h.b16 %v2785
    %v2877 = vunpack.c.l.b16 %v2786
    %v2878 = vunpack.c.h.b16 %v2786
    %v2879 = vunpack.c.l.b16 %v2787
    %v2880 = vunpack.c.h.b16 %v2787
    %v2881 = vunpack.c.l.b16 %v2788
    %v2882 = vunpack.c.h.b16 %v2788
    %v2883 = vunpack.c.l.b16 %v2789
    %v2884 = vunpack.c.h.b16 %v2789
    %v2885 = vunpack.c.l.b16 %v2790
    %v2886 = vunpack.c.h.b16 %v2790
    %v2887 = vunpack.c.l.b16 %v2791
    %v2888 = vunpack.c.h.b16 %v2791
    %v2889 = vunpack.c.l.b16 %v2792
    %v2890 = vunpack.c.h.b16 %v2792
    %v2891 = vunpack.c.l.b16 %v2793
    %v2892 = vunpack.c.h.b16 %v2793
    %v2893 = vunpack.c.l.b16 %v2794
    %v2894 = vunpack.c.h.b16 %v2794
    %v2895 = vunpack.c.l.b16 %v2795
    %v2896 = vunpack.c.h.b16 %v2795
    %v2897 = vunpack.c.l.b16 %v2796
    %v2898 = vunpack.c.h.b16 %v2796
    %v2899 = vunpack.c.l.b16 %v2797
    %v2900 = vunpack.c.h.b16 %v2797
    %v2901 = vunpack.c.l.b16 %v2798
    %v2902 = vunpack.c.h.b16 %v2798
    %v2903 = vunpack.c.l.b16 %v2799
    %v2904 = vunpack.c.h.b16 %v2799
    %v2905 = vunpack.c.l.b16 %v2800
    %v2906 = vunpack.c.h.b16 %v2800
    %v2907 = vunpack.c.l.b16 %v2801
    %v2908 = vunpack.c.h.b16 %v2801
    %v2909 = vunpack.c.l.b16 %v2802
    %v2910 = vunpack.c.h.b16 %v2802
    %v2911 = vunpack.c.l.b16 %v2803
    %v2912 = vunpack.c.h.b16 %v2803
    %v2913 = vunpack.c.l.b16 %v2804
    %v2914 = vunpack.c.h.b16 %v2804
    %v2915 = vunpack.c.l.b16 %v2805
    %v2916 = vunpack.c.h.b16 %v2805
    %v2917 = vunpack.c.l.b16 %v2806
    %v2918 = vunpack.c.h.b16 %v2806
    %v2919 = vunpack.c.l.b16 %v2807
    %v2920 = vunpack.c.h.b16 %v2807
    %v2921 = vunpack.c.l.b16 %v2808
    %v2922 = vunpack.c.h.b16 %v2808
    %v2923 = vunpack.c.l.b16 %v2809
    %v2924 = vunpack.c.h.b16 %v2809
    %v2925 = vunpack.c.l.b16 %v2810
    %v2926 = vunpack.c.h.b16 %v2810
    %v2927 = vunpack.c.l.b16 %v2811
    %v2928 = vunpack.c.h.b16 %v2811
    %v2929 = vunpack.c.l.b16 %v2812
    %v2930 = vunpack.c.h.b16 %v2812
    %v2931 = vpack.c.b16 %v2871, %v2867
    %v2932 = vpack.c.b16 %v2872, %v2868
    %v2933 = vpack.c.b16 %v2873, %v2869
    %v2934 = vpack.c.b16 %v2874, %v2870
    %v2935 = vpack.c.b16 %v2879, %v2875
    %v2936 = vpack.c.b16 %v2880, %v2876
    %v2937 = vpack.c.b16 %v2881, %v2877
    %v2938 = vpack.c.b16 %v2882, %v2878
    %v2939 = vpack.c.b16 %v2887, %v2883
    %v2940 = vpack.c.b16 %v2888, %v2884
    %v2941 = vpack.c.b16 %v2889, %v2885
    %v2942 = vpack.c.b16 %v2890, %v2886
    %v2943 = vpack.c.b16 %v2895, %v2891
    %v2944 = vpack.c.b16 %v2896, %v2892
    %v2945 = vpack.c.b16 %v2897, %v2893
    %v2946 = vpack.c.b16 %v2898, %v2894
    %v2947 = vpack.c.b16 %v2903, %v2899
    %v2948 = vpack.c.b16 %v2904, %v2900
    %v2949 = vpack.c.b16 %v2905, %v2901
    %v2950 = vpack.c.b16 %v2906, %v2902
    %v2951 = vpack.c.b16 %v2911, %v2907
    %v2952 = vpack.c.b16 %v2912, %v2908
    %v2953 = vpack.c.b16 %v2913, %v2909
    %v2954 = vpack.c.b16 %v2914, %v2910
    %v2955 = vpack.c.b16 %v2919, %v2915
    %v2956 = vpack.c.b16 %v2920, %v2916
    %v2957 = vpack.c.b16 %v2921, %v2917
    %v2958 = vpack.c.b16 %v2922, %v2918
    %v2959 = vpack.c.b16 %v2927, %v2923
    %v2960 = vpack.c.b16 %v2928, %v2924
    %v2961 = vpack.c.b16 %v2929, %v2925
    %v2962 = vpack.c.b16 %v2930, %v2926
    %2995 = vmatprep.subr.bf16.mxu0 %v2932
    %2996 = vmatpush1.bf16.msra.mxu0 %v2931
    %2997 = vmatprep.subr.bf16.mxu0 %v2936
    %2998 = vmatpush1.bf16.msra.mxu0 %v2935
    %2999 = vmatprep.subr.bf16.mxu0 %v2940
    %3000 = vmatpush1.bf16.msra.mxu0 %v2939
    %3001 = vmatprep.subr.bf16.mxu0 %v2944
    %3002 = vmatpush1.bf16.msra.mxu0 %v2943
    %3003 = vmatprep.subr.bf16.mxu0 %v2948
    %3004 = vmatpush1.bf16.msra.mxu0 %v2947
    %3005 = vmatprep.subr.bf16.mxu0 %v2952
    %3006 = vmatpush1.bf16.msra.mxu0 %v2951
    %3007 = vmatprep.subr.bf16.mxu0 %v2956
    %3008 = vmatpush1.bf16.msra.mxu0 %v2955
    %3009 = vmatprep.subr.bf16.mxu0 %v2960
    %3010 = vmatpush1.bf16.msra.mxu0 %v2959
    %3011 = vmatprep.subr.bf16.mxu0 0
    %3012 = vmatpush1.bf16.msra.mxu0 0
    %3013 = vmatprep.subr.bf16.mxu0 0
    %3014 = vmatpush1.bf16.msra.mxu0 0
    %3015 = vmatprep.subr.bf16.mxu0 0
    %3016 = vmatpush1.bf16.msra.mxu0 0
    %3017 = vmatprep.subr.bf16.mxu0 0
    %3018 = vmatpush1.bf16.msra.mxu0 0
    %3019 = vmatprep.subr.bf16.mxu0 0
    %3020 = vmatpush1.bf16.msra.mxu0 0
    %3021 = vmatprep.subr.bf16.mxu0 0
    %3022 = vmatpush1.bf16.msra.mxu0 0
    %3023 = vmatprep.subr.bf16.mxu0 0
    %3024 = vmatpush1.bf16.msra.mxu0 0
    %3025 = vmatprep.subr.bf16.mxu0 0
    %3026 = vmatpush1.bf16.msra.mxu0 0
    %3027 = vmatprep.mubr.bf16.mxu0 0
    %3028 = vmatmul.mubr.bf16.gmra.mrb[0].mxu0 %v2777
    %v3029 = vpop.f32.mrb[0].mxu0
    %v3030 = vadd.f32 %v2818, %v3029
    %v3031 = vpop.f32.mrb[0].mxu0
    %v3032 = vadd.f32 %v2822, %v3031
    %v3033 = vpop.f32.mrb[0].mxu0
    %v3034 = vadd.f32 %v2818, %v3033
    %v3035 = vpop.f32.mrb[0].mxu0
    %v3036 = vadd.f32 %v2822, %v3035
    %3037 = vmatprep.mubr.bf16.mxu0 0
    %3038 = vmatmul.mubr.bf16.gmra.mrb[0].mxu0 %v2778
    %v3039 = vpop.f32.mrb[0].mxu0
    %v3040 = vadd.f32 %v2818, %v3039
    %v3041 = vpop.f32.mrb[0].mxu0
    %v3042 = vadd.f32 %v2822, %v3041
    %v3043 = vpop.f32.mrb[0].mxu0
    %v3044 = vadd.f32 %v2818, %v3043
    %v3045 = vpop.f32.mrb[0].mxu0
    %v3046 = vadd.f32 %v2822, %v3045
    %3047 = vmatprep.mubr.bf16.mxu0 0
    %3048 = vmatmul.mubr.bf16.gmra.mrb[0].mxu0 %v2779
    %v3049 = vpop.f32.mrb[0].mxu0
    %v3050 = vadd.f32 %v2818, %v3049
    %v3051 = vpop.f32.mrb[0].mxu0
    %v3052 = vadd.f32 %v2822, %v3051
    %v3053 = vpop.f32.mrb[0].mxu0
    %v3054 = vadd.f32 %v2818, %v3053
    %v3055 = vpop.f32.mrb[0].mxu0
    %v3056 = vadd.f32 %v2822, %v3055
    %3057 = vmatprep.mubr.bf16.mxu0 0
    %3058 = vmatmul.mubr.bf16.gmra.mrb[0].mxu0 %v2780
    %v3059 = vpop.f32.mrb[0].mxu0
    %v3060 = vadd.f32 %v2818, %v3059
    %v3061 = vpop.f32.mrb[0].mxu0
    %v3062 = vadd.f32 %v2822, %v3061
    %v3063 = vpop.f32.mrb[0].mxu0
    %v3064 = vadd.f32 %v2818, %v3063
    %v3065 = vpop.f32.mrb[0].mxu0
    %v3066 = vadd.f32 %v2822, %v3065
    %3067 = vdwg.mxu0
    %3068 = vmatprep.subr.bf16.mxu0 %v2934
    %3069 = vmatpush1.bf16.msra.mxu0 %v2933
    %3070 = vmatprep.subr.bf16.mxu0 %v2938
    %3071 = vmatpush1.bf16.msra.mxu0 %v2937
    %3072 = vmatprep.subr.bf16.mxu0 %v2942
    %3073 = vmatpush1.bf16.msra.mxu0 %v2941
    %3074 = vmatprep.subr.bf16.mxu0 %v2946
    %3075 = vmatpush1.bf16.msra.mxu0 %v2945
    %3076 = vmatprep.subr.bf16.mxu0 %v2950
    %3077 = vmatpush1.bf16.msra.mxu0 %v2949
    %3078 = vmatprep.subr.bf16.mxu0 %v2954
    %3079 = vmatpush1.bf16.msra.mxu0 %v2953
    %3080 = vmatprep.subr.bf16.mxu0 %v2958
    %3081 = vmatpush1.bf16.msra.mxu0 %v2957
    %3082 = vmatprep.subr.bf16.mxu0 %v2962
    %3083 = vmatpush1.bf16.msra.mxu0 %v2961
    %3084 = vmatprep.subr.bf16.mxu0 0
    %3085 = vmatpush1.bf16.msra.mxu0 0
    %3086 = vmatprep.subr.bf16.mxu0 0
    %3087 = vmatpush1.bf16.msra.mxu0 0
    %3088 = vmatprep.subr.bf16.mxu0 0
    %3089 = vmatpush1.bf16.msra.mxu0 0
    %3090 = vmatprep.subr.bf16.mxu0 0
    %3091 = vmatpush1.bf16.msra.mxu0 0
    %3092 = vmatprep.subr.bf16.mxu0 0
    %3093 = vmatpush1.bf16.msra.mxu0 0
    %3094 = vmatprep.subr.bf16.mxu0 0
    %3095 = vmatpush1.bf16.msra.mxu0 0
    %3096 = vmatprep.subr.bf16.mxu0 0
    %3097 = vmatpush1.bf16.msra.mxu0 0
    %3098 = vmatprep.subr.bf16.mxu0 0
    %3099 = vmatpush1.bf16.msra.mxu0 0
    %3100 = vmatprep.mubr.bf16.mxu0 0
    %3101 = vmatmul.mubr.bf16.gmra.mrb[0].mxu0 %v2777
    %v3102 = vpop.f32.mrb[0].mxu0
    %v3103 = vadd.f32 %v2826, %v3102
    %v3104 = vpop.f32.mrb[0].mxu0
    %v3105 = vadd.f32 %v2830, %v3104
    %v3106 = vpop.f32.mrb[0].mxu0
    %v3107 = vadd.f32 %v2826, %v3106
    %v3108 = vpop.f32.mrb[0].mxu0
    %v3109 = vadd.f32 %v2830, %v3108
    %3110 = vmatprep.mubr.bf16.mxu0 0
    %3111 = vmatmul.mubr.bf16.gmra.mrb[0].mxu0 %v2778
    %v3112 = vpop.f32.mrb[0].mxu0
    %v3113 = vadd.f32 %v2826, %v3112
    %v3114 = vpop.f32.mrb[0].mxu0
    %v3115 = vadd.f32 %v2830, %v3114
    %v3116 = vpop.f32.mrb[0].mxu0
    %v3117 = vadd.f32 %v2826, %v3116
    %v3118 = vpop.f32.mrb[0].mxu0
    %v3119 = vadd.f32 %v2830, %v3118
    %3120 = vmatprep.mubr.bf16.mxu0 0
    %3121 = vmatmul.mubr.bf16.gmra.mrb[0].mxu0 %v2779
    %v3122 = vpop.f32.mrb[0].mxu0
    %v3123 = vadd.f32 %v2826, %v3122
    %v3124 = vpop.f32.mrb[0].mxu0
    %v3125 = vadd.f32 %v2830, %v3124
    %v3126 = vpop.f32.mrb[0].mxu0
    %v3127 = vadd.f32 %v2826, %v3126
    %v3128 = vpop.f32.mrb[0].mxu0
    %v3129 = vadd.f32 %v2830, %v3128
    %3130 = vmatprep.mubr.bf16.mxu0 0
    %3131 = vmatmul.mubr.bf16.gmra.mrb[0].mxu0 %v2780
    %v3132 = vpop.f32.mrb[0].mxu0
    %v3133 = vadd.f32 %v2826, %v3132
    %v3134 = vpop.f32.mrb[0].mxu0
    %v3135 = vadd.f32 %v2830, %v3134
    %v3136 = vpop.f32.mrb[0].mxu0
    %v3137 = vadd.f32 %v2826, %v3136
    %v3138 = vpop.f32.mrb[0].mxu0
    %v3139 = vadd.f32 %v2830, %v3138
    %3140 = vdwg.mxu0
    %3141 = vst [vmem:[#allocation3] sm:$0xff] %v3030
    %3142 = vst [vmem:[#allocation3 + $0x8] sm:$0xff] %v3032
    %3143 = vst [vmem:[#allocation3 + $0x10] sm:$0xff] %v3103
    %3144 = vst [vmem:[#allocation3 + $0x18] sm:$0xff] %v3105
    %3145 = vst [vmem:[#allocation3 + $0x20] sm:$0xff] %v3034
    %3146 = vst [vmem:[#allocation3 + $0x28] sm:$0xff] %v3036
    %3147 = vst [vmem:[#allocation3 + $0x30] sm:$0xff] %v3107
    %3148 = vst [vmem:[#allocation3 + $0x38] sm:$0xff] %v3109
    %3149 = vst [vmem:[#allocation3 + $0x40] sm:$0xff] %v3040
    %3150 = vst [vmem:[#allocation3 + $0x48] sm:$0xff] %v3042
    %3151 = vst [vmem:[#allocation3 + $0x50] sm:$0xff] %v3113
    %3152 = vst [vmem:[#allocation3 + $0x58] sm:$0xff] %v3115
    %3153 = vst [vmem:[#allocation3 + $0x60] sm:$0xff] %v3044
    %3154 = vst [vmem:[#allocation3 + $0x68] sm:$0xff] %v3046
    %3155 = vst [vmem:[#allocation3 + $0x70] sm:$0xff] %v3117
    %3156 = vst [vmem:[#allocation3 + $0x78] sm:$0xff] %v3119
    %3157 = vst [vmem:[#allocation3 + $0x80] sm:$0xff] %v3050
    %3158 = vst [vmem:[#allocation3 + $0x88] sm:$0xff] %v3052
    %3159 = vst [vmem:[#allocation3 + $0x90] sm:$0xff] %v3123
    %3160 = vst [vmem:[#allocation3 + $0x98] sm:$0xff] %v3125
    %3161 = vst [vmem:[#allocation3 + $0xa0] sm:$0xff] %v3054
    %3162 = vst [vmem:[#allocation3 + $0xa8] sm:$0xff] %v3056
    %3163 = vst [vmem:[#allocation3 + $0xb0] sm:$0xff] %v3127
    %3164 = vst [vmem:[#allocation3 + $0xb8] sm:$0xff] %v3129
    %3165 = vst [vmem:[#allocation3 + $0xc0] sm:$0xff] %v3060
    %3166 = vst [vmem:[#allocation3 + $0xc8] sm:$0xff] %v3062
    %3167 = vst [vmem:[#allocation3 + $0xd0] sm:$0xff] %v3133
    %3168 = vst [vmem:[#allocation3 + $0xd8] sm:$0xff] %v3135
    %3169 = vst [vmem:[#allocation3 + $0xe0] sm:$0xff] %v3064
    %3170 = vst [vmem:[#allocation3 + $0xe8] sm:$0xff] %v3066
    %3171 = vst [vmem:[#allocation3 + $0xf0] sm:$0xff] %v3137
    %3172 = vst [vmem:[#allocation3 + $0xf8] sm:$0xff] %v3139
    %v3173 = vld [vmem:[%s325] sm:$0xff]
    %v3174 = vld [vmem:[%s325 + $0x8] sm:$0xff]
    %v3175 = vld [vmem:[%s325 + $0x10] sm:$0xff]
    %v3176 = vld [vmem:[%s325 + $0x18] sm:$0xff]
    %v3177 = vld [vmem:[#allocation8] sm:$0xff]
    %v3178 = vld [vmem:[#allocation8 + $0x8] sm:$0xff]
    %v3179 = vld [vmem:[#allocation8 + $0x10] sm:$0xff]
    %v3180 = vld [vmem:[#allocation8 + $0x18] sm:$0xff]
    %v3181 = vld [vmem:[#allocation8 + $0x20] sm:$0xff]
    %v3182 = vld [vmem:[#allocation8 + $0x28] sm:$0xff]
    %v3183 = vld [vmem:[#allocation8 + $0x30] sm:$0xff]
    %v3184 = vld [vmem:[#allocation8 + $0x38] sm:$0xff]
    %v3185 = vld [vmem:[#allocation8 + $0x40] sm:$0xff]
    %v3186 = vld [vmem:[#allocation8 + $0x48] sm:$0xff]
    %v3187 = vld [vmem:[#allocation8 + $0x50] sm:$0xff]
    %v3188 = vld [vmem:[#allocation8 + $0x58] sm:$0xff]
    %v3189 = vld [vmem:[#allocation8 + $0x60] sm:$0xff]
    %v3190 = vld [vmem:[#allocation8 + $0x68] sm:$0xff]
    %v3191 = vld [vmem:[#allocation8 + $0x70] sm:$0xff]
    %v3192 = vld [vmem:[#allocation8 + $0x78] sm:$0xff]
    %v3193 = vld [vmem:[#allocation8 + $0x80] sm:$0xff]
    %v3194 = vld [vmem:[#allocation8 + $0x88] sm:$0xff]
    %v3195 = vld [vmem:[#allocation8 + $0x90] sm:$0xff]
    %v3196 = vld [vmem:[#allocation8 + $0x98] sm:$0xff]
    %v3197 = vld [vmem:[#allocation8 + $0xa0] sm:$0xff]
    %v3198 = vld [vmem:[#allocation8 + $0xa8] sm:$0xff]
    %v3199 = vld [vmem:[#allocation8 + $0xb0] sm:$0xff]
    %v3200 = vld [vmem:[#allocation8 + $0xb8] sm:$0xff]
    %v3201 = vld [vmem:[#allocation8 + $0xc0] sm:$0xff]
    %v3202 = vld [vmem:[#allocation8 + $0xc8] sm:$0xff]
    %v3203 = vld [vmem:[#allocation8 + $0xd0] sm:$0xff]
    %v3204 = vld [vmem:[#allocation8 + $0xd8] sm:$0xff]
    %v3205 = vld [vmem:[#allocation8 + $0xe0] sm:$0xff]
    %v3206 = vld [vmem:[#allocation8 + $0xe8] sm:$0xff]
    %v3207 = vld [vmem:[#allocation8 + $0xf0] sm:$0xff]
    %v3208 = vld [vmem:[#allocation8 + $0xf8] sm:$0xff]
    %v3241 = vunpack.c.l.b16 %v3177
    %v3242 = vunpack.c.h.b16 %v3177
    %v3243 = vunpack.c.l.b16 %v3178
    %v3244 = vunpack.c.h.b16 %v3178
    %v3245 = vunpack.c.l.b16 %v3179
    %v3246 = vunpack.c.h.b16 %v3179
    %v3247 = vunpack.c.l.b16 %v3180
    %v3248 = vunpack.c.h.b16 %v3180
    %v3249 = vunpack.c.l.b16 %v3181
    %v3250 = vunpack.c.h.b16 %v3181
    %v3251 = vunpack.c.l.b16 %v3182
    %v3252 = vunpack.c.h.b16 %v3182
    %v3253 = vunpack.c.l.b16 %v3183
    %v3254 = vunpack.c.h.b16 %v3183
    %v3255 = vunpack.c.l.b16 %v3184
    %v3256 = vunpack.c.h.b16 %v3184
    %v3257 = vunpack.c.l.b16 %v3185
    %v3258 = vunpack.c.h.b16 %v3185
    %v3259 = vunpack.c.l.b16 %v3186
    %v3260 = vunpack.c.h.b16 %v3186
    %v3261 = vunpack.c.l.b16 %v3187
    %v3262 = vunpack.c.h.b16 %v3187
    %v3263 = vunpack.c.l.b16 %v3188
    %v3264 = vunpack.c.h.b16 %v3188
    %v3265 = vunpack.c.l.b16 %v3189
    %v3266 = vunpack.c.h.b16 %v3189
    %v3267 = vunpack.c.l.b16 %v3190
    %v3268 = vunpack.c.h.b16 %v3190
    %v3269 = vunpack.c.l.b16 %v3191
    %v3270 = vunpack.c.h.b16 %v3191
    %v3271 = vunpack.c.l.b16 %v3192
    %v3272 = vunpack.c.h.b16 %v3192
    %v3273 = vunpack.c.l.b16 %v3193
    %v3274 = vunpack.c.h.b16 %v3193
    %v3275 = vunpack.c.l.b16 %v3194
    %v3276 = vunpack.c.h.b16 %v3194
    %v3277 = vunpack.c.l.b16 %v3195
    %v3278 = vunpack.c.h.b16 %v3195
    %v3279 = vunpack.c.l.b16 %v3196
    %v3280 = vunpack.c.h.b16 %v3196
    %v3281 = vunpack.c.l.b16 %v3197
    %v3282 = vunpack.c.h.b16 %v3197
    %v3283 = vunpack.c.l.b16 %v3198
    %v3284 = vunpack.c.h.b16 %v3198
    %v3285 = vunpack.c.l.b16 %v3199
    %v3286 = vunpack.c.h.b16 %v3199
    %v3287 = vunpack.c.l.b16 %v3200
    %v3288 = vunpack.c.h.b16 %v3200
    %v3289 = vunpack.c.l.b16 %v3201
    %v3290 = vunpack.c.h.b16 %v3201
    %v3291 = vunpack.c.l.b16 %v3202
    %v3292 = vunpack.c.h.b16 %v3202
    %v3293 = vunpack.c.l.b16 %v3203
    %v3294 = vunpack.c.h.b16 %v3203
    %v3295 = vunpack.c.l.b16 %v3204
    %v3296 = vunpack.c.h.b16 %v3204
    %v3297 = vunpack.c.l.b16 %v3205
    %v3298 = vunpack.c.h.b16 %v3205
    %v3299 = vunpack.c.l.b16 %v3206
    %v3300 = vunpack.c.h.b16 %v3206
    %v3301 = vunpack.c.l.b16 %v3207
    %v3302 = vunpack.c.h.b16 %v3207
    %v3303 = vunpack.c.l.b16 %v3208
    %v3304 = vunpack.c.h.b16 %v3208
    %v3305 = vpack.c.b16 %v3245, %v3241
    %v3306 = vpack.c.b16 %v3246, %v3242
    %v3307 = vpack.c.b16 %v3247, %v3243
    %v3308 = vpack.c.b16 %v3248, %v3244
    %v3309 = vpack.c.b16 %v3253, %v3249
    %v3310 = vpack.c.b16 %v3254, %v3250
    %v3311 = vpack.c.b16 %v3255, %v3251
    %v3312 = vpack.c.b16 %v3256, %v3252
    %v3313 = vpack.c.b16 %v3261, %v3257
    %v3314 = vpack.c.b16 %v3262, %v3258
    %v3315 = vpack.c.b16 %v3263, %v3259
    %v3316 = vpack.c.b16 %v3264, %v3260
    %v3317 = vpack.c.b16 %v3269, %v3265
    %v3318 = vpack.c.b16 %v3270, %v3266
    %v3319 = vpack.c.b16 %v3271, %v3267
    %v3320 = vpack.c.b16 %v3272, %v3268
    %v3321 = vpack.c.b16 %v3277, %v3273
    %v3322 = vpack.c.b16 %v3278, %v3274
    %v3323 = vpack.c.b16 %v3279, %v3275
    %v3324 = vpack.c.b16 %v3280, %v3276
    %v3325 = vpack.c.b16 %v3285, %v3281
    %v3326 = vpack.c.b16 %v3286, %v3282
    %v3327 = vpack.c.b16 %v3287, %v3283
    %v3328 = vpack.c.b16 %v3288, %v3284
    %v3329 = vpack.c.b16 %v3293, %v3289
    %v3330 = vpack.c.b16 %v3294, %v3290
    %v3331 = vpack.c.b16 %v3295, %v3291
    %v3332 = vpack.c.b16 %v3296, %v3292
    %v3333 = vpack.c.b16 %v3301, %v3297
    %v3334 = vpack.c.b16 %v3302, %v3298
    %v3335 = vpack.c.b16 %v3303, %v3299
    %v3336 = vpack.c.b16 %v3304, %v3300
    %3369 = vmatprep.subr.bf16.mxu0 %v3306
    %3370 = vmatpush1.bf16.msra.mxu0 %v3305
    %3371 = vmatprep.subr.bf16.mxu0 %v3310
    %3372 = vmatpush1.bf16.msra.mxu0 %v3309
    %3373 = vmatprep.subr.bf16.mxu0 %v3314
    %3374 = vmatpush1.bf16.msra.mxu0 %v3313
    %3375 = vmatprep.subr.bf16.mxu0 %v3318
    %3376 = vmatpush1.bf16.msra.mxu0 %v3317
    %3377 = vmatprep.subr.bf16.mxu0 %v3322
    %3378 = vmatpush1.bf16.msra.mxu0 %v3321
    %3379 = vmatprep.subr.bf16.mxu0 %v3326
    %3380 = vmatpush1.bf16.msra.mxu0 %v3325
    %3381 = vmatprep.subr.bf16.mxu0 %v3330
    %3382 = vmatpush1.bf16.msra.mxu0 %v3329
    %3383 = vmatprep.subr.bf16.mxu0 %v3334
    %3384 = vmatpush1.bf16.msra.mxu0 %v3333
    %3385 = vmatprep.subr.bf16.mxu0 0
    %3386 = vmatpush1.bf16.msra.mxu0 0
    %3387 = vmatprep.subr.bf16.mxu0 0
    %3388 = vmatpush1.bf16.msra.mxu0 0
    %3389 = vmatprep.subr.bf16.mxu0 0
    %3390 = vmatpush1.bf16.msra.mxu0 0
    %3391 = vmatprep.subr.bf16.mxu0 0
    %3392 = vmatpush1.bf16.msra.mxu0 0
    %3393 = vmatprep.subr.bf16.mxu0 0
    %3394 = vmatpush1.bf16.msra.mxu0 0
    %3395 = vmatprep.subr.bf16.mxu0 0
    %3396 = vmatpush1.bf16.msra.mxu0 0
    %3397 = vmatprep.subr.bf16.mxu0 0
    %3398 = vmatpush1.bf16.msra.mxu0 0
    %3399 = vmatprep.subr.bf16.mxu0 0
    %3400 = vmatpush1.bf16.msra.mxu0 0
    %3401 = vmatprep.mubr.bf16.mxu0 0
    %3402 = vmatmul.mubr.bf16.gmra.mrb[0].mxu0 0
    %v3403 = vpop.f32.mrb[0].mxu0
    %v3404 = vadd.f32 0.0, %v3403
    %v3405 = vpop.f32.mrb[0].mxu0
    %v3406 = vadd.f32 0.0, %v3405
    %v3407 = vpop.f32.mrb[0].mxu0
    %v3408 = vpop.f32.mrb[0].mxu0
    %3409 = vdwg.mxu0
    %3410 = vmatprep.subr.bf16.mxu0 %v3308
    %3411 = vmatpush1.bf16.msra.mxu0 %v3307
    %3412 = vmatprep.subr.bf16.mxu0 %v3312
    %3413 = vmatpush1.bf16.msra.mxu0 %v3311
    %3414 = vmatprep.subr.bf16.mxu0 %v3316
    %3415 = vmatpush1.bf16.msra.mxu0 %v3315
    %3416 = vmatprep.subr.bf16.mxu0 %v3320
    %3417 = vmatpush1.bf16.msra.mxu0 %v3319
    %3418 = vmatprep.subr.bf16.mxu0 %v3324
    %3419 = vmatpush1.bf16.msra.mxu0 %v3323
    %3420 = vmatprep.subr.bf16.mxu0 %v3328
    %3421 = vmatpush1.bf16.msra.mxu0 %v3327
    %3422 = vmatprep.subr.bf16.mxu0 %v3332
    %3423 = vmatpush1.bf16.msra.mxu0 %v3331
    %3424 = vmatprep.subr.bf16.mxu0 %v3336
    %3425 = vmatpush1.bf16.msra.mxu0 %v3335
    %3426 = vmatprep.subr.bf16.mxu0 0
    %3427 = vmatpush1.bf16.msra.mxu0 0
    %3428 = vmatprep.subr.bf16.mxu0 0
    %3429 = vmatpush1.bf16.msra.mxu0 0
    %3430 = vmatprep.subr.bf16.mxu0 0
    %3431 = vmatpush1.bf16.msra.mxu0 0
    %3432 = vmatprep.subr.bf16.mxu0 0
    %3433 = vmatpush1.bf16.msra.mxu0 0
    %3434 = vmatprep.subr.bf16.mxu0 0
    %3435 = vmatpush1.bf16.msra.mxu0 0
    %3436 = vmatprep.subr.bf16.mxu0 0
    %3437 = vmatpush1.bf16.msra.mxu0 0
    %3438 = vmatprep.subr.bf16.mxu0 0
    %3439 = vmatpush1.bf16.msra.mxu0 0
    %3440 = vmatprep.subr.bf16.mxu0 0
    %3441 = vmatpush1.bf16.msra.mxu0 0
    %3442 = vmatprep.mubr.bf16.mxu0 0
    %3443 = vmatmul.mubr.bf16.gmra.mrb[0].mxu0 0
    %v3444 = vpop.f32.mrb[0].mxu0
    %v3445 = vadd.f32 0.0, %v3444
    %v3446 = vpop.f32.mrb[0].mxu0
    %v3447 = vadd.f32 0.0, %v3446
    %v3448 = vpop.f32.mrb[0].mxu0
    %v3449 = vpop.f32.mrb[0].mxu0
    %3450 = vdwg.mxu0
    %v3451 = vadd.f32 %v3173, %v3404
    %v3452 = vadd.f32 %v3174, %v3406
    %v3453 = vadd.f32 %v3175, %v3445
    %v3454 = vadd.f32 %v3176, %v3447
    %v3455 = vmul.f32 %v3451, 0.5
    %v3456 = vtanh.pop %v3455
    %v3457 = vmul.f32 %v3456, 0.5
    %v3458 = vadd.f32 %v3457, 0.5
    %v3459 = vmul.f32 %v3452, 0.5
    %v3460 = vtanh.pop %v3459
    %v3461 = vmul.f32 %v3460, 0.5
    %v3462 = vadd.f32 %v3461, 0.5
    %v3463 = vtanh.pop %v3453
    %v3464 = vmul.f32 %v3454, 0.5
    %v3465 = vtanh.pop %v3464
    %v3466 = vmul.f32 %v3465, 0.5
    %v3467 = vadd.f32 %v3466, 0.5
    %v3468 = vmul.f32 %v3462, 0.0
    %v3469 = vmul.f32 %v3458, %v3463
    %v3470 = vadd.f32 %v3468, %v3469
    %v3471 = vtanh.pop %v3470
    %v3472 = vmul.f32 %v3467, %v3471
    %v3473 = vld [vmem:[%s629] sm:$0xff]
    %v3474 = vld [vmem:[%s629 + $0x8] sm:$0xff]
    %v3475 = vld [vmem:[%s629 + $0x10] sm:$0xff]
    %v3476 = vld [vmem:[%s629 + $0x18] sm:$0xff]
    %v3477 = vpack.c.bf16 %v3472, %v3472
    %3478 = vmatprep.subr.bf16.mxu0 %v3306
    %3479 = vmatpush1.bf16.msra.mxu0 %v3305
    %3480 = vmatprep.subr.bf16.mxu0 %v3310
    %3481 = vmatpush1.bf16.msra.mxu0 %v3309
    %3482 = vmatprep.subr.bf16.mxu0 %v3314
    %3483 = vmatpush1.bf16.msra.mxu0 %v3313
    %3484 = vmatprep.subr.bf16.mxu0 %v3318
    %3485 = vmatpush1.bf16.msra.mxu0 %v3317
    %3486 = vmatprep.subr.bf16.mxu0 %v3322
    %3487 = vmatpush1.bf16.msra.mxu0 %v3321
    %3488 = vmatprep.subr.bf16.mxu0 %v3326
    %3489 = vmatpush1.bf16.msra.mxu0 %v3325
    %3490 = vmatprep.subr.bf16.mxu0 %v3330
    %3491 = vmatpush1.bf16.msra.mxu0 %v3329
    %3492 = vmatprep.subr.bf16.mxu0 %v3334
    %3493 = vmatpush1.bf16.msra.mxu0 %v3333
    %3494 = vmatprep.subr.bf16.mxu0 0
    %3495 = vmatpush1.bf16.msra.mxu0 0
    %3496 = vmatprep.subr.bf16.mxu0 0
    %3497 = vmatpush1.bf16.msra.mxu0 0
    %3498 = vmatprep.subr.bf16.mxu0 0
    %3499 = vmatpush1.bf16.msra.mxu0 0
    %3500 = vmatprep.subr.bf16.mxu0 0
    %3501 = vmatpush1.bf16.msra.mxu0 0
    %3502 = vmatprep.subr.bf16.mxu0 0
    %3503 = vmatpush1.bf16.msra.mxu0 0
    %3504 = vmatprep.subr.bf16.mxu0 0
    %3505 = vmatpush1.bf16.msra.mxu0 0
    %3506 = vmatprep.subr.bf16.mxu0 0
    %3507 = vmatpush1.bf16.msra.mxu0 0
    %3508 = vmatprep.subr.bf16.mxu0 0
    %3509 = vmatpush1.bf16.msra.mxu0 0
    %3510 = vmatprep.mubr.bf16.mxu0 0
    %3511 = vmatmul.mubr.bf16.gmra.mrb[0].mxu0 %v3477
    %v3512 = vpop.f32.mrb[0].mxu0
    %v3513 = vadd.f32 0.0, %v3512
    %v3514 = vpop.f32.mrb[0].mxu0
    %v3515 = vadd.f32 0.0, %v3514
    %v3516 = vpop.f32.mrb[0].mxu0
    %v3517 = vpop.f32.mrb[0].mxu0
    %3518 = vdwg.mxu0
    %3519 = vmatprep.subr.bf16.mxu0 %v3308
    %3520 = vmatpush1.bf16.msra.mxu0 %v3307
    %3521 = vmatprep.subr.bf16.mxu0 %v3312
    %3522 = vmatpush1.bf16.msra.mxu0 %v3311
    %3523 = vmatprep.subr.bf16.mxu0 %v3316
    %3524 = vmatpush1.bf16.msra.mxu0 %v3315
    %3525 = vmatprep.subr.bf16.mxu0 %v3320
    %3526 = vmatpush1.bf16.msra.mxu0 %v3319
    %3527 = vmatprep.subr.bf16.mxu0 %v3324
    %3528 = vmatpush1.bf16.msra.mxu0 %v3323
    %3529 = vmatprep.subr.bf16.mxu0 %v3328
    %3530 = vmatpush1.bf16.msra.mxu0 %v3327
    %3531 = vmatprep.subr.bf16.mxu0 %v3332
    %3532 = vmatpush1.bf16.msra.mxu0 %v3331
    %3533 = vmatprep.subr.bf16.mxu0 %v3336
    %3534 = vmatpush1.bf16.msra.mxu0 %v3335
    %3535 = vmatprep.subr.bf16.mxu0 0
    %3536 = vmatpush1.bf16.msra.mxu0 0
    %3537 = vmatprep.subr.bf16.mxu0 0
    %3538 = vmatpush1.bf16.msra.mxu0 0
    %3539 = vmatprep.subr.bf16.mxu0 0
    %3540 = vmatpush1.bf16.msra.mxu0 0
    %3541 = vmatprep.subr.bf16.mxu0 0
    %3542 = vmatpush1.bf16.msra.mxu0 0
    %3543 = vmatprep.subr.bf16.mxu0 0
    %3544 = vmatpush1.bf16.msra.mxu0 0
    %3545 = vmatprep.subr.bf16.mxu0 0
    %3546 = vmatpush1.bf16.msra.mxu0 0
    %3547 = vmatprep.subr.bf16.mxu0 0
    %3548 = vmatpush1.bf16.msra.mxu0 0
    %3549 = vmatprep.subr.bf16.mxu0 0
    %3550 = vmatpush1.bf16.msra.mxu0 0
    %3551 = vmatprep.mubr.bf16.mxu0 0
    %3552 = vmatmul.mubr.bf16.gmra.mrb[0].mxu0 %v3477
    %v3553 = vpop.f32.mrb[0].mxu0
    %v3554 = vadd.f32 0.0, %v3553
    %v3555 = vpop.f32.mrb[0].mxu0
    %v3556 = vadd.f32 0.0, %v3555
    %v3557 = vpop.f32.mrb[0].mxu0
    %v3558 = vpop.f32.mrb[0].mxu0
    %3559 = vdwg.mxu0
    %v3560 = vadd.f32 %v3473, %v3513
    %v3561 = vadd.f32 %v3474, %v3515
    %v3562 = vadd.f32 %v3475, %v3554
    %v3563 = vadd.f32 %v3476, %v3556
    %v3564 = vmul.f32 %v3560, 0.5
    %v3565 = vtanh.pop %v3564
    %v3566 = vmul.f32 %v3565, 0.5
    %v3567 = vadd.f32 %v3566, 0.5
    %v3568 = vmul.f32 %v3561, 0.5
    %v3569 = vtanh.pop %v3568
    %v3570 = vmul.f32 %v3569, 0.5
    %v3571 = vadd.f32 %v3570, 0.5
    %v3572 = vtanh.pop %v3562
    %v3573 = vmul.f32 %v3563, 0.5
    %v3574 = vtanh.pop %v3573
    %v3575 = vmul.f32 %v3574, 0.5
    %v3576 = vadd.f32 %v3575, 0.5
    %v3577 = vmul.f32 %v3571, %v3470
    %v3578 = vmul.f32 %v3567, %v3572
    %v3579 = vadd.f32 %v3577, %v3578
    %v3580 = vtanh.pop %v3579
    %v3581 = vmul.f32 %v3576, %v3580
    %v3582 = vld [vmem:[%s935] sm:$0xff]
    %v3583 = vld [vmem:[%s935 + $0x8] sm:$0xff]
    %v3584 = vld [vmem:[%s935 + $0x10] sm:$0xff]
    %v3585 = vld [vmem:[%s935 + $0x18] sm:$0xff]
    %v3586 = vpack.c.bf16 %v3581, %v3581
    %3587 = vmatprep.subr.bf16.mxu0 %v3306
    %3588 = vmatpush1.bf16.msra.mxu0 %v3305
    %3589 = vmatprep.subr.bf16.mxu0 %v3310
    %3590 = vmatpush1.bf16.msra.mxu0 %v3309
    %3591 = vmatprep.subr.bf16.mxu0 %v3314
    %3592 = vmatpush1.bf16.msra.mxu0 %v3313
    %3593 = vmatprep.subr.bf16.mxu0 %v3318
    %3594 = vmatpush1.bf16.msra.mxu0 %v3317
    %3595 = vmatprep.subr.bf16.mxu0 %v3322
    %3596 = vmatpush1.bf16.msra.mxu0 %v3321
    %3597 = vmatprep.subr.bf16.mxu0 %v3326
    %3598 = vmatpush1.bf16.msra.mxu0 %v3325
    %3599 = vmatprep.subr.bf16.mxu0 %v3330
    %3600 = vmatpush1.bf16.msra.mxu0 %v3329
    %3601 = vmatprep.subr.bf16.mxu0 %v3334
    %3602 = vmatpush1.bf16.msra.mxu0 %v3333
    %3603 = vmatprep.subr.bf16.mxu0 0
    %3604 = vmatpush1.bf16.msra.mxu0 0
    %3605 = vmatprep.subr.bf16.mxu0 0
    %3606 = vmatpush1.bf16.msra.mxu0 0
    %3607 = vmatprep.subr.bf16.mxu0 0
    %3608 = vmatpush1.bf16.msra.mxu0 0
    %3609 = vmatprep.subr.bf16.mxu0 0
    %3610 = vmatpush1.bf16.msra.mxu0 0
    %3611 = vmatprep.subr.bf16.mxu0 0
    %3612 = vmatpush1.bf16.msra.mxu0 0
    %3613 = vmatprep.subr.bf16.mxu0 0
    %3614 = vmatpush1.bf16.msra.mxu0 0
    %3615 = vmatprep.subr.bf16.mxu0 0
    %3616 = vmatpush1.bf16.msra.mxu0 0
    %3617 = vmatprep.subr.bf16.mxu0 0
    %3618 = vmatpush1.bf16.msra.mxu0 0
    %3619 = vmatprep.mubr.bf16.mxu0 0
    %3620 = vmatmul.mubr.bf16.gmra.mrb[0].mxu0 %v3586
    %v3621 = vpop.f32.mrb[0].mxu0
    %v3622 = vadd.f32 0.0, %v3621
    %v3623 = vpop.f32.mrb[0].mxu0
    %v3624 = vadd.f32 0.0, %v3623
    %v3625 = vpop.f32.mrb[0].mxu0
    %v3626 = vpop.f32.mrb[0].mxu0
    %3627 = vdwg.mxu0
    %3628 = vmatprep.subr.bf16.mxu0 %v3308
    %3629 = vmatpush1.bf16.msra.mxu0 %v3307
    %3630 = vmatprep.subr.bf16.mxu0 %v3312
    %3631 = vmatpush1.bf16.msra.mxu0 %v3311
    %3632 = vmatprep.subr.bf16.mxu0 %v3316
    %3633 = vmatpush1.bf16.msra.mxu0 %v3315
    %3634 = vmatprep.subr.bf16.mxu0 %v3320
    %3635 = vmatpush1.bf16.msra.mxu0 %v3319
    %3636 = vmatprep.subr.bf16.mxu0 %v3324
    %3637 = vmatpush1.bf16.msra.mxu0 %v3323
    %3638 = vmatprep.subr.bf16.mxu0 %v3328
    %3639 = vmatpush1.bf16.msra.mxu0 %v3327
    %3640 = vmatprep.subr.bf16.mxu0 %v3332
    %3641 = vmatpush1.bf16.msra.mxu0 %v3331
    %3642 = vmatprep.subr.bf16.mxu0 %v3336
    %3643 = vmatpush1.bf16.msra.mxu0 %v3335
    %3644 = vmatprep.subr.bf16.mxu0 0
    %3645 = vmatpush1.bf16.msra.mxu0 0
    %3646 = vmatprep.subr.bf16.mxu0 0
    %3647 = vmatpush1.bf16.msra.mxu0 0
    %3648 = vmatprep.subr.bf16.mxu0 0
    %3649 = vmatpush1.bf16.msra.mxu0 0
    %3650 = vmatprep.subr.bf16.mxu0 0
    %3651 = vmatpush1.bf16.msra.mxu0 0
    %3652 = vmatprep.subr.bf16.mxu0 0
    %3653 = vmatpush1.bf16.msra.mxu0 0
    %3654 = vmatprep.subr.bf16.mxu0 0
    %3655 = vmatpush1.bf16.msra.mxu0 0
    %3656 = vmatprep.subr.bf16.mxu0 0
    %3657 = vmatpush1.bf16.msra.mxu0 0
    %3658 = vmatprep.subr.bf16.mxu0 0
    %3659 = vmatpush1.bf16.msra.mxu0 0
    %3660 = vmatprep.mubr.bf16.mxu0 0
    %3661 = vmatmul.mubr.bf16.gmra.mrb[0].mxu0 %v3586
    %v3662 = vpop.f32.mrb[0].mxu0
    %v3663 = vadd.f32 0.0, %v3662
    %v3664 = vpop.f32.mrb[0].mxu0
    %v3665 = vadd.f32 0.0, %v3664
    %v3666 = vpop.f32.mrb[0].mxu0
    %v3667 = vpop.f32.mrb[0].mxu0
    %3668 = vdwg.mxu0
    %v3669 = vadd.f32 %v3582, %v3622
    %v3670 = vadd.f32 %v3583, %v3624
    %v3671 = vadd.f32 %v3584, %v3663
    %v3672 = vadd.f32 %v3585, %v3665
    %v3673 = vmul.f32 %v3669, 0.5
    %v3674 = vtanh.pop %v3673
    %v3675 = vmul.f32 %v3674, 0.5
    %v3676 = vadd.f32 %v3675, 0.5
    %v3677 = vmul.f32 %v3670, 0.5
    %v3678 = vtanh.pop %v3677
    %v3679 = vmul.f32 %v3678, 0.5
    %v3680 = vadd.f32 %v3679, 0.5
    %v3681 = vtanh.pop %v3671
    %v3682 = vmul.f32 %v3672, 0.5
    %v3683 = vtanh.pop %v3682
    %v3684 = vmul.f32 %v3683, 0.5
    %v3685 = vadd.f32 %v3684, 0.5
    %v3686 = vmul.f32 %v3680, %v3579
    %v3687 = vmul.f32 %v3676, %v3681
    %v3688 = vadd.f32 %v3686, %v3687
    %v3689 = vtanh.pop %v3688
    %v3690 = vmul.f32 %v3685, %v3689
    %v3691 = vld [vmem:[%s1241] sm:$0xff]
    %v3692 = vld [vmem:[%s1241 + $0x8] sm:$0xff]
    %v3693 = vld [vmem:[%s1241 + $0x10] sm:$0xff]
    %v3694 = vld [vmem:[%s1241 + $0x18] sm:$0xff]
    %v3695 = vpack.c.bf16 %v3690, %v3690
    %3696 = vmatprep.subr.bf16.mxu0 %v3306
    %3697 = vmatpush1.bf16.msra.mxu0 %v3305
    %3698 = vmatprep.subr.bf16.mxu0 %v3310
    %3699 = vmatpush1.bf16.msra.mxu0 %v3309
    %3700 = vmatprep.subr.bf16.mxu0 %v3314
    %3701 = vmatpush1.bf16.msra.mxu0 %v3313
    %3702 = vmatprep.subr.bf16.mxu0 %v3318
    %3703 = vmatpush1.bf16.msra.mxu0 %v3317
    %3704 = vmatprep.subr.bf16.mxu0 %v3322
    %3705 = vmatpush1.bf16.msra.mxu0 %v3321
    %3706 = vmatprep.subr.bf16.mxu0 %v3326
    %3707 = vmatpush1.bf16.msra.mxu0 %v3325
    %3708 = vmatprep.subr.bf16.mxu0 %v3330
    %3709 = vmatpush1.bf16.msra.mxu0 %v3329
    %3710 = vmatprep.subr.bf16.mxu0 %v3334
    %3711 = vmatpush1.bf16.msra.mxu0 %v3333
    %3712 = vmatprep.subr.bf16.mxu0 0
    %3713 = vmatpush1.bf16.msra.mxu0 0
    %3714 = vmatprep.subr.bf16.mxu0 0
    %3715 = vmatpush1.bf16.msra.mxu0 0
    %3716 = vmatprep.subr.bf16.mxu0 0
    %3717 = vmatpush1.bf16.msra.mxu0 0
    %3718 = vmatprep.subr.bf16.mxu0 0
    %3719 = vmatpush1.bf16.msra.mxu0 0
    %3720 = vmatprep.subr.bf16.mxu0 0
    %3721 = vmatpush1.bf16.msra.mxu0 0
    %3722 = vmatprep.subr.bf16.mxu0 0
    %3723 = vmatpush1.bf16.msra.mxu0 0
    %3724 = vmatprep.subr.bf16.mxu0 0
    %3725 = vmatpush1.bf16.msra.mxu0 0
    %3726 = vmatprep.subr.bf16.mxu0 0
    %3727 = vmatpush1.bf16.msra.mxu0 0
    %3728 = vmatprep.mubr.bf16.mxu0 0
    %3729 = vmatmul.mubr.bf16.gmra.mrb[0].mxu0 %v3695
    %v3730 = vpop.f32.mrb[0].mxu0
    %v3731 = vadd.f32 0.0, %v3730
    %v3732 = vpop.f32.mrb[0].mxu0
    %v3733 = vadd.f32 0.0, %v3732
    %v3734 = vpop.f32.mrb[0].mxu0
    %v3735 = vpop.f32.mrb[0].mxu0
    %3736 = vdwg.mxu0
    %3737 = vmatprep.subr.bf16.mxu0 %v3308
    %3738 = vmatpush1.bf16.msra.mxu0 %v3307
    %3739 = vmatprep.subr.bf16.mxu0 %v3312
    %3740 = vmatpush1.bf16.msra.mxu0 %v3311
    %3741 = vmatprep.subr.bf16.mxu0 %v3316
    %3742 = vmatpush1.bf16.msra.mxu0 %v3315
    %3743 = vmatprep.subr.bf16.mxu0 %v3320
    %3744 = vmatpush1.bf16.msra.mxu0 %v3319
    %3745 = vmatprep.subr.bf16.mxu0 %v3324
    %3746 = vmatpush1.bf16.msra.mxu0 %v3323
    %3747 = vmatprep.subr.bf16.mxu0 %v3328
    %3748 = vmatpush1.bf16.msra.mxu0 %v3327
    %3749 = vmatprep.subr.bf16.mxu0 %v3332
    %3750 = vmatpush1.bf16.msra.mxu0 %v3331
    %3751 = vmatprep.subr.bf16.mxu0 %v3336
    %3752 = vmatpush1.bf16.msra.mxu0 %v3335
    %3753 = vmatprep.subr.bf16.mxu0 0
    %3754 = vmatpush1.bf16.msra.mxu0 0
    %3755 = vmatprep.subr.bf16.mxu0 0
    %3756 = vmatpush1.bf16.msra.mxu0 0
    %3757 = vmatprep.subr.bf16.mxu0 0
    %3758 = vmatpush1.bf16.msra.mxu0 0
    %3759 = vmatprep.subr.bf16.mxu0 0
    %3760 = vmatpush1.bf16.msra.mxu0 0
    %3761 = vmatprep.subr.bf16.mxu0 0
    %3762 = vmatpush1.bf16.msra.mxu0 0
    %3763 = vmatprep.subr.bf16.mxu0 0
    %3764 = vmatpush1.bf16.msra.mxu0 0
    %3765 = vmatprep.subr.bf16.mxu0 0
    %3766 = vmatpush1.bf16.msra.mxu0 0
    %3767 = vmatprep.subr.bf16.mxu0 0
    %3768 = vmatpush1.bf16.msra.mxu0 0
    %3769 = vmatprep.mubr.bf16.mxu0 0
    %3770 = vmatmul.mubr.bf16.gmra.mrb[0].mxu0 %v3695
    %v3771 = vpop.f32.mrb[0].mxu0
    %v3772 = vadd.f32 0.0, %v3771
    %v3773 = vpop.f32.mrb[0].mxu0
    %v3774 = vadd.f32 0.0, %v3773
    %v3775 = vpop.f32.mrb[0].mxu0
    %v3776 = vpop.f32.mrb[0].mxu0
    %3777 = vdwg.mxu0
    %v3778 = vadd.f32 %v3691, %v3731
    %v3779 = vadd.f32 %v3692, %v3733
    %v3780 = vadd.f32 %v3693, %v3772
    %v3781 = vadd.f32 %v3694, %v3774
    %v3782 = vmul.f32 %v3778, 0.5
    %v3783 = vtanh.pop %v3782
    %v3784 = vmul.f32 %v3783, 0.5
    %v3785 = vadd.f32 %v3784, 0.5
    %v3786 = vmul.f32 %v3779, 0.5
    %v3787 = vtanh.pop %v3786
    %v3788 = vmul.f32 %v3787, 0.5
    %v3789 = vadd.f32 %v3788, 0.5
    %v3790 = vtanh.pop %v3780
    %v3791 = vmul.f32 %v3781, 0.5
    %v3792 = vtanh.pop %v3791
    %v3793 = vmul.f32 %v3792, 0.5
    %v3794 = vadd.f32 %v3793, 0.5
    %v3795 = vmul.f32 %v3789, %v3688
    %v3796 = vmul.f32 %v3785, %v3790
    %v3797 = vadd.f32 %v3795, %v3796
    %v3798 = vtanh.pop %v3797
    %v3799 = vmul.f32 %v3794, %v3798
    %v3800 = vld [vmem:[%s1547] sm:$0xff]
    %v3801 = vld [vmem:[%s1547 + $0x8] sm:$0xff]
    %v3802 = vld [vmem:[%s1547 + $0x10] sm:$0xff]
    %v3803 = vld [vmem:[%s1547 + $0x18] sm:$0xff]
    %v3804 = vpack.c.bf16 %v3799, %v3799
    %3805 = vmatprep.subr.bf16.mxu0 %v3306
    %3806 = vmatpush1.bf16.msra.mxu0 %v3305
    %3807 = vmatprep.subr.bf16.mxu0 %v3310
    %3808 = vmatpush1.bf16.msra.mxu0 %v3309
    %3809 = vmatprep.subr.bf16.mxu0 %v3314
    %3810 = vmatpush1.bf16.msra.mxu0 %v3313
    %3811 = vmatprep.subr.bf16.mxu0 %v3318
    %3812 = vmatpush1.bf16.msra.mxu0 %v3317
    %3813 = vmatprep.subr.bf16.mxu0 %v3322
    %3814 = vmatpush1.bf16.msra.mxu0 %v3321
    %3815 = vmatprep.subr.bf16.mxu0 %v3326
    %3816 = vmatpush1.bf16.msra.mxu0 %v3325
    %3817 = vmatprep.subr.bf16.mxu0 %v3330
    %3818 = vmatpush1.bf16.msra.mxu0 %v3329
    %3819 = vmatprep.subr.bf16.mxu0 %v3334
    %3820 = vmatpush1.bf16.msra.mxu0 %v3333
    %3821 = vmatprep.subr.bf16.mxu0 0
    %3822 = vmatpush1.bf16.msra.mxu0 0
    %3823 = vmatprep.subr.bf16.mxu0 0
    %3824 = vmatpush1.bf16.msra.mxu0 0
    %3825 = vmatprep.subr.bf16.mxu0 0
    %3826 = vmatpush1.bf16.msra.mxu0 0
    %3827 = vmatprep.subr.bf16.mxu0 0
    %3828 = vmatpush1.bf16.msra.mxu0 0
    %3829 = vmatprep.subr.bf16.mxu0 0
    %3830 = vmatpush1.bf16.msra.mxu0 0
    %3831 = vmatprep.subr.bf16.mxu0 0
    %3832 = vmatpush1.bf16.msra.mxu0 0
    %3833 = vmatprep.subr.bf16.mxu0 0
    %3834 = vmatpush1.bf16.msra.mxu0 0
    %3835 = vmatprep.subr.bf16.mxu0 0
    %3836 = vmatpush1.bf16.msra.mxu0 0
    %3837 = vmatprep.mubr.bf16.mxu0 0
    %3838 = vmatmul.mubr.bf16.gmra.mrb[0].mxu0 %v3804
    %v3839 = vpop.f32.mrb[0].mxu0
    %v3840 = vadd.f32 0.0, %v3839
    %v3841 = vpop.f32.mrb[0].mxu0
    %v3842 = vadd.f32 0.0, %v3841
    %v3843 = vpop.f32.mrb[0].mxu0
    %v3844 = vpop.f32.mrb[0].mxu0
    %3845 = vdwg.mxu0
    %3846 = vmatprep.subr.bf16.mxu0 %v3308
    %3847 = vmatpush1.bf16.msra.mxu0 %v3307
    %3848 = vmatprep.subr.bf16.mxu0 %v3312
    %3849 = vmatpush1.bf16.msra.mxu0 %v3311
    %3850 = vmatprep.subr.bf16.mxu0 %v3316
    %3851 = vmatpush1.bf16.msra.mxu0 %v3315
    %3852 = vmatprep.subr.bf16.mxu0 %v3320
    %3853 = vmatpush1.bf16.msra.mxu0 %v3319
    %3854 = vmatprep.subr.bf16.mxu0 %v3324
    %3855 = vmatpush1.bf16.msra.mxu0 %v3323
    %3856 = vmatprep.subr.bf16.mxu0 %v3328
    %3857 = vmatpush1.bf16.msra.mxu0 %v3327
    %3858 = vmatprep.subr.bf16.mxu0 %v3332
    %3859 = vmatpush1.bf16.msra.mxu0 %v3331
    %3860 = vmatprep.subr.bf16.mxu0 %v3336
    %3861 = vmatpush1.bf16.msra.mxu0 %v3335
    %3862 = vmatprep.subr.bf16.mxu0 0
    %3863 = vmatpush1.bf16.msra.mxu0 0
    %3864 = vmatprep.subr.bf16.mxu0 0
    %3865 = vmatpush1.bf16.msra.mxu0 0
    %3866 = vmatprep.subr.bf16.mxu0 0
    %3867 = vmatpush1.bf16.msra.mxu0 0
    %3868 = vmatprep.subr.bf16.mxu0 0
    %3869 = vmatpush1.bf16.msra.mxu0 0
    %3870 = vmatprep.subr.bf16.mxu0 0
    %3871 = vmatpush1.bf16.msra.mxu0 0
    %3872 = vmatprep.subr.bf16.mxu0 0
    %3873 = vmatpush1.bf16.msra.mxu0 0
    %3874 = vmatprep.subr.bf16.mxu0 0
    %3875 = vmatpush1.bf16.msra.mxu0 0
    %3876 = vmatprep.subr.bf16.mxu0 0
    %3877 = vmatpush1.bf16.msra.mxu0 0
    %3878 = vmatprep.mubr.bf16.mxu0 0
    %3879 = vmatmul.mubr.bf16.gmra.mrb[0].mxu0 %v3804
    %v3880 = vpop.f32.mrb[0].mxu0
    %v3881 = vadd.f32 0.0, %v3880
    %v3882 = vpop.f32.mrb[0].mxu0
    %v3883 = vadd.f32 0.0, %v3882
    %v3884 = vpop.f32.mrb[0].mxu0
    %v3885 = vpop.f32.mrb[0].mxu0
    %3886 = vdwg.mxu0
    %v3887 = vadd.f32 %v3800, %v3840
    %v3888 = vadd.f32 %v3801, %v3842
    %v3889 = vadd.f32 %v3802, %v3881
    %v3890 = vadd.f32 %v3803, %v3883
    %v3891 = vmul.f32 %v3887, 0.5
    %v3892 = vtanh.pop %v3891
    %v3893 = vmul.f32 %v3892, 0.5
    %v3894 = vadd.f32 %v3893, 0.5
    %v3895 = vmul.f32 %v3888, 0.5
    %v3896 = vtanh.pop %v3895
    %v3897 = vmul.f32 %v3896, 0.5
    %v3898 = vadd.f32 %v3897, 0.5
    %v3899 = vtanh.pop %v3889
    %v3900 = vmul.f32 %v3890, 0.5
    %v3901 = vtanh.pop %v3900
    %v3902 = vmul.f32 %v3901, 0.5
    %v3903 = vadd.f32 %v3902, 0.5
    %v3904 = vmul.f32 %v3898, %v3797
    %v3905 = vmul.f32 %v3894, %v3899
    %v3906 = vadd.f32 %v3904, %v3905
    %v3907 = vtanh.pop %v3906
    %v3908 = vmul.f32 %v3903, %v3907
    %v3909 = vld [vmem:[%s1853] sm:$0xff]
    %v3910 = vld [vmem:[%s1853 + $0x8] sm:$0xff]
    %v3911 = vld [vmem:[%s1853 + $0x10] sm:$0xff]
    %v3912 = vld [vmem:[%s1853 + $0x18] sm:$0xff]
    %v3913 = vpack.c.bf16 %v3908, %v3908
    %3914 = vmatprep.subr.bf16.mxu0 %v3306
    %3915 = vmatpush1.bf16.msra.mxu0 %v3305
    %3916 = vmatprep.subr.bf16.mxu0 %v3310
    %3917 = vmatpush1.bf16.msra.mxu0 %v3309
    %3918 = vmatprep.subr.bf16.mxu0 %v3314
    %3919 = vmatpush1.bf16.msra.mxu0 %v3313
    %3920 = vmatprep.subr.bf16.mxu0 %v3318
    %3921 = vmatpush1.bf16.msra.mxu0 %v3317
    %3922 = vmatprep.subr.bf16.mxu0 %v3322
    %3923 = vmatpush1.bf16.msra.mxu0 %v3321
    %3924 = vmatprep.subr.bf16.mxu0 %v3326
    %3925 = vmatpush1.bf16.msra.mxu0 %v3325
    %3926 = vmatprep.subr.bf16.mxu0 %v3330
    %3927 = vmatpush1.bf16.msra.mxu0 %v3329
    %3928 = vmatprep.subr.bf16.mxu0 %v3334
    %3929 = vmatpush1.bf16.msra.mxu0 %v3333
    %3930 = vmatprep.subr.bf16.mxu0 0
    %3931 = vmatpush1.bf16.msra.mxu0 0
    %3932 = vmatprep.subr.bf16.mxu0 0
    %3933 = vmatpush1.bf16.msra.mxu0 0
    %3934 = vmatprep.subr.bf16.mxu0 0
    %3935 = vmatpush1.bf16.msra.mxu0 0
    %3936 = vmatprep.subr.bf16.mxu0 0
    %3937 = vmatpush1.bf16.msra.mxu0 0
    %3938 = vmatprep.subr.bf16.mxu0 0
    %3939 = vmatpush1.bf16.msra.mxu0 0
    %3940 = vmatprep.subr.bf16.mxu0 0
    %3941 = vmatpush1.bf16.msra.mxu0 0
    %3942 = vmatprep.subr.bf16.mxu0 0
    %3943 = vmatpush1.bf16.msra.mxu0 0
    %3944 = vmatprep.subr.bf16.mxu0 0
    %3945 = vmatpush1.bf16.msra.mxu0 0
    %3946 = vmatprep.mubr.bf16.mxu0 0
    %3947 = vmatmul.mubr.bf16.gmra.mrb[0].mxu0 %v3913
    %v3948 = vpop.f32.mrb[0].mxu0
    %v3949 = vadd.f32 0.0, %v3948
    %v3950 = vpop.f32.mrb[0].mxu0
    %v3951 = vadd.f32 0.0, %v3950
    %v3952 = vpop.f32.mrb[0].mxu0
    %v3953 = vpop.f32.mrb[0].mxu0
    %3954 = vdwg.mxu0
    %3955 = vmatprep.subr.bf16.mxu0 %v3308
    %3956 = vmatpush1.bf16.msra.mxu0 %v3307
    %3957 = vmatprep.subr.bf16.mxu0 %v3312
    %3958 = vmatpush1.bf16.msra.mxu0 %v3311
    %3959 = vmatprep.subr.bf16.mxu0 %v3316
    %3960 = vmatpush1.bf16.msra.mxu0 %v3315
    %3961 = vmatprep.subr.bf16.mxu0 %v3320
    %3962 = vmatpush1.bf16.msra.mxu0 %v3319
    %3963 = vmatprep.subr.bf16.mxu0 %v3324
    %3964 = vmatpush1.bf16.msra.mxu0 %v3323
    %3965 = vmatprep.subr.bf16.mxu0 %v3328
    %3966 = vmatpush1.bf16.msra.mxu0 %v3327
    %3967 = vmatprep.subr.bf16.mxu0 %v3332
    %3968 = vmatpush1.bf16.msra.mxu0 %v3331
    %3969 = vmatprep.subr.bf16.mxu0 %v3336
    %3970 = vmatpush1.bf16.msra.mxu0 %v3335
    %3971 = vmatprep.subr.bf16.mxu0 0
    %3972 = vmatpush1.bf16.msra.mxu0 0
    %3973 = vmatprep.subr.bf16.mxu0 0
    %3974 = vmatpush1.bf16.msra.mxu0 0
    %3975 = vmatprep.subr.bf16.mxu0 0
    %3976 = vmatpush1.bf16.msra.mxu0 0
    %3977 = vmatprep.subr.bf16.mxu0 0
    %3978 = vmatpush1.bf16.msra.mxu0 0
    %3979 = vmatprep.subr.bf16.mxu0 0
    %3980 = vmatpush1.bf16.msra.mxu0 0
    %3981 = vmatprep.subr.bf16.mxu0 0
    %3982 = vmatpush1.bf16.msra.mxu0 0
    %3983 = vmatprep.subr.bf16.mxu0 0
    %3984 = vmatpush1.bf16.msra.mxu0 0
    %3985 = vmatprep.subr.bf16.mxu0 0
    %3986 = vmatpush1.bf16.msra.mxu0 0
    %3987 = vmatprep.mubr.bf16.mxu0 0
    %3988 = vmatmul.mubr.bf16.gmra.mrb[0].mxu0 %v3913
    %v3989 = vpop.f32.mrb[0].mxu0
    %v3990 = vadd.f32 0.0, %v3989
    %v3991 = vpop.f32.mrb[0].mxu0
    %v3992 = vadd.f32 0.0, %v3991
    %v3993 = vpop.f32.mrb[0].mxu0
    %v3994 = vpop.f32.mrb[0].mxu0
    %3995 = vdwg.mxu0
    %v3996 = vadd.f32 %v3909, %v3949
    %v3997 = vadd.f32 %v3910, %v3951
    %v3998 = vadd.f32 %v3911, %v3990
    %v3999 = vadd.f32 %v3912, %v3992
    %v4000 = vmul.f32 %v3996, 0.5
    %v4001 = vtanh.pop %v4000
    %v4002 = vmul.f32 %v4001, 0.5
    %v4003 = vadd.f32 %v4002, 0.5
    %v4004 = vmul.f32 %v3997, 0.5
    %v4005 = vtanh.pop %v4004
    %v4006 = vmul.f32 %v4005, 0.5
    %v4007 = vadd.f32 %v4006, 0.5
    %v4008 = vtanh.pop %v3998
    %v4009 = vmul.f32 %v3999, 0.5
    %v4010 = vtanh.pop %v4009
    %v4011 = vmul.f32 %v4010, 0.5
    %v4012 = vadd.f32 %v4011, 0.5
    %v4013 = vmul.f32 %v4007, %v3906
    %v4014 = vmul.f32 %v4003, %v4008
    %v4015 = vadd.f32 %v4013, %v4014
    %v4016 = vtanh.pop %v4015
    %v4017 = vmul.f32 %v4012, %v4016
    %v4018 = vld [vmem:[%s2159] sm:$0xff]
    %v4019 = vld [vmem:[%s2159 + $0x8] sm:$0xff]
    %v4020 = vld [vmem:[%s2159 + $0x10] sm:$0xff]
    %v4021 = vld [vmem:[%s2159 + $0x18] sm:$0xff]
    %v4022 = vpack.c.bf16 %v4017, %v4017
    %4023 = vmatprep.subr.bf16.mxu0 %v3306
    %4024 = vmatpush1.bf16.msra.mxu0 %v3305
    %4025 = vmatprep.subr.bf16.mxu0 %v3310
    %4026 = vmatpush1.bf16.msra.mxu0 %v3309
    %4027 = vmatprep.subr.bf16.mxu0 %v3314
    %4028 = vmatpush1.bf16.msra.mxu0 %v3313
    %4029 = vmatprep.subr.bf16.mxu0 %v3318
    %4030 = vmatpush1.bf16.msra.mxu0 %v3317
    %4031 = vmatprep.subr.bf16.mxu0 %v3322
    %4032 = vmatpush1.bf16.msra.mxu0 %v3321
    %4033 = vmatprep.subr.bf16.mxu0 %v3326
    %4034 = vmatpush1.bf16.msra.mxu0 %v3325
    %4035 = vmatprep.subr.bf16.mxu0 %v3330
    %4036 = vmatpush1.bf16.msra.mxu0 %v3329
    %4037 = vmatprep.subr.bf16.mxu0 %v3334
    %4038 = vmatpush1.bf16.msra.mxu0 %v3333
    %4039 = vmatprep.subr.bf16.mxu0 0
    %4040 = vmatpush1.bf16.msra.mxu0 0
    %4041 = vmatprep.subr.bf16.mxu0 0
    %4042 = vmatpush1.bf16.msra.mxu0 0
    %4043 = vmatprep.subr.bf16.mxu0 0
    %4044 = vmatpush1.bf16.msra.mxu0 0
    %4045 = vmatprep.subr.bf16.mxu0 0
    %4046 = vmatpush1.bf16.msra.mxu0 0
    %4047 = vmatprep.subr.bf16.mxu0 0
    %4048 = vmatpush1.bf16.msra.mxu0 0
    %4049 = vmatprep.subr.bf16.mxu0 0
    %4050 = vmatpush1.bf16.msra.mxu0 0
    %4051 = vmatprep.subr.bf16.mxu0 0
    %4052 = vmatpush1.bf16.msra.mxu0 0
    %4053 = vmatprep.subr.bf16.mxu0 0
    %4054 = vmatpush1.bf16.msra.mxu0 0
    %4055 = vmatprep.mubr.bf16.mxu0 0
    %4056 = vmatmul.mubr.bf16.gmra.mrb[0].mxu0 %v4022
    %v4057 = vpop.f32.mrb[0].mxu0
    %v4058 = vadd.f32 0.0, %v4057
    %v4059 = vpop.f32.mrb[0].mxu0
    %v4060 = vadd.f32 0.0, %v4059
    %v4061 = vpop.f32.mrb[0].mxu0
    %v4062 = vpop.f32.mrb[0].mxu0
    %4063 = vdwg.mxu0
    %4064 = vmatprep.subr.bf16.mxu0 %v3308
    %4065 = vmatpush1.bf16.msra.mxu0 %v3307
    %4066 = vmatprep.subr.bf16.mxu0 %v3312
    %4067 = vmatpush1.bf16.msra.mxu0 %v3311
    %4068 = vmatprep.subr.bf16.mxu0 %v3316
    %4069 = vmatpush1.bf16.msra.mxu0 %v3315
    %4070 = vmatprep.subr.bf16.mxu0 %v3320
    %4071 = vmatpush1.bf16.msra.mxu0 %v3319
    %4072 = vmatprep.subr.bf16.mxu0 %v3324
    %4073 = vmatpush1.bf16.msra.mxu0 %v3323
    %4074 = vmatprep.subr.bf16.mxu0 %v3328
    %4075 = vmatpush1.bf16.msra.mxu0 %v3327
    %4076 = vmatprep.subr.bf16.mxu0 %v3332
    %4077 = vmatpush1.bf16.msra.mxu0 %v3331
    %4078 = vmatprep.subr.bf16.mxu0 %v3336
    %4079 = vmatpush1.bf16.msra.mxu0 %v3335
    %4080 = vmatprep.subr.bf16.mxu0 0
    %4081 = vmatpush1.bf16.msra.mxu0 0
    %4082 = vmatprep.subr.bf16.mxu0 0
    %4083 = vmatpush1.bf16.msra.mxu0 0
    %4084 = vmatprep.subr.bf16.mxu0 0
    %4085 = vmatpush1.bf16.msra.mxu0 0
    %4086 = vmatprep.subr.bf16.mxu0 0
    %4087 = vmatpush1.bf16.msra.mxu0 0
    %4088 = vmatprep.subr.bf16.mxu0 0
    %4089 = vmatpush1.bf16.msra.mxu0 0
    %4090 = vmatprep.subr.bf16.mxu0 0
    %4091 = vmatpush1.bf16.msra.mxu0 0
    %4092 = vmatprep.subr.bf16.mxu0 0
    %4093 = vmatpush1.bf16.msra.mxu0 0
    %4094 = vmatprep.subr.bf16.mxu0 0
    %4095 = vmatpush1.bf16.msra.mxu0 0
    %4096 = vmatprep.mubr.bf16.mxu0 0
    %4097 = vmatmul.mubr.bf16.gmra.mrb[0].mxu0 %v4022
    %v4098 = vpop.f32.mrb[0].mxu0
    %v4099 = vadd.f32 0.0, %v4098
    %v4100 = vpop.f32.mrb[0].mxu0
    %v4101 = vadd.f32 0.0, %v4100
    %v4102 = vpop.f32.mrb[0].mxu0
    %v4103 = vpop.f32.mrb[0].mxu0
    %4104 = vdwg.mxu0
    %v4105 = vadd.f32 %v4018, %v4058
    %v4106 = vadd.f32 %v4019, %v4060
    %v4107 = vadd.f32 %v4020, %v4099
    %v4108 = vadd.f32 %v4021, %v4101
    %v4109 = vmul.f32 %v4105, 0.5
    %v4110 = vtanh.pop %v4109
    %v4111 = vmul.f32 %v4110, 0.5
    %v4112 = vadd.f32 %v4111, 0.5
    %v4113 = vmul.f32 %v4106, 0.5
    %v4114 = vtanh.pop %v4113
    %v4115 = vmul.f32 %v4114, 0.5
    %v4116 = vadd.f32 %v4115, 0.5
    %v4117 = vtanh.pop %v4107
    %v4118 = vmul.f32 %v4108, 0.5
    %v4119 = vtanh.pop %v4118
    %v4120 = vmul.f32 %v4119, 0.5
    %v4121 = vadd.f32 %v4120, 0.5
    %v4122 = vmul.f32 %v4116, %v4015
    %v4123 = vmul.f32 %v4112, %v4117
    %v4124 = vadd.f32 %v4122, %v4123
    %v4125 = vtanh.pop %v4124
    %v4126 = vmul.f32 %v4121, %v4125
    %v4127 = vld [vmem:[%s2465] sm:$0xff]
    %v4128 = vld [vmem:[%s2465 + $0x8] sm:$0xff]
    %v4129 = vld [vmem:[%s2465 + $0x10] sm:$0xff]
    %v4130 = vld [vmem:[%s2465 + $0x18] sm:$0xff]
    %v4131 = vpack.c.bf16 %v4126, %v4126
    %4132 = vmatprep.subr.bf16.mxu0 %v3306
    %4133 = vmatpush1.bf16.msra.mxu0 %v3305
    %4134 = vmatprep.subr.bf16.mxu0 %v3310
    %4135 = vmatpush1.bf16.msra.mxu0 %v3309
    %4136 = vmatprep.subr.bf16.mxu0 %v3314
    %4137 = vmatpush1.bf16.msra.mxu0 %v3313
    %4138 = vmatprep.subr.bf16.mxu0 %v3318
    %4139 = vmatpush1.bf16.msra.mxu0 %v3317
    %4140 = vmatprep.subr.bf16.mxu0 %v3322
    %4141 = vmatpush1.bf16.msra.mxu0 %v3321
    %4142 = vmatprep.subr.bf16.mxu0 %v3326
    %4143 = vmatpush1.bf16.msra.mxu0 %v3325
    %4144 = vmatprep.subr.bf16.mxu0 %v3330
    %4145 = vmatpush1.bf16.msra.mxu0 %v3329
    %4146 = vmatprep.subr.bf16.mxu0 %v3334
    %4147 = vmatpush1.bf16.msra.mxu0 %v3333
    %4148 = vmatprep.subr.bf16.mxu0 0
    %4149 = vmatpush1.bf16.msra.mxu0 0
    %4150 = vmatprep.subr.bf16.mxu0 0
    %4151 = vmatpush1.bf16.msra.mxu0 0
    %4152 = vmatprep.subr.bf16.mxu0 0
    %4153 = vmatpush1.bf16.msra.mxu0 0
    %4154 = vmatprep.subr.bf16.mxu0 0
    %4155 = vmatpush1.bf16.msra.mxu0 0
    %4156 = vmatprep.subr.bf16.mxu0 0
    %4157 = vmatpush1.bf16.msra.mxu0 0
    %4158 = vmatprep.subr.bf16.mxu0 0
    %4159 = vmatpush1.bf16.msra.mxu0 0
    %4160 = vmatprep.subr.bf16.mxu0 0
    %4161 = vmatpush1.bf16.msra.mxu0 0
    %4162 = vmatprep.subr.bf16.mxu0 0
    %4163 = vmatpush1.bf16.msra.mxu0 0
    %4164 = vmatprep.mubr.bf16.mxu0 0
    %4165 = vmatmul.mubr.bf16.gmra.mrb[0].mxu0 %v4131
    %v4166 = vpop.f32.mrb[0].mxu0
    %v4167 = vadd.f32 0.0, %v4166
    %v4168 = vpop.f32.mrb[0].mxu0
    %v4169 = vadd.f32 0.0, %v4168
    %v4170 = vpop.f32.mrb[0].mxu0
    %v4171 = vpop.f32.mrb[0].mxu0
    %4172 = vdwg.mxu0
    %4173 = vmatprep.subr.bf16.mxu0 %v3308
    %4174 = vmatpush1.bf16.msra.mxu0 %v3307
    %4175 = vmatprep.subr.bf16.mxu0 %v3312
    %4176 = vmatpush1.bf16.msra.mxu0 %v3311
    %4177 = vmatprep.subr.bf16.mxu0 %v3316
    %4178 = vmatpush1.bf16.msra.mxu0 %v3315
    %4179 = vmatprep.subr.bf16.mxu0 %v3320
    %4180 = vmatpush1.bf16.msra.mxu0 %v3319
    %4181 = vmatprep.subr.bf16.mxu0 %v3324
    %4182 = vmatpush1.bf16.msra.mxu0 %v3323
    %4183 = vmatprep.subr.bf16.mxu0 %v3328
    %4184 = vmatpush1.bf16.msra.mxu0 %v3327
    %4185 = vmatprep.subr.bf16.mxu0 %v3332
    %4186 = vmatpush1.bf16.msra.mxu0 %v3331
    %4187 = vmatprep.subr.bf16.mxu0 %v3336
    %4188 = vmatpush1.bf16.msra.mxu0 %v3335
    %4189 = vmatprep.subr.bf16.mxu0 0
    %4190 = vmatpush1.bf16.msra.mxu0 0
    %4191 = vmatprep.subr.bf16.mxu0 0
    %4192 = vmatpush1.bf16.msra.mxu0 0
    %4193 = vmatprep.subr.bf16.mxu0 0
    %4194 = vmatpush1.bf16.msra.mxu0 0
    %4195 = vmatprep.subr.bf16.mxu0 0
    %4196 = vmatpush1.bf16.msra.mxu0 0
    %4197 = vmatprep.subr.bf16.mxu0 0
    %4198 = vmatpush1.bf16.msra.mxu0 0
    %4199 = vmatprep.subr.bf16.mxu0 0
    %4200 = vmatpush1.bf16.msra.mxu0 0
    %4201 = vmatprep.subr.bf16.mxu0 0
    %4202 = vmatpush1.bf16.msra.mxu0 0
    %4203 = vmatprep.subr.bf16.mxu0 0
    %4204 = vmatpush1.bf16.msra.mxu0 0
    %4205 = vmatprep.mubr.bf16.mxu0 0
    %4206 = vmatmul.mubr.bf16.gmra.mrb[0].mxu0 %v4131
    %v4207 = vpop.f32.mrb[0].mxu0
    %v4208 = vadd.f32 0.0, %v4207
    %v4209 = vpop.f32.mrb[0].mxu0
    %v4210 = vadd.f32 0.0, %v4209
    %v4211 = vpop.f32.mrb[0].mxu0
    %v4212 = vpop.f32.mrb[0].mxu0
    %4213 = vdwg.mxu0
    %v4214 = vadd.f32 %v4127, %v4167
    %v4215 = vadd.f32 %v4128, %v4169
    %v4216 = vadd.f32 %v4129, %v4208
    %v4217 = vadd.f32 %v4130, %v4210
    %v4218 = vmul.f32 %v4214, 0.5
    %v4219 = vtanh.pop %v4218
    %v4220 = vmul.f32 %v4219, 0.5
    %v4221 = vadd.f32 %v4220, 0.5
    %v4222 = vmul.f32 %v4215, 0.5
    %v4223 = vtanh.pop %v4222
    %v4224 = vmul.f32 %v4223, 0.5
    %v4225 = vadd.f32 %v4224, 0.5
    %v4226 = vtanh.pop %v4216
    %v4227 = vmul.f32 %v4217, 0.5
    %v4228 = vtanh.pop %v4227
    %v4229 = vmul.f32 %v4228, 0.5
    %v4230 = vadd.f32 %v4229, 0.5
    %v4231 = vmul.f32 %v4225, %v4124
    %v4232 = vmul.f32 %v4221, %v4226
    %v4233 = vadd.f32 %v4231, %v4232
    %v4234 = vtanh.pop %v4233
    %v4235 = vmul.f32 %v4230, %v4234
    %v4236 = vpack.c.bf16 %v4235, %v4235
    %v4237 = vld [vmem:[%s7] sm:$0xf]
    %v4238 = vld [vmem:[%s7 + $0x4] sm:$0xf]
    %v4239 = vld [vmem:[%s7 + $0x8] sm:$0xf]
    %v4240 = vld [vmem:[%s7 + $0xc] sm:$0xf]
    %v4241 = vld [vmem:[%s7 + $0x10] sm:$0xf]
    %v4242 = vld [vmem:[%s7 + $0x14] sm:$0xf]
    %v4243 = vld [vmem:[%s7 + $0x18] sm:$0xf]
    %v4244 = vld [vmem:[%s7 + $0x1c] sm:$0xf]
    %v4245 = vld [vmem:[%s7 + $0x20] sm:$0xf]
    %v4246 = vld [vmem:[%s7 + $0x24] sm:$0xf]
    %v4247 = vld [vmem:[%s7 + $0x28] sm:$0xf]
    %v4248 = vld [vmem:[%s7 + $0x2c] sm:$0xf]
    %v4249 = vld [vmem:[%s7 + $0x30] sm:$0xf]
    %v4250 = vld [vmem:[%s7 + $0x34] sm:$0xf]
    %v4251 = vld [vmem:[%s7 + $0x38] sm:$0xf]
    %v4252 = vld [vmem:[%s7 + $0x3c] sm:$0xf]
    %v4253 = vld [vmem:[%s8] sm:$0x1]
    %v4255 = vlaneseq
    %v4256 = vshrl.u32 %v4255, 7
    %v4257 = vsub.s32 0, %v4256
    %v4258 = vrot.slane %v4253, %v4257
    %v4276 = vunpack.c.l.b16 %v4237
    %v4277 = vunpack.c.l.b16 %v4238
    %v4278 = vunpack.c.l.b16 %v4239
    %v4279 = vunpack.c.l.b16 %v4240
    %v4280 = vunpack.c.l.b16 %v4241
    %v4281 = vunpack.c.l.b16 %v4242
    %v4282 = vunpack.c.l.b16 %v4243
    %v4283 = vunpack.c.l.b16 %v4244
    %v4284 = vunpack.c.l.b16 %v4245
    %v4285 = vunpack.c.l.b16 %v4246
    %v4286 = vunpack.c.l.b16 %v4247
    %v4287 = vunpack.c.l.b16 %v4248
    %v4288 = vunpack.c.l.b16 %v4249
    %v4289 = vunpack.c.l.b16 %v4250
    %v4290 = vunpack.c.l.b16 %v4251
    %v4291 = vunpack.c.l.b16 %v4252
    %v4292 = vpack.c.b16 %v4277, %v4276
    %v4293 = vpack.c.b16 %v4279, %v4278
    %v4294 = vpack.c.b16 %v4281, %v4280
    %v4295 = vpack.c.b16 %v4283, %v4282
    %v4296 = vpack.c.b16 %v4285, %v4284
    %v4297 = vpack.c.b16 %v4287, %v4286
    %v4298 = vpack.c.b16 %v4289, %v4288
    %v4299 = vpack.c.b16 %v4291, %v4290
    %4308 = vmatprep.subr.bf16.mxu0 0
    %4309 = vmatpush1.bf16.msra.mxu0 %v4292
    %4310 = vmatprep.subr.bf16.mxu0 0
    %4311 = vmatpush1.bf16.msra.mxu0 %v4293
    %4312 = vmatprep.subr.bf16.mxu0 0
    %4313 = vmatpush1.bf16.msra.mxu0 %v4294
    %4314 = vmatprep.subr.bf16.mxu0 0
    %4315 = vmatpush1.bf16.msra.mxu0 %v4295
    %4316 = vmatprep.subr.bf16.mxu0 0
    %4317 = vmatpush1.bf16.msra.mxu0 %v4296
    %4318 = vmatprep.subr.bf16.mxu0 0
    %4319 = vmatpush1.bf16.msra.mxu0 %v4297
    %4320 = vmatprep.subr.bf16.mxu0 0
    %4321 = vmatpush1.bf16.msra.mxu0 %v4298
    %4322 = vmatprep.subr.bf16.mxu0 0
    %4323 = vmatpush1.bf16.msra.mxu0 %v4299
    %4324 = vmatprep.subr.bf16.mxu0 0
    %4325 = vmatpush1.bf16.msra.mxu0 0
    %4326 = vmatprep.subr.bf16.mxu0 0
    %4327 = vmatpush1.bf16.msra.mxu0 0
    %4328 = vmatprep.subr.bf16.mxu0 0
    %4329 = vmatpush1.bf16.msra.mxu0 0
    %4330 = vmatprep.subr.bf16.mxu0 0
    %4331 = vmatpush1.bf16.msra.mxu0 0
    %4332 = vmatprep.subr.bf16.mxu0 0
    %4333 = vmatpush1.bf16.msra.mxu0 0
    %4334 = vmatprep.subr.bf16.mxu0 0
    %4335 = vmatpush1.bf16.msra.mxu0 0
    %4336 = vmatprep.subr.bf16.mxu0 0
    %4337 = vmatpush1.bf16.msra.mxu0 0
    %4338 = vmatprep.subr.bf16.mxu0 0
    %4339 = vmatpush1.bf16.msra.mxu0 0
    %4340 = vmatprep.mubr.bf16.mxu0 0
    %4341 = vmatmul.mubr.bf16.gmra.mrb[0].mxu0 %v4236
    %v4342 = vpop.f32.mrb[0].mxu0
    %v4343 = vadd.f32 %v4258, %v4342
    %v4344 = vpop.f32.mrb[0].mxu0
    %v4345 = vpop.f32.mrb[0].mxu0
    %v4346 = vpop.f32.mrb[0].mxu0
    %4347 = vdwg.mxu0
    %v4348 = vmul.f32 %v4343, %v4343
    %4349 = vadd.xlane.f32.xlu0 %v4348
    %v4350 = vpop.xlane.xlu0 %4349
    %v4351 = vmax.f32 %v4350, 1e-24
    %v4352 = vrsqrt.pop %v4351
    %v4353 = vmul.f32 %v4343, %v4352
    %4354 = vst [vmem:[%s9] sm:$0xff] %v4353
    // Predicated region
    $region50: #{lstm_dvector_forward.1} parent=1 // pred_check
      _
    $region51: #{lstm_dvector_forward.1} parent=1 // pred_check_branch
      %4356 = sbr.rel (0) target = $region53
    $region52: #{lstm_dvector_forward.1} parent=1 // pred_region
      _
    $region53: #{lstm_dvector_forward.1} parent=1 // pred_fallthru
      _
    // Predicated region
    $region54: #{lstm_dvector_forward.1} parent=1 // pred_check
      _
    $region55: #{lstm_dvector_forward.1} parent=1 // pred_check_branch
      %4358 = sbr.rel (0) target = $region57
    $region56: #{lstm_dvector_forward.1} parent=1 // pred_region
      _
    $region57: #{lstm_dvector_forward.1} parent=1 // pred_fallthru
      _
    %4359 = vsyncpa [#allocation5], 1
    %4360 = vsyncpa [#allocation7], 1

</llo_original>
